<compile_context>
chip_gen: v6e
topology: v6e:2x2x1
jax: 0.10.0
libtpu: 0.0.40
codegen_flags: <defaults>
</compile_context>

<pallas_src>
import jax
import jax.numpy as jnp
import numpy as np
from jax.experimental import pallas as pl
from jax.experimental.pallas import tpu as pltpu


FT_CHNS = [8, 16, 32, 48, 64]
N_CLASS = 4
N_STAGES = 4


# ------------------------------ building blocks -------------------------------

def upsample_matrix(size_in, size_out):
    """1-D linear interpolation matrix, PyTorch align_corners=True semantics."""
    A = np.zeros((size_out, size_in), np.float32)
    if size_in == 1:
        A[:, 0] = 1.0
        return A
    src = np.arange(size_out, dtype=np.float64) * (size_in - 1) / (size_out - 1)
    lo = np.clip(np.floor(src).astype(np.int64), 0, size_in - 2)
    frac = (src - lo).astype(np.float32)
    rows = np.arange(size_out)
    A[rows, lo] += 1.0 - frac
    A[rows, lo + 1] += frac
    return A


# --------------------------- parameters (synthetic) ----------------------------

def init_params(key, ft_chns=FT_CHNS, n_class=N_CLASS):
    """PyTorch conventions: Conv2d 1x1 weight (Cout, Cin); Linear weight (out, in)."""
    params = {}
    ks = jax.random.split(key, 10)
    pairs = [(ft_chns[4], ft_chns[3]), (ft_chns[3], ft_chns[2]),
             (ft_chns[2], ft_chns[1]), (ft_chns[1], ft_chns[0])]
    for idx, (cin, cout) in enumerate(pairs):
        params[f"up{idx + 1}_w"] = 0.1 * jax.random.normal(
            ks[2 * idx], (cout, cin), jnp.float32)
        params[f"up{idx + 1}_b"] = 0.01 * jax.random.normal(
            ks[2 * idx + 1], (cout,), jnp.float32)
    params["out_w"] = 0.1 * jax.random.normal(ks[8], (n_class, ft_chns[0]), jnp.float32)
    params["out_b"] = 0.01 * jax.random.normal(ks[9], (n_class,), jnp.float32)
    return params


def prepare_constants(params, h_in, w_in, ft_chns=FT_CHNS, n_class=N_CLASS):
    """One-time weight preparation: build the Kronecker-structured 2-D matmul
    operands so the fused kernel only runs plain (M,K)@(K,N) matmuls."""
    consts = []
    h, w = h_in, w_in
    for i in range(1, N_STAGES + 1):
        wt = np.asarray(params[f"up{i}_w"], np.float32)            # (Cout, Cin)
        b = np.asarray(params[f"up{i}_b"], np.float32)             # (Cout,)
        cout = wt.shape[0]
        k_cm = np.kron(np.eye(w, dtype=np.float32), wt.T)          # (W*Cin, W*Cout)
        b_row = np.tile(b, w).reshape(1, w * cout)                 # (1, W*Cout)
        a_h = upsample_matrix(h, 2 * h)                            # (2H, H)
        a_w = upsample_matrix(w, 2 * w)                            # (2W, W)
        k_w = np.kron(a_w.T, np.eye(cout, dtype=np.float32))       # (W*Cout, 2W*Cout)
        consts += [jnp.asarray(k_cm), jnp.asarray(b_row),
                   jnp.asarray(a_h), jnp.asarray(k_w)]
        h, w = 2 * h, 2 * w
    # Final Linear(ft_chns[0] -> n_class): one (W*C, W) matrix per class so the
    # kernel writes each class plane straight into the NCHW output block.
    wo = np.asarray(params["out_w"], np.float32)                   # (n_class, C)
    bo = np.asarray(params["out_b"], np.float32)                   # (n_class,)
    for c in range(n_class):
        consts.append(jnp.asarray(
            np.kron(np.eye(w, dtype=np.float32), wo[c][:, None])))  # (W*C, W)
    consts.append(jnp.asarray(bo.reshape(1, n_class)))
    return tuple(consts)


# ------------------------------- fused kernel ---------------------------------

def _decoder_kernel(x_ref, *refs):
    """Whole decoder for one batch element; all intermediates stay on-chip.

    x_ref : (1, H, W*Cin) channels-last input slab for this batch element.
    refs  : 16 per-stage constants + n_class final matrices + final bias + out_ref.
    """
    out_ref = refs[-1]
    const_refs = refs[:-1]
    n_class = out_ref.shape[1]

    x = x_ref[0]                                                    # (H, W*Cin)
    p = 0
    for _ in range(N_STAGES):
        k_cm, b_row, a_h, k_w = const_refs[p:p + 4]
        p += 4
        # 1x1 conv over channels, bias fused (plain 2-D matmul on MXU).
        x = jnp.dot(x, k_cm[...], preferred_element_type=jnp.float32) + b_row[...]
        # 2x bilinear upsample (align_corners=True), separable: H then W pass.
        x = jnp.dot(a_h[...], x, preferred_element_type=jnp.float32)
        x = jnp.dot(x, k_w[...], preferred_element_type=jnp.float32)

    b_out = const_refs[-1][...]                                     # (1, n_class)
    for c in range(n_class):
        plane = jnp.dot(x, const_refs[p + c][...],
                        preferred_element_type=jnp.float32)         # (Hout, Wout)
        out_ref[0, c] = plane + b_out[0, c]


# -------------------------------- forward pass ---------------------------------

def decoder_trans_forward(feature, consts, n_class=N_CLASS):
    """feature: (N, ft_chns[4], H, W) NCHW -> (N, n_class, 16H, 16W) NCHW."""
    n, c, h, w = feature.shape
    h_out, w_out = 16 * h, 16 * w
    # Channels-first -> channels-last slab (tiny, only non-kernel device op).
    x = jnp.transpose(feature, (0, 2, 3, 1)).reshape(n, h, w * c)

    in_specs = [pl.BlockSpec((1, h, w * c), lambda i: (i, 0, 0))]
    for a in consts:
        nd = a.ndim
        in_specs.append(pl.BlockSpec(tuple(a.shape),
                                     lambda i, _nd=nd: (0,) * _nd))
    out_spec = pl.BlockSpec((1, n_class, h_out, w_out), lambda i: (i, 0, 0, 0))

    return pl.pallas_call(
        _decoder_kernel,
        out_shape=jax.ShapeDtypeStruct((n, n_class, h_out, w_out), jnp.float32),
        grid=(n,),
        in_specs=in_specs,
        out_specs=out_spec,
        compiler_params=pltpu.CompilerParams(
            dimension_semantics=("parallel",),
            vmem_limit_bytes=32 * 1024 * 1024,
        ),
    )(x, *consts)


# ------------------ pure-JAX reference (numerical sanity check) ----------------

def decoder_trans_reference(feature, params):
    x = feature
    for i in range(1, 5):
        wt = params[f"up{i}_w"]
        bs = params[f"up{i}_b"]
        x = jnp.einsum('oc,nchw->nohw', wt, x) + bs[None, :, None, None]
        h, w = x.shape[2], x.shape[3]
        ah = jnp.asarray(upsample_matrix(h, 2 * h))
        aw = jnp.asarray(upsample_matrix(w, 2 * w))
        x = jnp.einsum('oh,nchw->ncow', ah, x)
        x = jnp.einsum('pw,nchw->nchp', aw, x)
    x = jnp.einsum('oc,nchw->nohw', params["out_w"], x) \
        + params["out_b"][None, :, None, None]
    return x


if __name__ == "__main__":
    N, H, W = 2, 4, 4

    key = jax.random.PRNGKey(0)
    kf, kp = jax.random.split(key)
    feature = jax.random.normal(kf, (N, FT_CHNS[4], H, W), jnp.float32)
    params = init_params(kp)
    consts = prepare_constants(params, H, W)        # one-time weight prep

    fwd = jax.jit(decoder_trans_forward)
    out = jax.block_until_ready(fwd(feature, consts))
    assert out.shape == (N, N_CLASS, 16 * H, 16 * W), out.shape

    ref = jax.block_until_ready(decoder_trans_reference(feature, params))
    err = float(jnp.max(jnp.abs(out - ref)))
    assert err < 1e-3, f"max abs err {err}"

    print("KERNEL_OK")
</pallas_src>

<mosaic_0001>
module attributes {stable_mosaic.version = 11 : i64} {
  func.func @_decoder_kernel(%arg0: i32, %arg1: memref<1x4x256xf32, #tpu.memory_space<vmem>>, %arg2: memref<256x192xf32, #tpu.memory_space<vmem>>, %arg3: memref<1x192xf32, #tpu.memory_space<vmem>>, %arg4: memref<8x4xf32, #tpu.memory_space<vmem>>, %arg5: memref<192x384xf32, #tpu.memory_space<vmem>>, %arg6: memref<384x256xf32, #tpu.memory_space<vmem>>, %arg7: memref<1x256xf32, #tpu.memory_space<vmem>>, %arg8: memref<16x8xf32, #tpu.memory_space<vmem>>, %arg9: memref<256x512xf32, #tpu.memory_space<vmem>>, %arg10: memref<512x256xf32, #tpu.memory_space<vmem>>, %arg11: memref<1x256xf32, #tpu.memory_space<vmem>>, %arg12: memref<32x16xf32, #tpu.memory_space<vmem>>, %arg13: memref<256x512xf32, #tpu.memory_space<vmem>>, %arg14: memref<512x256xf32, #tpu.memory_space<vmem>>, %arg15: memref<1x256xf32, #tpu.memory_space<vmem>>, %arg16: memref<64x32xf32, #tpu.memory_space<vmem>>, %arg17: memref<256x512xf32, #tpu.memory_space<vmem>>, %arg18: memref<512x64xf32, #tpu.memory_space<vmem>>, %arg19: memref<512x64xf32, #tpu.memory_space<vmem>>, %arg20: memref<512x64xf32, #tpu.memory_space<vmem>>, %arg21: memref<512x64xf32, #tpu.memory_space<vmem>>, %arg22: memref<1x4xf32, #tpu.memory_space<vmem>>, %arg23: memref<1x4x64x64xf32, #tpu.memory_space<vmem>>) attributes {dimension_semantics = [#tpu.dimension_semantics<parallel>], iteration_bounds = array<i64: 2>, scalar_prefetch = 0 : i64, scratch_operands = 0 : i64, tpu.core_type = #tpu.core_type<tc>, window_params = [{transform_indices = @transform_0, window_bounds = array<i64: 1, 4, 256>}, {pipeline_mode = #tpu.pipeline_mode<synchronous>, transform_indices = @transform_1, window_bounds = array<i64: 256, 192>}, {pipeline_mode = #tpu.pipeline_mode<synchronous>, transform_indices = @transform_2, window_bounds = array<i64: 1, 192>}, {pipeline_mode = #tpu.pipeline_mode<synchronous>, transform_indices = @transform_3, window_bounds = array<i64: 8, 4>}, {pipeline_mode = #tpu.pipeline_mode<synchronous>, transform_indices = @transform_4, window_bounds = array<i64: 192, 384>}, {pipeline_mode = #tpu.pipeline_mode<synchronous>, transform_indices = @transform_5, window_bounds = array<i64: 384, 256>}, {pipeline_mode = #tpu.pipeline_mode<synchronous>, transform_indices = @transform_6, window_bounds = array<i64: 1, 256>}, {pipeline_mode = #tpu.pipeline_mode<synchronous>, transform_indices = @transform_7, window_bounds = array<i64: 16, 8>}, {pipeline_mode = #tpu.pipeline_mode<synchronous>, transform_indices = @transform_8, window_bounds = array<i64: 256, 512>}, {pipeline_mode = #tpu.pipeline_mode<synchronous>, transform_indices = @transform_9, window_bounds = array<i64: 512, 256>}, {pipeline_mode = #tpu.pipeline_mode<synchronous>, transform_indices = @transform_10, window_bounds = array<i64: 1, 256>}, {pipeline_mode = #tpu.pipeline_mode<synchronous>, transform_indices = @transform_11, window_bounds = array<i64: 32, 16>}, {pipeline_mode = #tpu.pipeline_mode<synchronous>, transform_indices = @transform_12, window_bounds = array<i64: 256, 512>}, {pipeline_mode = #tpu.pipeline_mode<synchronous>, transform_indices = @transform_13, window_bounds = array<i64: 512, 256>}, {pipeline_mode = #tpu.pipeline_mode<synchronous>, transform_indices = @transform_14, window_bounds = array<i64: 1, 256>}, {pipeline_mode = #tpu.pipeline_mode<synchronous>, transform_indices = @transform_15, window_bounds = array<i64: 64, 32>}, {pipeline_mode = #tpu.pipeline_mode<synchronous>, transform_indices = @transform_16, window_bounds = array<i64: 256, 512>}, {pipeline_mode = #tpu.pipeline_mode<synchronous>, transform_indices = @transform_17, window_bounds = array<i64: 512, 64>}, {pipeline_mode = #tpu.pipeline_mode<synchronous>, transform_indices = @transform_18, window_bounds = array<i64: 512, 64>}, {pipeline_mode = #tpu.pipeline_mode<synchronous>, transform_indices = @transform_19, window_bounds = array<i64: 512, 64>}, {pipeline_mode = #tpu.pipeline_mode<synchronous>, transform_indices = @transform_20, window_bounds = array<i64: 512, 64>}, {pipeline_mode = #tpu.pipeline_mode<synchronous>, transform_indices = @transform_21, window_bounds = array<i64: 1, 4>}, {transform_indices = @transform_22, window_bounds = array<i64: 1, 4, 64, 64>}]} {
    %c0 = arith.constant 0 : index
    %c0_0 = arith.constant 0 : index
    %c0_1 = arith.constant 0 : index
    %0 = vector.load %arg1[%c0, %c0_0, %c0_1] : memref<1x4x256xf32, #tpu.memory_space<vmem>>, vector<1x4x256xf32>
    %1 = vector.shape_cast %0 : vector<1x4x256xf32> to vector<4x256xf32>
    %c0_2 = arith.constant 0 : index
    %c0_3 = arith.constant 0 : index
    %2 = vector.load %arg2[%c0_2, %c0_3] : memref<256x192xf32, #tpu.memory_space<vmem>>, vector<256x192xf32>
    %cst = arith.constant dense<0.000000e+00> : vector<4x192xf32>
    %3 = tpu.matmul %1, %2, %cst {dimension_numbers = #tpu.dot_dimension_numbers<[1], [0], [0], [1], [0, 0, 1, 1], [], []>} : vector<4x256xf32>, vector<256x192xf32>, vector<4x192xf32> -> vector<4x192xf32>
    %c0_4 = arith.constant 0 : index
    %c0_5 = arith.constant 0 : index
    %4 = vector.load %arg3[%c0_4, %c0_5] : memref<1x192xf32, #tpu.memory_space<vmem>>, vector<1x192xf32>
    %5 = vector.broadcast %4 : vector<1x192xf32> to vector<4x192xf32>
    %6 = arith.addf %3, %5 : vector<4x192xf32>
    %c0_6 = arith.constant 0 : index
    %c0_7 = arith.constant 0 : index
    %7 = vector.load %arg4[%c0_6, %c0_7] : memref<8x4xf32, #tpu.memory_space<vmem>>, vector<8x4xf32>
    %cst_8 = arith.constant dense<0.000000e+00> : vector<8x192xf32>
    %8 = tpu.matmul %7, %6, %cst_8 {dimension_numbers = #tpu.dot_dimension_numbers<[1], [0], [0], [1], [0, 0, 1, 1], [], []>} : vector<8x4xf32>, vector<4x192xf32>, vector<8x192xf32> -> vector<8x192xf32>
    %c0_9 = arith.constant 0 : index
    %c0_10 = arith.constant 0 : index
    %9 = vector.load %arg5[%c0_9, %c0_10] : memref<192x384xf32, #tpu.memory_space<vmem>>, vector<192x384xf32>
    %cst_11 = arith.constant dense<0.000000e+00> : vector<8x384xf32>
    %10 = tpu.matmul %8, %9, %cst_11 {dimension_numbers = #tpu.dot_dimension_numbers<[1], [0], [0], [1], [0, 0, 1, 1], [], []>} : vector<8x192xf32>, vector<192x384xf32>, vector<8x384xf32> -> vector<8x384xf32>
    %c0_12 = arith.constant 0 : index
    %c0_13 = arith.constant 0 : index
    %11 = vector.load %arg6[%c0_12, %c0_13] : memref<384x256xf32, #tpu.memory_space<vmem>>, vector<384x256xf32>
    %cst_14 = arith.constant dense<0.000000e+00> : vector<8x256xf32>
    %12 = tpu.matmul %10, %11, %cst_14 {dimension_numbers = #tpu.dot_dimension_numbers<[1], [0], [0], [1], [0, 0, 1, 1], [], []>} : vector<8x384xf32>, vector<384x256xf32>, vector<8x256xf32> -> vector<8x256xf32>
    %c0_15 = arith.constant 0 : index
    %c0_16 = arith.constant 0 : index
    %13 = vector.load %arg7[%c0_15, %c0_16] : memref<1x256xf32, #tpu.memory_space<vmem>>, vector<1x256xf32>
    %14 = vector.broadcast %13 : vector<1x256xf32> to vector<8x256xf32>
    %15 = arith.addf %12, %14 : vector<8x256xf32>
    %c0_17 = arith.constant 0 : index
    %c0_18 = arith.constant 0 : index
    %16 = vector.load %arg8[%c0_17, %c0_18] : memref<16x8xf32, #tpu.memory_space<vmem>>, vector<16x8xf32>
    %cst_19 = arith.constant dense<0.000000e+00> : vector<16x256xf32>
    %17 = tpu.matmul %16, %15, %cst_19 {dimension_numbers = #tpu.dot_dimension_numbers<[1], [0], [0], [1], [0, 0, 1, 1], [], []>} : vector<16x8xf32>, vector<8x256xf32>, vector<16x256xf32> -> vector<16x256xf32>
    %c0_20 = arith.constant 0 : index
    %c0_21 = arith.constant 0 : index
    %18 = vector.load %arg9[%c0_20, %c0_21] : memref<256x512xf32, #tpu.memory_space<vmem>>, vector<256x512xf32>
    %cst_22 = arith.constant dense<0.000000e+00> : vector<16x512xf32>
    %19 = tpu.matmul %17, %18, %cst_22 {dimension_numbers = #tpu.dot_dimension_numbers<[1], [0], [0], [1], [0, 0, 1, 1], [], []>} : vector<16x256xf32>, vector<256x512xf32>, vector<16x512xf32> -> vector<16x512xf32>
    %c0_23 = arith.constant 0 : index
    %c0_24 = arith.constant 0 : index
    %20 = vector.load %arg10[%c0_23, %c0_24] : memref<512x256xf32, #tpu.memory_space<vmem>>, vector<512x256xf32>
    %cst_25 = arith.constant dense<0.000000e+00> : vector<16x256xf32>
    %21 = tpu.matmul %19, %20, %cst_25 {dimension_numbers = #tpu.dot_dimension_numbers<[1], [0], [0], [1], [0, 0, 1, 1], [], []>} : vector<16x512xf32>, vector<512x256xf32>, vector<16x256xf32> -> vector<16x256xf32>
    %c0_26 = arith.constant 0 : index
    %c0_27 = arith.constant 0 : index
    %22 = vector.load %arg11[%c0_26, %c0_27] : memref<1x256xf32, #tpu.memory_space<vmem>>, vector<1x256xf32>
    %23 = vector.broadcast %22 : vector<1x256xf32> to vector<16x256xf32>
    %24 = arith.addf %21, %23 : vector<16x256xf32>
    %c0_28 = arith.constant 0 : index
    %c0_29 = arith.constant 0 : index
    %25 = vector.load %arg12[%c0_28, %c0_29] : memref<32x16xf32, #tpu.memory_space<vmem>>, vector<32x16xf32>
    %cst_30 = arith.constant dense<0.000000e+00> : vector<32x256xf32>
    %26 = tpu.matmul %25, %24, %cst_30 {dimension_numbers = #tpu.dot_dimension_numbers<[1], [0], [0], [1], [0, 0, 1, 1], [], []>} : vector<32x16xf32>, vector<16x256xf32>, vector<32x256xf32> -> vector<32x256xf32>
    %c0_31 = arith.constant 0 : index
    %c0_32 = arith.constant 0 : index
    %27 = vector.load %arg13[%c0_31, %c0_32] : memref<256x512xf32, #tpu.memory_space<vmem>>, vector<256x512xf32>
    %cst_33 = arith.constant dense<0.000000e+00> : vector<32x512xf32>
    %28 = tpu.matmul %26, %27, %cst_33 {dimension_numbers = #tpu.dot_dimension_numbers<[1], [0], [0], [1], [0, 0, 1, 1], [], []>} : vector<32x256xf32>, vector<256x512xf32>, vector<32x512xf32> -> vector<32x512xf32>
    %c0_34 = arith.constant 0 : index
    %c0_35 = arith.constant 0 : index
    %29 = vector.load %arg14[%c0_34, %c0_35] : memref<512x256xf32, #tpu.memory_space<vmem>>, vector<512x256xf32>
    %cst_36 = arith.constant dense<0.000000e+00> : vector<32x256xf32>
    %30 = tpu.matmul %28, %29, %cst_36 {dimension_numbers = #tpu.dot_dimension_numbers<[1], [0], [0], [1], [0, 0, 1, 1], [], []>} : vector<32x512xf32>, vector<512x256xf32>, vector<32x256xf32> -> vector<32x256xf32>
    %c0_37 = arith.constant 0 : index
    %c0_38 = arith.constant 0 : index
    %31 = vector.load %arg15[%c0_37, %c0_38] : memref<1x256xf32, #tpu.memory_space<vmem>>, vector<1x256xf32>
    %32 = vector.broadcast %31 : vector<1x256xf32> to vector<32x256xf32>
    %33 = arith.addf %30, %32 : vector<32x256xf32>
    %c0_39 = arith.constant 0 : index
    %c0_40 = arith.constant 0 : index
    %34 = vector.load %arg16[%c0_39, %c0_40] : memref<64x32xf32, #tpu.memory_space<vmem>>, vector<64x32xf32>
    %cst_41 = arith.constant dense<0.000000e+00> : vector<64x256xf32>
    %35 = tpu.matmul %34, %33, %cst_41 {dimension_numbers = #tpu.dot_dimension_numbers<[1], [0], [0], [1], [0, 0, 1, 1], [], []>} : vector<64x32xf32>, vector<32x256xf32>, vector<64x256xf32> -> vector<64x256xf32>
    %c0_42 = arith.constant 0 : index
    %c0_43 = arith.constant 0 : index
    %36 = vector.load %arg17[%c0_42, %c0_43] : memref<256x512xf32, #tpu.memory_space<vmem>>, vector<256x512xf32>
    %cst_44 = arith.constant dense<0.000000e+00> : vector<64x512xf32>
    %37 = tpu.matmul %35, %36, %cst_44 {dimension_numbers = #tpu.dot_dimension_numbers<[1], [0], [0], [1], [0, 0, 1, 1], [], []>} : vector<64x256xf32>, vector<256x512xf32>, vector<64x512xf32> -> vector<64x512xf32>
    %c0_45 = arith.constant 0 : index
    %c0_46 = arith.constant 0 : index
    %38 = vector.load %arg22[%c0_45, %c0_46] : memref<1x4xf32, #tpu.memory_space<vmem>>, vector<1x4xf32>
    %c0_47 = arith.constant 0 : index
    %c0_48 = arith.constant 0 : index
    %39 = vector.load %arg18[%c0_47, %c0_48] : memref<512x64xf32, #tpu.memory_space<vmem>>, vector<512x64xf32>
    %cst_49 = arith.constant dense<0.000000e+00> : vector<64x64xf32>
    %40 = tpu.matmul %37, %39, %cst_49 {dimension_numbers = #tpu.dot_dimension_numbers<[1], [0], [0], [1], [0, 0, 1, 1], [], []>} : vector<64x512xf32>, vector<512x64xf32>, vector<64x64xf32> -> vector<64x64xf32>
    %41 = vector.extract_strided_slice %38 {offsets = [0, 0], sizes = [1, 1], strides = [1, 1]} : vector<1x4xf32> to vector<1x1xf32>
    %42 = vector.extract %41[0, 0] : f32 from vector<1x1xf32>
    %43 = vector.broadcast %42 : f32 to vector<64x64xf32>
    %44 = arith.addf %40, %43 : vector<64x64xf32>
    %c0_50 = arith.constant 0 : index
    %c0_51 = arith.constant 0 : index
    %c0_52 = arith.constant 0 : index
    %c0_53 = arith.constant 0 : index
    %45 = vector.load %arg23[%c0_50, %c0_51, %c0_52, %c0_53] : memref<1x4x64x64xf32, #tpu.memory_space<vmem>>, vector<1x1x64x64xf32>
    %46 = vector.shape_cast %45 : vector<1x1x64x64xf32> to vector<64x64xf32>
    %47 = vector.shape_cast %44 : vector<64x64xf32> to vector<1x1x64x64xf32>
    tpu.vector_store %arg23[%c0_50, %c0_51, %c0_52, %c0_53], %47 {strides = array<i32>} : memref<1x4x64x64xf32, #tpu.memory_space<vmem>>, vector<1x1x64x64xf32>,
    %c0_54 = arith.constant 0 : index
    %c0_55 = arith.constant 0 : index
    %48 = vector.load %arg19[%c0_54, %c0_55] : memref<512x64xf32, #tpu.memory_space<vmem>>, vector<512x64xf32>
    %cst_56 = arith.constant dense<0.000000e+00> : vector<64x64xf32>
    %49 = tpu.matmul %37, %48, %cst_56 {dimension_numbers = #tpu.dot_dimension_numbers<[1], [0], [0], [1], [0, 0, 1, 1], [], []>} : vector<64x512xf32>, vector<512x64xf32>, vector<64x64xf32> -> vector<64x64xf32>
    %50 = vector.extract_strided_slice %38 {offsets = [0, 1], sizes = [1, 1], strides = [1, 1]} : vector<1x4xf32> to vector<1x1xf32>
    %51 = vector.extract %50[0, 0] : f32 from vector<1x1xf32>
    %52 = vector.broadcast %51 : f32 to vector<64x64xf32>
    %53 = arith.addf %49, %52 : vector<64x64xf32>
    %c0_57 = arith.constant 0 : index
    %c1 = arith.constant 1 : index
    %c0_58 = arith.constant 0 : index
    %c0_59 = arith.constant 0 : index
    %54 = vector.load %arg23[%c0_57, %c1, %c0_58, %c0_59] : memref<1x4x64x64xf32, #tpu.memory_space<vmem>>, vector<1x1x64x64xf32>
    %55 = vector.shape_cast %54 : vector<1x1x64x64xf32> to vector<64x64xf32>
    %56 = vector.shape_cast %53 : vector<64x64xf32> to vector<1x1x64x64xf32>
    tpu.vector_store %arg23[%c0_57, %c1, %c0_58, %c0_59], %56 {strides = array<i32>} : memref<1x4x64x64xf32, #tpu.memory_space<vmem>>, vector<1x1x64x64xf32>,
    %c0_60 = arith.constant 0 : index
    %c0_61 = arith.constant 0 : index
    %57 = vector.load %arg20[%c0_60, %c0_61] : memref<512x64xf32, #tpu.memory_space<vmem>>, vector<512x64xf32>
    %cst_62 = arith.constant dense<0.000000e+00> : vector<64x64xf32>
    %58 = tpu.matmul %37, %57, %cst_62 {dimension_numbers = #tpu.dot_dimension_numbers<[1], [0], [0], [1], [0, 0, 1, 1], [], []>} : vector<64x512xf32>, vector<512x64xf32>, vector<64x64xf32> -> vector<64x64xf32>
    %59 = vector.extract_strided_slice %38 {offsets = [0, 2], sizes = [1, 1], strides = [1, 1]} : vector<1x4xf32> to vector<1x1xf32>
    %60 = vector.extract %59[0, 0] : f32 from vector<1x1xf32>
    %61 = vector.broadcast %60 : f32 to vector<64x64xf32>
    %62 = arith.addf %58, %61 : vector<64x64xf32>
    %c0_63 = arith.constant 0 : index
    %c2 = arith.constant 2 : index
    %c0_64 = arith.constant 0 : index
    %c0_65 = arith.constant 0 : index
    %63 = vector.load %arg23[%c0_63, %c2, %c0_64, %c0_65] : memref<1x4x64x64xf32, #tpu.memory_space<vmem>>, vector<1x1x64x64xf32>
    %64 = vector.shape_cast %63 : vector<1x1x64x64xf32> to vector<64x64xf32>
    %65 = vector.shape_cast %62 : vector<64x64xf32> to vector<1x1x64x64xf32>
    tpu.vector_store %arg23[%c0_63, %c2, %c0_64, %c0_65], %65 {strides = array<i32>} : memref<1x4x64x64xf32, #tpu.memory_space<vmem>>, vector<1x1x64x64xf32>,
    %c0_66 = arith.constant 0 : index
    %c0_67 = arith.constant 0 : index
    %66 = vector.load %arg21[%c0_66, %c0_67] : memref<512x64xf32, #tpu.memory_space<vmem>>, vector<512x64xf32>
    %cst_68 = arith.constant dense<0.000000e+00> : vector<64x64xf32>
    %67 = tpu.matmul %37, %66, %cst_68 {dimension_numbers = #tpu.dot_dimension_numbers<[1], [0], [0], [1], [0, 0, 1, 1], [], []>} : vector<64x512xf32>, vector<512x64xf32>, vector<64x64xf32> -> vector<64x64xf32>
    %68 = vector.extract_strided_slice %38 {offsets = [0, 3], sizes = [1, 1], strides = [1, 1]} : vector<1x4xf32> to vector<1x1xf32>
    %69 = vector.extract %68[0, 0] : f32 from vector<1x1xf32>
    %70 = vector.broadcast %69 : f32 to vector<64x64xf32>
    %71 = arith.addf %67, %70 : vector<64x64xf32>
    %c0_69 = arith.constant 0 : index
    %c3 = arith.constant 3 : index
    %c0_70 = arith.constant 0 : index
    %c0_71 = arith.constant 0 : index
    %72 = vector.load %arg23[%c0_69, %c3, %c0_70, %c0_71] : memref<1x4x64x64xf32, #tpu.memory_space<vmem>>, vector<1x1x64x64xf32>
    %73 = vector.shape_cast %72 : vector<1x1x64x64xf32> to vector<64x64xf32>
    %74 = vector.shape_cast %71 : vector<64x64xf32> to vector<1x1x64x64xf32>
    tpu.vector_store %arg23[%c0_69, %c3, %c0_70, %c0_71], %74 {strides = array<i32>} : memref<1x4x64x64xf32, #tpu.memory_space<vmem>>, vector<1x1x64x64xf32>,
    return
  }
  func.func @transform_0(%arg0: i32) -> (i32, i32, i32) {
    %c0_i32 = arith.constant 0 : i32
    %c0_i32_0 = arith.constant 0 : i32
    %c0_i32_1 = arith.constant 0 : i32
    return %arg0, %c0_i32, %c0_i32_0 : i32, i32, i32
  }
  func.func @transform_1(%arg0: i32) -> (i32, i32) {
    %c0_i32 = arith.constant 0 : i32
    %c0_i32_0 = arith.constant 0 : i32
    %c0_i32_1 = arith.constant 0 : i32
    return %c0_i32, %c0_i32_0 : i32, i32
  }
  func.func @transform_2(%arg0: i32) -> (i32, i32) {
    %c0_i32 = arith.constant 0 : i32
    %c0_i32_0 = arith.constant 0 : i32
    %c0_i32_1 = arith.constant 0 : i32
    return %c0_i32, %c0_i32_0 : i32, i32
  }
  func.func @transform_3(%arg0: i32) -> (i32, i32) {
    %c0_i32 = arith.constant 0 : i32
    %c0_i32_0 = arith.constant 0 : i32
    %c0_i32_1 = arith.constant 0 : i32
    return %c0_i32, %c0_i32_0 : i32, i32
  }
  func.func @transform_4(%arg0: i32) -> (i32, i32) {
    %c0_i32 = arith.constant 0 : i32
    %c0_i32_0 = arith.constant 0 : i32
    %c0_i32_1 = arith.constant 0 : i32
    return %c0_i32, %c0_i32_0 : i32, i32
  }
  func.func @transform_5(%arg0: i32) -> (i32, i32) {
    %c0_i32 = arith.constant 0 : i32
    %c0_i32_0 = arith.constant 0 : i32
    %c0_i32_1 = arith.constant 0 : i32
    return %c0_i32, %c0_i32_0 : i32, i32
  }
  func.func @transform_6(%arg0: i32) -> (i32, i32) {
    %c0_i32 = arith.constant 0 : i32
    %c0_i32_0 = arith.constant 0 : i32
    %c0_i32_1 = arith.constant 0 : i32
    return %c0_i32, %c0_i32_0 : i32, i32
  }
  func.func @transform_7(%arg0: i32) -> (i32, i32) {
    %c0_i32 = arith.constant 0 : i32
    %c0_i32_0 = arith.constant 0 : i32
    %c0_i32_1 = arith.constant 0 : i32
    return %c0_i32, %c0_i32_0 : i32, i32
  }
  func.func @transform_8(%arg0: i32) -> (i32, i32) {
    %c0_i32 = arith.constant 0 : i32
    %c0_i32_0 = arith.constant 0 : i32
    %c0_i32_1 = arith.constant 0 : i32
    return %c0_i32, %c0_i32_0 : i32, i32
  }
  func.func @transform_9(%arg0: i32) -> (i32, i32) {
    %c0_i32 = arith.constant 0 : i32
    %c0_i32_0 = arith.constant 0 : i32
    %c0_i32_1 = arith.constant 0 : i32
    return %c0_i32, %c0_i32_0 : i32, i32
  }
  func.func @transform_10(%arg0: i32) -> (i32, i32) {
    %c0_i32 = arith.constant 0 : i32
    %c0_i32_0 = arith.constant 0 : i32
    %c0_i32_1 = arith.constant 0 : i32
    return %c0_i32, %c0_i32_0 : i32, i32
  }
  func.func @transform_11(%arg0: i32) -> (i32, i32) {
    %c0_i32 = arith.constant 0 : i32
    %c0_i32_0 = arith.constant 0 : i32
    %c0_i32_1 = arith.constant 0 : i32
    return %c0_i32, %c0_i32_0 : i32, i32
  }
  func.func @transform_12(%arg0: i32) -> (i32, i32) {
    %c0_i32 = arith.constant 0 : i32
    %c0_i32_0 = arith.constant 0 : i32
    %c0_i32_1 = arith.constant 0 : i32
    return %c0_i32, %c0_i32_0 : i32, i32
  }
  func.func @transform_13(%arg0: i32) -> (i32, i32) {
    %c0_i32 = arith.constant 0 : i32
    %c0_i32_0 = arith.constant 0 : i32
    %c0_i32_1 = arith.constant 0 : i32
    return %c0_i32, %c0_i32_0 : i32, i32
  }
  func.func @transform_14(%arg0: i32) -> (i32, i32) {
    %c0_i32 = arith.constant 0 : i32
    %c0_i32_0 = arith.constant 0 : i32
    %c0_i32_1 = arith.constant 0 : i32
    return %c0_i32, %c0_i32_0 : i32, i32
  }
  func.func @transform_15(%arg0: i32) -> (i32, i32) {
    %c0_i32 = arith.constant 0 : i32
    %c0_i32_0 = arith.constant 0 : i32
    %c0_i32_1 = arith.constant 0 : i32
    return %c0_i32, %c0_i32_0 : i32, i32
  }
  func.func @transform_16(%arg0: i32) -> (i32, i32) {
    %c0_i32 = arith.constant 0 : i32
    %c0_i32_0 = arith.constant 0 : i32
    %c0_i32_1 = arith.constant 0 : i32
    return %c0_i32, %c0_i32_0 : i32, i32
  }
  func.func @transform_17(%arg0: i32) -> (i32, i32) {
    %c0_i32 = arith.constant 0 : i32
    %c0_i32_0 = arith.constant 0 : i32
    %c0_i32_1 = arith.constant 0 : i32
    return %c0_i32, %c0_i32_0 : i32, i32
  }
  func.func @transform_18(%arg0: i32) -> (i32, i32) {
    %c0_i32 = arith.constant 0 : i32
    %c0_i32_0 = arith.constant 0 : i32
    %c0_i32_1 = arith.constant 0 : i32
    return %c0_i32, %c0_i32_0 : i32, i32
  }
  func.func @transform_19(%arg0: i32) -> (i32, i32) {
    %c0_i32 = arith.constant 0 : i32
    %c0_i32_0 = arith.constant 0 : i32
    %c0_i32_1 = arith.constant 0 : i32
    return %c0_i32, %c0_i32_0 : i32, i32
  }
  func.func @transform_20(%arg0: i32) -> (i32, i32) {
    %c0_i32 = arith.constant 0 : i32
    %c0_i32_0 = arith.constant 0 : i32
    %c0_i32_1 = arith.constant 0 : i32
    return %c0_i32, %c0_i32_0 : i32, i32
  }
  func.func @transform_21(%arg0: i32) -> (i32, i32) {
    %c0_i32 = arith.constant 0 : i32
    %c0_i32_0 = arith.constant 0 : i32
    %c0_i32_1 = arith.constant 0 : i32
    return %c0_i32, %c0_i32_0 : i32, i32
  }
  func.func @transform_22(%arg0: i32) -> (i32, i32, i32, i32) {
    %c0_i32 = arith.constant 0 : i32
    %c0_i32_0 = arith.constant 0 : i32
    %c0_i32_1 = arith.constant 0 : i32
    %c0_i32_2 = arith.constant 0 : i32
    return %arg0, %c0_i32, %c0_i32_0, %c0_i32_1 : i32, i32, i32, i32
  }
}

</mosaic_0001>

<llo_original>
// kernel: decoder_trans_forward.1
$region0: #{decoder_trans_forward.1}
  #allocation0 [shape = 'u32[]', space=smem, size = 0x4, offset = 0x4, fixed_abs, tag = 'smem constant byte address 0x4 - core index']
  #allocation1 [shape = 'u32[144,128]{1,0:T(1,128)}', space=vmem, size = 0x12000, scoped, tag = 'internal scratch']
  %s0 = inlined_call_operand.vmem [shape: f32[2,4,256], index: 0, kind: input, shape index: {}]
  %s1 = inlined_call_operand.vmem [shape: f32[256,192], index: 1, kind: input, shape index: {}]
  %s2 = inlined_call_operand.vmem [shape: f32[1,192], index: 2, kind: input, shape index: {}]
  %s3 = inlined_call_operand.vmem [shape: f32[8,4], index: 3, kind: input, shape index: {}]
  %s4 = inlined_call_operand.hbm [shape: f32[192,384], index: 4, kind: input, shape index: {}]
  %s5 = inlined_call_operand.hbm [shape: f32[384,256], index: 5, kind: input, shape index: {}]
  %s6 = inlined_call_operand.vmem [shape: f32[1,256], index: 6, kind: input, shape index: {}]
  %s7 = inlined_call_operand.vmem [shape: f32[16,8], index: 7, kind: input, shape index: {}]
  %s8 = inlined_call_operand.vmem [shape: f32[256,512], index: 8, kind: input, shape index: {}]
  %s9 = inlined_call_operand.vmem [shape: f32[512,256], index: 9, kind: input, shape index: {}]
  %s10 = inlined_call_operand.vmem [shape: f32[1,256], index: 10, kind: input, shape index: {}]
  %s11 = inlined_call_operand.vmem [shape: f32[32,16], index: 11, kind: input, shape index: {}]
  %s12 = inlined_call_operand.vmem [shape: f32[256,512], index: 12, kind: input, shape index: {}]
  %s13 = inlined_call_operand.vmem [shape: f32[512,256], index: 13, kind: input, shape index: {}]
  %s14 = inlined_call_operand.vmem [shape: f32[1,256], index: 14, kind: input, shape index: {}]
  %s15 = inlined_call_operand.vmem [shape: f32[64,32], index: 15, kind: input, shape index: {}]
  %s16 = inlined_call_operand.hbm [shape: f32[256,512], index: 16, kind: input, shape index: {}]
  %s17 = inlined_call_operand.vmem [shape: f32[512,64], index: 17, kind: input, shape index: {}]
  %s18 = inlined_call_operand.vmem [shape: f32[512,64], index: 18, kind: input, shape index: {}]
  %s19 = inlined_call_operand.vmem [shape: f32[512,64], index: 19, kind: input, shape index: {}]
  %s20 = inlined_call_operand.vmem [shape: f32[512,64], index: 20, kind: input, shape index: {}]
  %s21 = inlined_call_operand.vmem [shape: f32[1,4], index: 21, kind: input, shape index: {}]
  %s22 = inlined_call_operand.hbm [shape: f32[2,4,64,64], index: 22, kind: output, shape index: {}]
  %s23 = sld [smem:[#allocation0]]
  $region133: #{decoder_trans_forward.1} parent=0
    _
  %s25 = ssub.s32 1, %s23
  %s26 = scalar_select 0, %s25, %s23
  $region1: #{decoder_trans_forward.1} parent=0
    #allocation2 [shape = 'u8[294912]{0}', space=vmem, size = 0x48000, scoped, tag = 'input window, operand 4, single buffered']
    #allocation3 [shape = 's32[2]{0}', space=sflag, size = 0x8, scoped, tag = 'scoped memory for decoder_trans_forward.1']
    #allocation4 [shape = 's32[2]{0}', space=sflag, size = 0x8, scoped, tag = 'scoped memory for decoder_trans_forward.1']
    #allocation5 [shape = 'u8[393216]{0}', space=vmem, size = 0x60000, scoped, tag = 'input window, operand 5, single buffered']
    #allocation6 [shape = 's32[1]{0}', space=sflag, size = 0x4, scoped, tag = 'scoped memory for decoder_trans_forward.1']
    #allocation7 [shape = 'u8[524288]{0}', space=vmem, size = 0x80000, scoped, tag = 'input window, operand 16, single buffered']
    #allocation8 [shape = 'u8[262144]{0}', space=vmem, size = 0x40000, scoped, tag = 'output window, operand 0']
    %27 = vsyncpa [#allocation3], 0
    %28 = vsyncpa [#allocation6], 0
    %29 = vsyncpa [#allocation4], 0
    %s30 = scalar_lea.sflag [#allocation4], 1
    %31 = vsyncpa %s30, 0
    loop: start=0, step=1, limit=4
    $region2: #{decoder_trans_forward.1} parent=1 // loop_pre_header
      _
    $region3: #{decoder_trans_forward.1} parent=1 // loop_header
      %s33 = sphi 0, %s37
      %p34 = scmp.ge.s32.totalorder %s33, 4
      %s43 = sphi 0, %s45
      %s46 = sphi 0, %s43
      %s47 = sphi 0, %s46
      %s63 = sphi 0, %s47
      %s67 = sphi 0, %s67
      %s69 = sphi 0, %s67
      %s70 = sphi 0, %s69
      %s84 = sphi 0, %s70
      %s88 = sphi 0, %s88
      %s90 = sphi 0, %s88
      %s91 = sphi 0, %s90
      %s105 = sphi 0, %s91
      %s109 = sphi 0, %s109
      %s111 = sphi 0, %s109
      %s112 = sphi 0, %s111
      %s126 = sphi 0, %s112
      %s130 = sphi 0, %s130
      %s132 = sphi 0, %s130
      %s133 = sphi 0, %s132
      %s147 = sphi 0, %s133
      %s151 = sphi 0, %s151
      %s153 = sphi 0, %s151
      %s154 = sphi 0, %s153
      %s168 = sphi 0, %s154
      %s172 = sphi 0, %s172
      %s174 = sphi 0, %s172
      %s175 = sphi 0, %s174
      %s189 = sphi 0, %s175
      %s193 = sphi 0, %s193
      %s195 = sphi 0, %s193
      %s196 = sphi 0, %s195
      %s210 = sphi 0, %s196
      %s214 = sphi 0, %s214
      %s216 = sphi 0, %s214
      %s217 = sphi 0, %s216
      %s231 = sphi 0, %s217
      %s235 = sphi 0, %s235
      %s237 = sphi 0, %s235
      %s238 = sphi 0, %s237
      %s252 = sphi 0, %s238
      %s256 = sphi 0, %s256
      %s258 = sphi 0, %s256
      %s259 = sphi 0, %s258
      %s273 = sphi 0, %s259
      %s277 = sphi 0, %s277
      %s279 = sphi 0, %s277
      %s280 = sphi 0, %s279
      %s294 = sphi 0, %s280
      %s298 = sphi 0, %s298
      %s300 = sphi 0, %s298
      %s301 = sphi 0, %s300
      %s315 = sphi 0, %s301
      %s319 = sphi 0, %s319
      %s321 = sphi 0, %s319
      %s322 = sphi 0, %s321
      %s336 = sphi 0, %s322
      %s340 = sphi 0, %s340
      %s342 = sphi 0, %s340
      %s343 = sphi 0, %s342
      %s357 = sphi 0, %s343
      %s361 = sphi 0, %s361
      %s363 = sphi 0, %s361
      %s364 = sphi 0, %s363
      %s378 = sphi 0, %s364
      %s382 = sphi 0, %s382
      %s384 = sphi 0, %s382
      %s385 = sphi 0, %s384
      %s399 = sphi 0, %s385
      %s403 = sphi 0, %s403
      %s405 = sphi 0, %s403
      %s406 = sphi 0, %s405
      %s420 = sphi 0, %s406
      %s424 = sphi 0, %s424
      %s426 = sphi 0, %s424
      %s427 = sphi 0, %s426
      %s441 = sphi 0, %s427
      %s445 = sphi 0, %s445
      %s447 = sphi 0, %s445
      %s448 = sphi 0, %s447
      %s462 = sphi 0, %s448
      %s466 = sphi 0, %s466
      %s468 = sphi 0, %s466
      %s469 = sphi 0, %s468
      %s483 = sphi 0, %s469
      %s487 = sphi 0, %s487
      %s489 = sphi 0, %s487
      %s490 = sphi 0, %s489
      %s504 = sphi 0, %s490
      %s510 = sphi 0, %s512
      %s513 = sphi 0, %s510
      %s514 = sphi 0, %s513
      %s530 = sphi 0, %s514
    $region4: #{decoder_trans_forward.1} parent=1 // loop_header_branch
      %36 = sbr.rel (%p34) target = $region8
    $region5: #{decoder_trans_forward.1} parent=1 // loop_body
      %s38 = ssub.s32 %s33, 1
      %s39 = ssub.s32 %s33, 2
      %s40 = sadd.s32 %s33, 1
      %s41 = ssub.s32 %s33, %s40
      %p42 = scmp.eq.s32.totalorder %s41, 0
      %s44 = sadd.s32 %s43, 1
      %s45 = scalar_select %p42, %s43, %s44
      %p48 = pneg %p42
      %p49 = scmp.eq.s32.totalorder %s33, 1
      %p50 = por %p48, %p49
      %p51 = scmp.ne.s32.totalorder %s43, %s46
      %p52 = scmp.eq.s32.totalorder %s33, 0
      %p53 = por %p51, %p52
      %p54 = scmp.ne.s32.totalorder %s43, %s46
      %p55 = scmp.eq.s32.totalorder %s38, 1
      %p56 = por %p54, %p55
      %p57 = scmp.ne.s32.totalorder %s46, %s47
      %p58 = scmp.eq.s32.totalorder %s38, 0
      %p59 = por %p57, %p58
      %p60 = scmp.ne.s32.totalorder %s46, %s47
      %p61 = scmp.eq.s32.totalorder %s39, 1
      %p62 = por %p60, %p61
      %p64 = scmp.ne.s32.totalorder %s47, %s63
      %p65 = scmp.eq.s32.totalorder %s39, 0
      %p66 = por %p64, %p65
      %s68 = sadd.s32 %s67, 1
      %p71 = scmp.eq.s32.totalorder %s33, 1
      %p72 = scmp.ne.s32.totalorder %s67, %s69
      %p73 = scmp.eq.s32.totalorder %s33, 0
      %p74 = por %p72, %p73
      %p75 = scmp.ne.s32.totalorder %s67, %s69
      %p76 = scmp.eq.s32.totalorder %s38, 1
      %p77 = por %p75, %p76
      %p78 = scmp.ne.s32.totalorder %s69, %s70
      %p79 = scmp.eq.s32.totalorder %s38, 0
      %p80 = por %p78, %p79
      %p81 = scmp.ne.s32.totalorder %s69, %s70
      %p82 = scmp.eq.s32.totalorder %s39, 1
      %p83 = por %p81, %p82
      %p85 = scmp.ne.s32.totalorder %s70, %s84
      %p86 = scmp.eq.s32.totalorder %s39, 0
      %p87 = por %p85, %p86
      %s89 = sadd.s32 %s88, 1
      %p92 = scmp.eq.s32.totalorder %s33, 1
      %p93 = scmp.ne.s32.totalorder %s88, %s90
      %p94 = scmp.eq.s32.totalorder %s33, 0
      %p95 = por %p93, %p94
      %p96 = scmp.ne.s32.totalorder %s88, %s90
      %p97 = scmp.eq.s32.totalorder %s38, 1
      %p98 = por %p96, %p97
      %p99 = scmp.ne.s32.totalorder %s90, %s91
      %p100 = scmp.eq.s32.totalorder %s38, 0
      %p101 = por %p99, %p100
      %p102 = scmp.ne.s32.totalorder %s90, %s91
      %p103 = scmp.eq.s32.totalorder %s39, 1
      %p104 = por %p102, %p103
      %p106 = scmp.ne.s32.totalorder %s91, %s105
      %p107 = scmp.eq.s32.totalorder %s39, 0
      %p108 = por %p106, %p107
      %s110 = sadd.s32 %s109, 1
      %p113 = scmp.eq.s32.totalorder %s33, 1
      %p114 = scmp.ne.s32.totalorder %s109, %s111
      %p115 = scmp.eq.s32.totalorder %s33, 0
      %p116 = por %p114, %p115
      %p117 = scmp.ne.s32.totalorder %s109, %s111
      %p118 = scmp.eq.s32.totalorder %s38, 1
      %p119 = por %p117, %p118
      %p120 = scmp.ne.s32.totalorder %s111, %s112
      %p121 = scmp.eq.s32.totalorder %s38, 0
      %p122 = por %p120, %p121
      %p123 = scmp.ne.s32.totalorder %s111, %s112
      %p124 = scmp.eq.s32.totalorder %s39, 1
      %p125 = por %p123, %p124
      %p127 = scmp.ne.s32.totalorder %s112, %s126
      %p128 = scmp.eq.s32.totalorder %s39, 0
      %p129 = por %p127, %p128
      %s131 = sadd.s32 %s130, 1
      %p134 = scmp.eq.s32.totalorder %s33, 1
      %p135 = scmp.ne.s32.totalorder %s130, %s132
      %p136 = scmp.eq.s32.totalorder %s33, 0
      %p137 = por %p135, %p136
      %p138 = scmp.ne.s32.totalorder %s130, %s132
      %p139 = scmp.eq.s32.totalorder %s38, 1
      %p140 = por %p138, %p139
      %p141 = scmp.ne.s32.totalorder %s132, %s133
      %p142 = scmp.eq.s32.totalorder %s38, 0
      %p143 = por %p141, %p142
      %p144 = scmp.ne.s32.totalorder %s132, %s133
      %p145 = scmp.eq.s32.totalorder %s39, 1
      %p146 = por %p144, %p145
      %p148 = scmp.ne.s32.totalorder %s133, %s147
      %p149 = scmp.eq.s32.totalorder %s39, 0
      %p150 = por %p148, %p149
      %s152 = sadd.s32 %s151, 1
      %p155 = scmp.eq.s32.totalorder %s33, 1
      %p156 = scmp.ne.s32.totalorder %s151, %s153
      %p157 = scmp.eq.s32.totalorder %s33, 0
      %p158 = por %p156, %p157
      %p159 = scmp.ne.s32.totalorder %s151, %s153
      %p160 = scmp.eq.s32.totalorder %s38, 1
      %p161 = por %p159, %p160
      %p162 = scmp.ne.s32.totalorder %s153, %s154
      %p163 = scmp.eq.s32.totalorder %s38, 0
      %p164 = por %p162, %p163
      %p165 = scmp.ne.s32.totalorder %s153, %s154
      %p166 = scmp.eq.s32.totalorder %s39, 1
      %p167 = por %p165, %p166
      %p169 = scmp.ne.s32.totalorder %s154, %s168
      %p170 = scmp.eq.s32.totalorder %s39, 0
      %p171 = por %p169, %p170
      %s173 = sadd.s32 %s172, 1
      %p176 = scmp.eq.s32.totalorder %s33, 1
      %p177 = scmp.ne.s32.totalorder %s172, %s174
      %p178 = scmp.eq.s32.totalorder %s33, 0
      %p179 = por %p177, %p178
      %p180 = scmp.ne.s32.totalorder %s172, %s174
      %p181 = scmp.eq.s32.totalorder %s38, 1
      %p182 = por %p180, %p181
      %p183 = scmp.ne.s32.totalorder %s174, %s175
      %p184 = scmp.eq.s32.totalorder %s38, 0
      %p185 = por %p183, %p184
      %p186 = scmp.ne.s32.totalorder %s174, %s175
      %p187 = scmp.eq.s32.totalorder %s39, 1
      %p188 = por %p186, %p187
      %p190 = scmp.ne.s32.totalorder %s175, %s189
      %p191 = scmp.eq.s32.totalorder %s39, 0
      %p192 = por %p190, %p191
      %s194 = sadd.s32 %s193, 1
      %p197 = scmp.eq.s32.totalorder %s33, 1
      %p198 = scmp.ne.s32.totalorder %s193, %s195
      %p199 = scmp.eq.s32.totalorder %s33, 0
      %p200 = por %p198, %p199
      %p201 = scmp.ne.s32.totalorder %s193, %s195
      %p202 = scmp.eq.s32.totalorder %s38, 1
      %p203 = por %p201, %p202
      %p204 = scmp.ne.s32.totalorder %s195, %s196
      %p205 = scmp.eq.s32.totalorder %s38, 0
      %p206 = por %p204, %p205
      %p207 = scmp.ne.s32.totalorder %s195, %s196
      %p208 = scmp.eq.s32.totalorder %s39, 1
      %p209 = por %p207, %p208
      %p211 = scmp.ne.s32.totalorder %s196, %s210
      %p212 = scmp.eq.s32.totalorder %s39, 0
      %p213 = por %p211, %p212
      %s215 = sadd.s32 %s214, 1
      %p218 = scmp.eq.s32.totalorder %s33, 1
      %p219 = scmp.ne.s32.totalorder %s214, %s216
      %p220 = scmp.eq.s32.totalorder %s33, 0
      %p221 = por %p219, %p220
      %p222 = scmp.ne.s32.totalorder %s214, %s216
      %p223 = scmp.eq.s32.totalorder %s38, 1
      %p224 = por %p222, %p223
      %p225 = scmp.ne.s32.totalorder %s216, %s217
      %p226 = scmp.eq.s32.totalorder %s38, 0
      %p227 = por %p225, %p226
      %p228 = scmp.ne.s32.totalorder %s216, %s217
      %p229 = scmp.eq.s32.totalorder %s39, 1
      %p230 = por %p228, %p229
      %p232 = scmp.ne.s32.totalorder %s217, %s231
      %p233 = scmp.eq.s32.totalorder %s39, 0
      %p234 = por %p232, %p233
      %s236 = sadd.s32 %s235, 1
      %p239 = scmp.eq.s32.totalorder %s33, 1
      %p240 = scmp.ne.s32.totalorder %s235, %s237
      %p241 = scmp.eq.s32.totalorder %s33, 0
      %p242 = por %p240, %p241
      %p243 = scmp.ne.s32.totalorder %s235, %s237
      %p244 = scmp.eq.s32.totalorder %s38, 1
      %p245 = por %p243, %p244
      %p246 = scmp.ne.s32.totalorder %s237, %s238
      %p247 = scmp.eq.s32.totalorder %s38, 0
      %p248 = por %p246, %p247
      %p249 = scmp.ne.s32.totalorder %s237, %s238
      %p250 = scmp.eq.s32.totalorder %s39, 1
      %p251 = por %p249, %p250
      %p253 = scmp.ne.s32.totalorder %s238, %s252
      %p254 = scmp.eq.s32.totalorder %s39, 0
      %p255 = por %p253, %p254
      %s257 = sadd.s32 %s256, 1
      %p260 = scmp.eq.s32.totalorder %s33, 1
      %p261 = scmp.ne.s32.totalorder %s256, %s258
      %p262 = scmp.eq.s32.totalorder %s33, 0
      %p263 = por %p261, %p262
      %p264 = scmp.ne.s32.totalorder %s256, %s258
      %p265 = scmp.eq.s32.totalorder %s38, 1
      %p266 = por %p264, %p265
      %p267 = scmp.ne.s32.totalorder %s258, %s259
      %p268 = scmp.eq.s32.totalorder %s38, 0
      %p269 = por %p267, %p268
      %p270 = scmp.ne.s32.totalorder %s258, %s259
      %p271 = scmp.eq.s32.totalorder %s39, 1
      %p272 = por %p270, %p271
      %p274 = scmp.ne.s32.totalorder %s259, %s273
      %p275 = scmp.eq.s32.totalorder %s39, 0
      %p276 = por %p274, %p275
      %s278 = sadd.s32 %s277, 1
      %p281 = scmp.eq.s32.totalorder %s33, 1
      %p282 = scmp.ne.s32.totalorder %s277, %s279
      %p283 = scmp.eq.s32.totalorder %s33, 0
      %p284 = por %p282, %p283
      %p285 = scmp.ne.s32.totalorder %s277, %s279
      %p286 = scmp.eq.s32.totalorder %s38, 1
      %p287 = por %p285, %p286
      %p288 = scmp.ne.s32.totalorder %s279, %s280
      %p289 = scmp.eq.s32.totalorder %s38, 0
      %p290 = por %p288, %p289
      %p291 = scmp.ne.s32.totalorder %s279, %s280
      %p292 = scmp.eq.s32.totalorder %s39, 1
      %p293 = por %p291, %p292
      %p295 = scmp.ne.s32.totalorder %s280, %s294
      %p296 = scmp.eq.s32.totalorder %s39, 0
      %p297 = por %p295, %p296
      %s299 = sadd.s32 %s298, 1
      %p302 = scmp.eq.s32.totalorder %s33, 1
      %p303 = scmp.ne.s32.totalorder %s298, %s300
      %p304 = scmp.eq.s32.totalorder %s33, 0
      %p305 = por %p303, %p304
      %p306 = scmp.ne.s32.totalorder %s298, %s300
      %p307 = scmp.eq.s32.totalorder %s38, 1
      %p308 = por %p306, %p307
      %p309 = scmp.ne.s32.totalorder %s300, %s301
      %p310 = scmp.eq.s32.totalorder %s38, 0
      %p311 = por %p309, %p310
      %p312 = scmp.ne.s32.totalorder %s300, %s301
      %p313 = scmp.eq.s32.totalorder %s39, 1
      %p314 = por %p312, %p313
      %p316 = scmp.ne.s32.totalorder %s301, %s315
      %p317 = scmp.eq.s32.totalorder %s39, 0
      %p318 = por %p316, %p317
      %s320 = sadd.s32 %s319, 1
      %p323 = scmp.eq.s32.totalorder %s33, 1
      %p324 = scmp.ne.s32.totalorder %s319, %s321
      %p325 = scmp.eq.s32.totalorder %s33, 0
      %p326 = por %p324, %p325
      %p327 = scmp.ne.s32.totalorder %s319, %s321
      %p328 = scmp.eq.s32.totalorder %s38, 1
      %p329 = por %p327, %p328
      %p330 = scmp.ne.s32.totalorder %s321, %s322
      %p331 = scmp.eq.s32.totalorder %s38, 0
      %p332 = por %p330, %p331
      %p333 = scmp.ne.s32.totalorder %s321, %s322
      %p334 = scmp.eq.s32.totalorder %s39, 1
      %p335 = por %p333, %p334
      %p337 = scmp.ne.s32.totalorder %s322, %s336
      %p338 = scmp.eq.s32.totalorder %s39, 0
      %p339 = por %p337, %p338
      %s341 = sadd.s32 %s340, 1
      %p344 = scmp.eq.s32.totalorder %s33, 1
      %p345 = scmp.ne.s32.totalorder %s340, %s342
      %p346 = scmp.eq.s32.totalorder %s33, 0
      %p347 = por %p345, %p346
      %p348 = scmp.ne.s32.totalorder %s340, %s342
      %p349 = scmp.eq.s32.totalorder %s38, 1
      %p350 = por %p348, %p349
      %p351 = scmp.ne.s32.totalorder %s342, %s343
      %p352 = scmp.eq.s32.totalorder %s38, 0
      %p353 = por %p351, %p352
      %p354 = scmp.ne.s32.totalorder %s342, %s343
      %p355 = scmp.eq.s32.totalorder %s39, 1
      %p356 = por %p354, %p355
      %p358 = scmp.ne.s32.totalorder %s343, %s357
      %p359 = scmp.eq.s32.totalorder %s39, 0
      %p360 = por %p358, %p359
      %s362 = sadd.s32 %s361, 1
      %p365 = scmp.eq.s32.totalorder %s33, 1
      %p366 = scmp.ne.s32.totalorder %s361, %s363
      %p367 = scmp.eq.s32.totalorder %s33, 0
      %p368 = por %p366, %p367
      %p369 = scmp.ne.s32.totalorder %s361, %s363
      %p370 = scmp.eq.s32.totalorder %s38, 1
      %p371 = por %p369, %p370
      %p372 = scmp.ne.s32.totalorder %s363, %s364
      %p373 = scmp.eq.s32.totalorder %s38, 0
      %p374 = por %p372, %p373
      %p375 = scmp.ne.s32.totalorder %s363, %s364
      %p376 = scmp.eq.s32.totalorder %s39, 1
      %p377 = por %p375, %p376
      %p379 = scmp.ne.s32.totalorder %s364, %s378
      %p380 = scmp.eq.s32.totalorder %s39, 0
      %p381 = por %p379, %p380
      %s383 = sadd.s32 %s382, 1
      %p386 = scmp.eq.s32.totalorder %s33, 1
      %p387 = scmp.ne.s32.totalorder %s382, %s384
      %p388 = scmp.eq.s32.totalorder %s33, 0
      %p389 = por %p387, %p388
      %p390 = scmp.ne.s32.totalorder %s382, %s384
      %p391 = scmp.eq.s32.totalorder %s38, 1
      %p392 = por %p390, %p391
      %p393 = scmp.ne.s32.totalorder %s384, %s385
      %p394 = scmp.eq.s32.totalorder %s38, 0
      %p395 = por %p393, %p394
      %p396 = scmp.ne.s32.totalorder %s384, %s385
      %p397 = scmp.eq.s32.totalorder %s39, 1
      %p398 = por %p396, %p397
      %p400 = scmp.ne.s32.totalorder %s385, %s399
      %p401 = scmp.eq.s32.totalorder %s39, 0
      %p402 = por %p400, %p401
      %s404 = sadd.s32 %s403, 1
      %p407 = scmp.eq.s32.totalorder %s33, 1
      %p408 = scmp.ne.s32.totalorder %s403, %s405
      %p409 = scmp.eq.s32.totalorder %s33, 0
      %p410 = por %p408, %p409
      %p411 = scmp.ne.s32.totalorder %s403, %s405
      %p412 = scmp.eq.s32.totalorder %s38, 1
      %p413 = por %p411, %p412
      %p414 = scmp.ne.s32.totalorder %s405, %s406
      %p415 = scmp.eq.s32.totalorder %s38, 0
      %p416 = por %p414, %p415
      %p417 = scmp.ne.s32.totalorder %s405, %s406
      %p418 = scmp.eq.s32.totalorder %s39, 1
      %p419 = por %p417, %p418
      %p421 = scmp.ne.s32.totalorder %s406, %s420
      %p422 = scmp.eq.s32.totalorder %s39, 0
      %p423 = por %p421, %p422
      %s425 = sadd.s32 %s424, 1
      %p428 = scmp.eq.s32.totalorder %s33, 1
      %p429 = scmp.ne.s32.totalorder %s424, %s426
      %p430 = scmp.eq.s32.totalorder %s33, 0
      %p431 = por %p429, %p430
      %p432 = scmp.ne.s32.totalorder %s424, %s426
      %p433 = scmp.eq.s32.totalorder %s38, 1
      %p434 = por %p432, %p433
      %p435 = scmp.ne.s32.totalorder %s426, %s427
      %p436 = scmp.eq.s32.totalorder %s38, 0
      %p437 = por %p435, %p436
      %p438 = scmp.ne.s32.totalorder %s426, %s427
      %p439 = scmp.eq.s32.totalorder %s39, 1
      %p440 = por %p438, %p439
      %p442 = scmp.ne.s32.totalorder %s427, %s441
      %p443 = scmp.eq.s32.totalorder %s39, 0
      %p444 = por %p442, %p443
      %s446 = sadd.s32 %s445, 1
      %p449 = scmp.eq.s32.totalorder %s33, 1
      %p450 = scmp.ne.s32.totalorder %s445, %s447
      %p451 = scmp.eq.s32.totalorder %s33, 0
      %p452 = por %p450, %p451
      %p453 = scmp.ne.s32.totalorder %s445, %s447
      %p454 = scmp.eq.s32.totalorder %s38, 1
      %p455 = por %p453, %p454
      %p456 = scmp.ne.s32.totalorder %s447, %s448
      %p457 = scmp.eq.s32.totalorder %s38, 0
      %p458 = por %p456, %p457
      %p459 = scmp.ne.s32.totalorder %s447, %s448
      %p460 = scmp.eq.s32.totalorder %s39, 1
      %p461 = por %p459, %p460
      %p463 = scmp.ne.s32.totalorder %s448, %s462
      %p464 = scmp.eq.s32.totalorder %s39, 0
      %p465 = por %p463, %p464
      %s467 = sadd.s32 %s466, 1
      %p470 = scmp.eq.s32.totalorder %s33, 1
      %p471 = scmp.ne.s32.totalorder %s466, %s468
      %p472 = scmp.eq.s32.totalorder %s33, 0
      %p473 = por %p471, %p472
      %p474 = scmp.ne.s32.totalorder %s466, %s468
      %p475 = scmp.eq.s32.totalorder %s38, 1
      %p476 = por %p474, %p475
      %p477 = scmp.ne.s32.totalorder %s468, %s469
      %p478 = scmp.eq.s32.totalorder %s38, 0
      %p479 = por %p477, %p478
      %p480 = scmp.ne.s32.totalorder %s468, %s469
      %p481 = scmp.eq.s32.totalorder %s39, 1
      %p482 = por %p480, %p481
      %p484 = scmp.ne.s32.totalorder %s469, %s483
      %p485 = scmp.eq.s32.totalorder %s39, 0
      %p486 = por %p484, %p485
      %s488 = sadd.s32 %s487, 1
      %p491 = scmp.eq.s32.totalorder %s33, 1
      %p492 = scmp.ne.s32.totalorder %s487, %s489
      %p493 = scmp.eq.s32.totalorder %s33, 0
      %p494 = por %p492, %p493
      %p495 = scmp.ne.s32.totalorder %s487, %s489
      %p496 = scmp.eq.s32.totalorder %s38, 1
      %p497 = por %p495, %p496
      %p498 = scmp.ne.s32.totalorder %s489, %s490
      %p499 = scmp.eq.s32.totalorder %s38, 0
      %p500 = por %p498, %p499
      %p501 = scmp.ne.s32.totalorder %s489, %s490
      %p502 = scmp.eq.s32.totalorder %s39, 1
      %p503 = por %p501, %p502
      %p505 = scmp.ne.s32.totalorder %s490, %s504
      %p506 = scmp.eq.s32.totalorder %s39, 0
      %p507 = por %p505, %p506
      %s508 = ssub.s32 %s33, %s40
      %p509 = scmp.eq.s32.totalorder %s508, 0
      %s511 = sadd.s32 %s510, 1
      %s512 = scalar_select %p509, %s510, %s511
      %p515 = pneg %p509
      %p516 = scmp.eq.s32.totalorder %s33, 1
      %p517 = por %p515, %p516
      %p518 = scmp.ne.s32.totalorder %s510, %s513
      %p519 = scmp.eq.s32.totalorder %s33, 0
      %p520 = por %p518, %p519
      %p521 = scmp.ne.s32.totalorder %s510, %s513
      %p522 = scmp.eq.s32.totalorder %s38, 1
      %p523 = por %p521, %p522
      %p524 = scmp.ne.s32.totalorder %s513, %s514
      %p525 = scmp.eq.s32.totalorder %s38, 0
      %p526 = por %p524, %p525
      %p527 = scmp.ne.s32.totalorder %s513, %s514
      %p528 = scmp.eq.s32.totalorder %s39, 1
      %p529 = por %p527, %p528
      %p531 = scmp.ne.s32.totalorder %s514, %s530
      %p532 = scmp.eq.s32.totalorder %s39, 0
      %p533 = por %p531, %p532
      %p534 = scmp.le.s32.totalorder 1, %s33
      %p535 = scmp.lt.s32.totalorder %s33, 3
      %p536 = pnand %p534, %p535
      %p537 = pneg %p536
      // Predicated region
      $region9: #{decoder_trans_forward.1} parent=5 // pred_check
        _
      $region10: #{decoder_trans_forward.1} parent=5 // pred_check_branch
        %539 = sbr.rel (%p536) target = $region12
      $region11: #{decoder_trans_forward.1} parent=5 // pred_region
        %s540 = ssub.s32 %s33, 1
        // Predicated region
        $region13: #{decoder_trans_forward.1} parent=11 // pred_check
          %p541 = pneg %p80
        $region14: #{decoder_trans_forward.1} parent=11 // pred_check_branch
          %543 = sbr.rel (%p541) target = $region16
        $region15: #{decoder_trans_forward.1} parent=11 // pred_region
          _
        $region16: #{decoder_trans_forward.1} parent=11 // pred_fallthru
          _
        // Predicated region
        $region17: #{decoder_trans_forward.1} parent=11 // pred_check
          %p544 = pneg %p101
        $region18: #{decoder_trans_forward.1} parent=11 // pred_check_branch
          %546 = sbr.rel (%p544) target = $region20
        $region19: #{decoder_trans_forward.1} parent=11 // pred_region
          _
        $region20: #{decoder_trans_forward.1} parent=11 // pred_fallthru
          _
        // Predicated region
        $region21: #{decoder_trans_forward.1} parent=11 // pred_check
          %p547 = pneg %p122
        $region22: #{decoder_trans_forward.1} parent=11 // pred_check_branch
          %549 = sbr.rel (%p547) target = $region24
        $region23: #{decoder_trans_forward.1} parent=11 // pred_region
          _
        $region24: #{decoder_trans_forward.1} parent=11 // pred_fallthru
          _
        // Predicated region
        $region25: #{decoder_trans_forward.1} parent=11 // pred_check
          %p550 = pneg %p143
        $region26: #{decoder_trans_forward.1} parent=11 // pred_check_branch
          %552 = sbr.rel (%p550) target = $region28
        $region27: #{decoder_trans_forward.1} parent=11 // pred_region
          %s554 = ssub.s32 9216, 9216
          %555 = vsyncadd [#allocation3], %s554
          %s556 = sshll.u32 [#allocation2], 4
          %s557 = int_to_ptr.vmem [resolvable:$true] %s556
          %562 = dma.hbm_to_vmem [thread:$0]  %s4, 9216, %s557, [#allocation3], 384, 384, 24
        $region28: #{decoder_trans_forward.1} parent=11 // pred_fallthru
          _
        // Predicated region
        $region29: #{decoder_trans_forward.1} parent=11 // pred_check
          %p563 = pneg %p164
        $region30: #{decoder_trans_forward.1} parent=11 // pred_check_branch
          %565 = sbr.rel (%p563) target = $region32
        $region31: #{decoder_trans_forward.1} parent=11 // pred_region
          %s567 = ssub.s32 12288, 12288
          %568 = vsyncadd [#allocation6], %s567
          %s569 = sshll.u32 [#allocation5], 4
          %s570 = int_to_ptr.vmem [resolvable:$true] %s569
          %575 = dma.hbm_to_vmem [thread:$0]  %s5, 12288, %s570, [#allocation6], 256, 256, 16
        $region32: #{decoder_trans_forward.1} parent=11 // pred_fallthru
          _
        // Predicated region
        $region33: #{decoder_trans_forward.1} parent=11 // pred_check
          %p576 = pneg %p185
        $region34: #{decoder_trans_forward.1} parent=11 // pred_check_branch
          %578 = sbr.rel (%p576) target = $region36
        $region35: #{decoder_trans_forward.1} parent=11 // pred_region
          _
        $region36: #{decoder_trans_forward.1} parent=11 // pred_fallthru
          _
        // Predicated region
        $region37: #{decoder_trans_forward.1} parent=11 // pred_check
          %p579 = pneg %p206
        $region38: #{decoder_trans_forward.1} parent=11 // pred_check_branch
          %581 = sbr.rel (%p579) target = $region40
        $region39: #{decoder_trans_forward.1} parent=11 // pred_region
          _
        $region40: #{decoder_trans_forward.1} parent=11 // pred_fallthru
          _
        // Predicated region
        $region41: #{decoder_trans_forward.1} parent=11 // pred_check
          %p582 = pneg %p227
        $region42: #{decoder_trans_forward.1} parent=11 // pred_check_branch
          %584 = sbr.rel (%p582) target = $region44
        $region43: #{decoder_trans_forward.1} parent=11 // pred_region
          _
        $region44: #{decoder_trans_forward.1} parent=11 // pred_fallthru
          _
        // Predicated region
        $region45: #{decoder_trans_forward.1} parent=11 // pred_check
          %p585 = pneg %p248
        $region46: #{decoder_trans_forward.1} parent=11 // pred_check_branch
          %587 = sbr.rel (%p585) target = $region48
        $region47: #{decoder_trans_forward.1} parent=11 // pred_region
          _
        $region48: #{decoder_trans_forward.1} parent=11 // pred_fallthru
          _
        // Predicated region
        $region49: #{decoder_trans_forward.1} parent=11 // pred_check
          %p588 = pneg %p269
        $region50: #{decoder_trans_forward.1} parent=11 // pred_check_branch
          %590 = sbr.rel (%p588) target = $region52
        $region51: #{decoder_trans_forward.1} parent=11 // pred_region
          _
        $region52: #{decoder_trans_forward.1} parent=11 // pred_fallthru
          _
        // Predicated region
        $region53: #{decoder_trans_forward.1} parent=11 // pred_check
          %p591 = pneg %p290
        $region54: #{decoder_trans_forward.1} parent=11 // pred_check_branch
          %593 = sbr.rel (%p591) target = $region56
        $region55: #{decoder_trans_forward.1} parent=11 // pred_region
          _
        $region56: #{decoder_trans_forward.1} parent=11 // pred_fallthru
          _
        // Predicated region
        $region57: #{decoder_trans_forward.1} parent=11 // pred_check
          %p594 = pneg %p311
        $region58: #{decoder_trans_forward.1} parent=11 // pred_check_branch
          %596 = sbr.rel (%p594) target = $region60
        $region59: #{decoder_trans_forward.1} parent=11 // pred_region
          _
        $region60: #{decoder_trans_forward.1} parent=11 // pred_fallthru
          _
        // Predicated region
        $region61: #{decoder_trans_forward.1} parent=11 // pred_check
          %p597 = pneg %p332
        $region62: #{decoder_trans_forward.1} parent=11 // pred_check_branch
          %599 = sbr.rel (%p597) target = $region64
        $region63: #{decoder_trans_forward.1} parent=11 // pred_region
          _
        $region64: #{decoder_trans_forward.1} parent=11 // pred_fallthru
          _
        // Predicated region
        $region65: #{decoder_trans_forward.1} parent=11 // pred_check
          %p600 = pneg %p353
        $region66: #{decoder_trans_forward.1} parent=11 // pred_check_branch
          %602 = sbr.rel (%p600) target = $region68
        $region67: #{decoder_trans_forward.1} parent=11 // pred_region
          _
        $region68: #{decoder_trans_forward.1} parent=11 // pred_fallthru
          _
        // Predicated region
        $region69: #{decoder_trans_forward.1} parent=11 // pred_check
          %p603 = pneg %p374
        $region70: #{decoder_trans_forward.1} parent=11 // pred_check_branch
          %605 = sbr.rel (%p603) target = $region72
        $region71: #{decoder_trans_forward.1} parent=11 // pred_region
          _
        $region72: #{decoder_trans_forward.1} parent=11 // pred_fallthru
          _
        // Predicated region
        $region73: #{decoder_trans_forward.1} parent=11 // pred_check
          %p606 = pneg %p395
        $region74: #{decoder_trans_forward.1} parent=11 // pred_check_branch
          %608 = sbr.rel (%p606) target = $region76
        $region75: #{decoder_trans_forward.1} parent=11 // pred_region
          %s610 = ssub.s32 16384, 16384
          %611 = vsyncadd [#allocation6], %s610
          %s612 = sshll.u32 [#allocation7], 4
          %s613 = int_to_ptr.vmem [resolvable:$true] %s612
          %618 = dma.hbm_to_vmem [thread:$0]  %s16, 16384, %s613, [#allocation6], 512, 512, 32
        $region76: #{decoder_trans_forward.1} parent=11 // pred_fallthru
          _
        // Predicated region
        $region77: #{decoder_trans_forward.1} parent=11 // pred_check
          %p619 = pneg %p416
        $region78: #{decoder_trans_forward.1} parent=11 // pred_check_branch
          %621 = sbr.rel (%p619) target = $region80
        $region79: #{decoder_trans_forward.1} parent=11 // pred_region
          _
        $region80: #{decoder_trans_forward.1} parent=11 // pred_fallthru
          _
        // Predicated region
        $region81: #{decoder_trans_forward.1} parent=11 // pred_check
          %p622 = pneg %p437
        $region82: #{decoder_trans_forward.1} parent=11 // pred_check_branch
          %624 = sbr.rel (%p622) target = $region84
        $region83: #{decoder_trans_forward.1} parent=11 // pred_region
          _
        $region84: #{decoder_trans_forward.1} parent=11 // pred_fallthru
          _
        // Predicated region
        $region85: #{decoder_trans_forward.1} parent=11 // pred_check
          %p625 = pneg %p458
        $region86: #{decoder_trans_forward.1} parent=11 // pred_check_branch
          %627 = sbr.rel (%p625) target = $region88
        $region87: #{decoder_trans_forward.1} parent=11 // pred_region
          _
        $region88: #{decoder_trans_forward.1} parent=11 // pred_fallthru
          _
        // Predicated region
        $region89: #{decoder_trans_forward.1} parent=11 // pred_check
          %p628 = pneg %p479
        $region90: #{decoder_trans_forward.1} parent=11 // pred_check_branch
          %630 = sbr.rel (%p628) target = $region92
        $region91: #{decoder_trans_forward.1} parent=11 // pred_region
          _
        $region92: #{decoder_trans_forward.1} parent=11 // pred_fallthru
          _
        // Predicated region
        $region93: #{decoder_trans_forward.1} parent=11 // pred_check
          %p631 = pneg %p500
        $region94: #{decoder_trans_forward.1} parent=11 // pred_check_branch
          %633 = sbr.rel (%p631) target = $region96
        $region95: #{decoder_trans_forward.1} parent=11 // pred_region
          _
        $region96: #{decoder_trans_forward.1} parent=11 // pred_fallthru
          _
      $region12: #{decoder_trans_forward.1} parent=5 // pred_fallthru
        _
      %p634 = scmp.lt.s32.totalorder %s33, 2
      // Predicated region
      $region97: #{decoder_trans_forward.1} parent=5 // pred_check
        %p635 = pneg %p634
      $region98: #{decoder_trans_forward.1} parent=5 // pred_check_branch
        %637 = sbr.rel (%p635) target = $region100
      $region99: #{decoder_trans_forward.1} parent=5 // pred_region
        // Predicated region
        $region101: #{decoder_trans_forward.1} parent=99 // pred_check
          %p638 = pneg %p53
        $region102: #{decoder_trans_forward.1} parent=99 // pred_check_branch
          %640 = sbr.rel (%p638) target = $region104
        $region103: #{decoder_trans_forward.1} parent=99 // pred_region
          %p641 = scmp.lt.s32.totalorder %s33, 1
          %s642 = scalar_select %p641, %s33, 1
          %s643 = smul.addr %s642, 2
          %s644 = smul.addr %s643, 4
          %s645 = scalar_lea.vmem %s0, %s644
        $region104: #{decoder_trans_forward.1} parent=99 // pred_fallthru
          _
      $region100: #{decoder_trans_forward.1} parent=5 // pred_fallthru
        _
      %p646 = scmp.le.s32.totalorder 1, %s33
      %p647 = scmp.lt.s32.totalorder %s33, 3
      %p648 = pnand %p646, %p647
      %p649 = pneg %p648
      // Predicated region
      $region105: #{decoder_trans_forward.1} parent=5 // pred_check
        _
      $region106: #{decoder_trans_forward.1} parent=5 // pred_check_branch
        %651 = sbr.rel (%p648) target = $region108
      $region107: #{decoder_trans_forward.1} parent=5 // pred_region
        %s652 = ssub.s32 %s33, 1
        // Predicated region
        $region109: #{decoder_trans_forward.1} parent=107 // pred_check
          %p653 = pneg %p143
        $region110: #{decoder_trans_forward.1} parent=107 // pred_check_branch
          %655 = sbr.rel (%p653) target = $region112
        $region111: #{decoder_trans_forward.1} parent=107 // pred_region
          %656 = dma.done [#allocation3], 9216
        $region112: #{decoder_trans_forward.1} parent=107 // pred_fallthru
          _
        // Predicated region
        $region113: #{decoder_trans_forward.1} parent=107 // pred_check
          %p657 = pneg %p164
        $region114: #{decoder_trans_forward.1} parent=107 // pred_check_branch
          %659 = sbr.rel (%p657) target = $region116
        $region115: #{decoder_trans_forward.1} parent=107 // pred_region
          %660 = dma.done [#allocation6], 12288
        $region116: #{decoder_trans_forward.1} parent=107 // pred_fallthru
          _
        // Predicated region
        $region117: #{decoder_trans_forward.1} parent=107 // pred_check
          %p661 = pneg %p395
        $region118: #{decoder_trans_forward.1} parent=107 // pred_check_branch
          %663 = sbr.rel (%p661) target = $region120
        $region119: #{decoder_trans_forward.1} parent=107 // pred_region
          %664 = dma.done [#allocation6], 16384
        $region120: #{decoder_trans_forward.1} parent=107 // pred_fallthru
          _
        %p665 = scmp.lt.s32.totalorder %s38, 1
        %s666 = scalar_select %p665, %s38, 1
        %s667 = smul.addr %s666, 2
        %s668 = smul.addr %s667, 4
        %s669 = scalar_lea.vmem %s0, %s668
        %p670 = pneg %p59
        %p671 = pneg %p56
        %p672 = pneg %p80
        %p673 = pneg %p77
        %p674 = pneg %p101
        %p675 = pneg %p98
        %p676 = pneg %p122
        %p677 = pneg %p119
        %p678 = pneg %p143
        %p679 = pneg %p140
        %p680 = pneg %p164
        %p681 = pneg %p161
        %p682 = pneg %p185
        %p683 = pneg %p182
        %p684 = pneg %p206
        %p685 = pneg %p203
        %p686 = pneg %p227
        %p687 = pneg %p224
        %p688 = pneg %p248
        %p689 = pneg %p245
        %p690 = pneg %p269
        %p691 = pneg %p266
        %p692 = pneg %p290
        %p693 = pneg %p287
        %p694 = pneg %p311
        %p695 = pneg %p308
        %p696 = pneg %p332
        %p697 = pneg %p329
        %p698 = pneg %p353
        %p699 = pneg %p350
        %p700 = pneg %p374
        %p701 = pneg %p371
        %p702 = pneg %p395
        %p703 = pneg %p392
        %p704 = pneg %p416
        %p705 = pneg %p413
        %p706 = pneg %p437
        %p707 = pneg %p434
        %p708 = pneg %p458
        %p709 = pneg %p455
        %p710 = pneg %p479
        %p711 = pneg %p476
        %p712 = pneg %p500
        %p713 = pneg %p497
        %p714 = pneg %p526
        %p715 = pneg %p523
        %s716 = sand.u32 %s513, 1
        %s717 = scalar_lea.sflag [#allocation4], %s716
        %s718 = sand.u32 %s513, 1
        %s719 = smul.addr %s718, 256
        %s720 = scalar_lea.vmem [#allocation8], %s719
        %p721 = scmp.lt.s32.totalorder %s38, 1
        %s722 = scalar_select %p721, %s38, 1
        %s723 = smul.addr %s722, 2
        %s724 = smul.addr %s723, 4
        %s725 = scalar_lea.vmem %s0, %s724
        %v726 = vld [vmem:[%s725] sm:$0xff]
        %v727 = vld [vmem:[%s1] sm:$0xff]
        %v728 = vld [vmem:[%s1 + $0x8] sm:$0xff]
        %v729 = vld [vmem:[%s1 + $0x10] sm:$0xff]
        %v730 = vld [vmem:[%s1 + $0x18] sm:$0xff]
        %v731 = vld [vmem:[%s1 + $0x20] sm:$0xff]
        %v732 = vld [vmem:[%s1 + $0x28] sm:$0xff]
        %v733 = vld [vmem:[%s1 + $0x30] sm:$0xff]
        %v734 = vld [vmem:[%s1 + $0x38] sm:$0xff]
        %v735 = vld [vmem:[%s1 + $0x40] sm:$0xff]
        %v736 = vld [vmem:[%s1 + $0x48] sm:$0xff]
        %v737 = vld [vmem:[%s1 + $0x50] sm:$0xff]
        %v738 = vld [vmem:[%s1 + $0x58] sm:$0xff]
        %v739 = vld [vmem:[%s1 + $0x60] sm:$0xff]
        %v740 = vld [vmem:[%s1 + $0x68] sm:$0xff]
        %v741 = vld [vmem:[%s1 + $0x70] sm:$0xff]
        %v742 = vld [vmem:[%s1 + $0x78] sm:$0xff]
        %v743 = vld [vmem:[%s1 + $0x80] sm:$0xff]
        %v744 = vld [vmem:[%s1 + $0x88] sm:$0xff]
        %v745 = vld [vmem:[%s1 + $0x90] sm:$0xff]
        %v746 = vld [vmem:[%s1 + $0x98] sm:$0xff]
        %v747 = vld [vmem:[%s1 + $0xa0] sm:$0xff]
        %v748 = vld [vmem:[%s1 + $0xa8] sm:$0xff]
        %v749 = vld [vmem:[%s1 + $0xb0] sm:$0xff]
        %v750 = vld [vmem:[%s1 + $0xb8] sm:$0xff]
        %v751 = vld [vmem:[%s1 + $0xc0] sm:$0xff]
        %v752 = vld [vmem:[%s1 + $0xc8] sm:$0xff]
        %v753 = vld [vmem:[%s1 + $0xd0] sm:$0xff]
        %v754 = vld [vmem:[%s1 + $0xd8] sm:$0xff]
        %v755 = vld [vmem:[%s1 + $0xe0] sm:$0xff]
        %v756 = vld [vmem:[%s1 + $0xe8] sm:$0xff]
        %v757 = vld [vmem:[%s1 + $0xf0] sm:$0xff]
        %v758 = vld [vmem:[%s1 + $0xf8] sm:$0xff]
        %v759 = vld [vmem:[%s1 + $0x100] sm:$0xff]
        %v760 = vld [vmem:[%s1 + $0x108] sm:$0xff]
        %v761 = vld [vmem:[%s1 + $0x110] sm:$0xff]
        %v762 = vld [vmem:[%s1 + $0x118] sm:$0xff]
        %v763 = vld [vmem:[%s1 + $0x120] sm:$0xff]
        %v764 = vld [vmem:[%s1 + $0x128] sm:$0xff]
        %v765 = vld [vmem:[%s1 + $0x130] sm:$0xff]
        %v766 = vld [vmem:[%s1 + $0x138] sm:$0xff]
        %v767 = vld [vmem:[%s1 + $0x140] sm:$0xff]
        %v768 = vld [vmem:[%s1 + $0x148] sm:$0xff]
        %v769 = vld [vmem:[%s1 + $0x150] sm:$0xff]
        %v770 = vld [vmem:[%s1 + $0x158] sm:$0xff]
        %v771 = vld [vmem:[%s1 + $0x160] sm:$0xff]
        %v772 = vld [vmem:[%s1 + $0x168] sm:$0xff]
        %v773 = vld [vmem:[%s1 + $0x170] sm:$0xff]
        %v774 = vld [vmem:[%s1 + $0x178] sm:$0xff]
        %v775 = vld [vmem:[%s1 + $0x180] sm:$0xff]
        %v776 = vld [vmem:[%s1 + $0x188] sm:$0xff]
        %v777 = vld [vmem:[%s1 + $0x190] sm:$0xff]
        %v778 = vld [vmem:[%s1 + $0x198] sm:$0xff]
        %v779 = vld [vmem:[%s1 + $0x1a0] sm:$0xff]
        %v780 = vld [vmem:[%s1 + $0x1a8] sm:$0xff]
        %v781 = vld [vmem:[%s1 + $0x1b0] sm:$0xff]
        %v782 = vld [vmem:[%s1 + $0x1b8] sm:$0xff]
        %v783 = vld [vmem:[%s1 + $0x1c0] sm:$0xff]
        %v784 = vld [vmem:[%s1 + $0x1c8] sm:$0xff]
        %v785 = vld [vmem:[%s1 + $0x1d0] sm:$0xff]
        %v786 = vld [vmem:[%s1 + $0x1d8] sm:$0xff]
        %v787 = vld [vmem:[%s1 + $0x1e0] sm:$0xff]
        %v788 = vld [vmem:[%s1 + $0x1e8] sm:$0xff]
        %v789 = vld [vmem:[%s1 + $0x1f0] sm:$0xff]
        %v790 = vld [vmem:[%s1 + $0x1f8] sm:$0xff]
        %v791 = vld [vmem:[%s2] sm:$0x3]
        %v793 = vlaneseq
        %v794 = vshrl.u32 %v793, 7
        %v795 = vsub.s32 0, %v794
        %v796 = vrot.slane %v791, %v795
        %v797 = vlaneseq
        %v798 = vshrl.u32 %v797, 7
        %v799 = vsub.s32 1, %v798
        %v800 = vrot.slane %v791, %v799
        %v804 = vcombine.high %v726, %v726
        %806 = vmatprep.subr.mxu0 %v758
        %807 = vmatpush1.msra.mxu0 %v757
        %808 = vmatprep.subr.mxu0 %v756
        %809 = vmatpush1.msra.mxu0 %v755
        %810 = vmatprep.subr.mxu0 %v754
        %811 = vmatpush1.msra.mxu0 %v753
        %812 = vmatprep.subr.mxu0 %v752
        %813 = vmatpush1.msra.mxu0 %v751
        %814 = vmatprep.subr.mxu0 %v750
        %815 = vmatpush1.msra.mxu0 %v749
        %816 = vmatprep.subr.mxu0 %v748
        %817 = vmatpush1.msra.mxu0 %v747
        %818 = vmatprep.subr.mxu0 %v746
        %819 = vmatpush1.msra.mxu0 %v745
        %820 = vmatprep.subr.mxu0 %v744
        %821 = vmatpush1.msra.mxu0 %v743
        %822 = vmatprep.subr.mxu0 %v742
        %823 = vmatpush1.msra.mxu0 %v741
        %824 = vmatprep.subr.mxu0 %v740
        %825 = vmatpush1.msra.mxu0 %v739
        %826 = vmatprep.subr.mxu0 %v738
        %827 = vmatpush1.msra.mxu0 %v737
        %828 = vmatprep.subr.mxu0 %v736
        %829 = vmatpush1.msra.mxu0 %v735
        %830 = vmatprep.subr.mxu0 %v734
        %831 = vmatpush1.msra.mxu0 %v733
        %832 = vmatprep.subr.mxu0 %v732
        %833 = vmatpush1.msra.mxu0 %v731
        %834 = vmatprep.subr.mxu0 %v730
        %835 = vmatpush1.msra.mxu0 %v729
        %836 = vmatprep.subr.mxu0 %v728
        %837 = vmatpush1.msra.mxu0 %v727
        %838 = vmatprep.subr.mxu0 %v790
        %839 = vmatpush2.msra.mxu0 %v789
        %840 = vmatprep.subr.mxu0 %v788
        %841 = vmatpush2.msra.mxu0 %v787
        %842 = vmatprep.subr.mxu0 %v786
        %843 = vmatpush2.msra.mxu0 %v785
        %844 = vmatprep.subr.mxu0 %v784
        %845 = vmatpush2.msra.mxu0 %v783
        %846 = vmatprep.subr.mxu0 %v782
        %847 = vmatpush2.msra.mxu0 %v781
        %848 = vmatprep.subr.mxu0 %v780
        %849 = vmatpush2.msra.mxu0 %v779
        %850 = vmatprep.subr.mxu0 %v778
        %851 = vmatpush2.msra.mxu0 %v777
        %852 = vmatprep.subr.mxu0 %v776
        %853 = vmatpush2.msra.mxu0 %v775
        %854 = vmatprep.subr.mxu0 %v774
        %855 = vmatpush2.msra.mxu0 %v773
        %856 = vmatprep.subr.mxu0 %v772
        %857 = vmatpush2.msra.mxu0 %v771
        %858 = vmatprep.subr.mxu0 %v770
        %859 = vmatpush2.msra.mxu0 %v769
        %860 = vmatprep.subr.mxu0 %v768
        %861 = vmatpush2.msra.mxu0 %v767
        %862 = vmatprep.subr.mxu0 %v766
        %863 = vmatpush2.msra.mxu0 %v765
        %864 = vmatprep.subr.mxu0 %v764
        %865 = vmatpush2.msra.mxu0 %v763
        %866 = vmatprep.subr.mxu0 %v762
        %867 = vmatpush2.msra.mxu0 %v761
        %868 = vmatprep.subr.mxu0 %v760
        %869 = vmatpush2.msra.mxu0 %v759
        %870 = vmatprep.mubr.f32.mxu0 %v804
        %871 = vmatmul.mubr.f32.gmra.mxu0 %v726
        %v872 = vpop.f32.mrf.mxu0
        %v873 = vadd.f32 %v796, %v872
        %v874 = vpop.f32.mrf.mxu0
        %v875 = vadd.f32 %v800, %v874
        %876 = vdwg.mxu0
        %v877 = vld [vmem:[%s3] sm:$0xff]
        %vm878 = vcmask 31744
        %v880 = vsel %vm878, %v877, 0
        %vm882 = vcmask 1043456
        %v884 = vsel %vm882, %v873, 0
        %v887 = vsel %vm882, %v875, 0
        %889 = vmatprep.subr.mxu0 0.0
        %890 = vmatpush1.msra.mxu0 0.0
        %891 = vmatprep.subr.mxu0 0.0
        %892 = vmatpush1.msra.mxu0 0.0
        %893 = vmatprep.subr.mxu0 0.0
        %894 = vmatpush1.msra.mxu0 0.0
        %895 = vmatprep.subr.mxu0 0.0
        %896 = vmatpush1.msra.mxu0 0.0
        %897 = vmatprep.subr.mxu0 0.0
        %898 = vmatpush1.msra.mxu0 0.0
        %899 = vmatprep.subr.mxu0 0.0
        %900 = vmatpush1.msra.mxu0 0.0
        %901 = vmatprep.subr.mxu0 0.0
        %902 = vmatpush1.msra.mxu0 0.0
        %903 = vmatprep.subr.mxu0 0.0
        %904 = vmatpush1.msra.mxu0 0.0
        %905 = vmatprep.subr.mxu0 0.0
        %906 = vmatpush1.msra.mxu0 0.0
        %907 = vmatprep.subr.mxu0 0.0
        %908 = vmatpush1.msra.mxu0 0.0
        %909 = vmatprep.subr.mxu0 0.0
        %910 = vmatpush1.msra.mxu0 0.0
        %911 = vmatprep.subr.mxu0 0.0
        %912 = vmatpush1.msra.mxu0 0.0
        %913 = vmatprep.subr.mxu0 0.0
        %914 = vmatpush1.msra.mxu0 0.0
        %915 = vmatprep.subr.mxu0 0.0
        %916 = vmatpush1.msra.mxu0 0.0
        %917 = vmatprep.subr.mxu0 0.0
        %918 = vmatpush1.msra.mxu0 0.0
        %919 = vmatprep.subr.mxu0 %v887
        %920 = vmatpush1.msra.mxu0 %v884
        %921 = vmatprep.subr.mxu0 0.0
        %922 = vmatpush2.msra.mxu0 0.0
        %923 = vmatprep.subr.mxu0 0.0
        %924 = vmatpush2.msra.mxu0 0.0
        %925 = vmatprep.subr.mxu0 0.0
        %926 = vmatpush2.msra.mxu0 0.0
        %927 = vmatprep.subr.mxu0 0.0
        %928 = vmatpush2.msra.mxu0 0.0
        %929 = vmatprep.subr.mxu0 0.0
        %930 = vmatpush2.msra.mxu0 0.0
        %931 = vmatprep.subr.mxu0 0.0
        %932 = vmatpush2.msra.mxu0 0.0
        %933 = vmatprep.subr.mxu0 0.0
        %934 = vmatpush2.msra.mxu0 0.0
        %935 = vmatprep.subr.mxu0 0.0
        %936 = vmatpush2.msra.mxu0 0.0
        %937 = vmatprep.subr.mxu0 0.0
        %938 = vmatpush2.msra.mxu0 0.0
        %939 = vmatprep.subr.mxu0 0.0
        %940 = vmatpush2.msra.mxu0 0.0
        %941 = vmatprep.subr.mxu0 0.0
        %942 = vmatpush2.msra.mxu0 0.0
        %943 = vmatprep.subr.mxu0 0.0
        %944 = vmatpush2.msra.mxu0 0.0
        %945 = vmatprep.subr.mxu0 0.0
        %946 = vmatpush2.msra.mxu0 0.0
        %947 = vmatprep.subr.mxu0 0.0
        %948 = vmatpush2.msra.mxu0 0.0
        %949 = vmatprep.subr.mxu0 0.0
        %950 = vmatpush2.msra.mxu0 0.0
        %951 = vmatprep.subr.mxu0 0.0
        %952 = vmatpush2.msra.mxu0 0.0
        %953 = vmatprep.mubr.f32.mxu0 0.0
        %954 = vmatmul.mubr.f32.gmra.mxu0 %v880
        %v955 = vpop.f32.mrf.mxu0
        %v956 = vadd.f32 0.0, %v955
        %v957 = vpop.f32.mrf.mxu0
        %v958 = vadd.f32 0.0, %v957
        %959 = vdwg.mxu0
        %v960 = vld [vmem:[#allocation2] sm:$0xff]
        %v961 = vld [vmem:[#allocation2 + $0x8] sm:$0xff]
        %v962 = vld [vmem:[#allocation2 + $0x10] sm:$0xff]
        %v963 = vld [vmem:[#allocation2 + $0x18] sm:$0xff]
        %v964 = vld [vmem:[#allocation2 + $0x20] sm:$0xff]
        %v965 = vld [vmem:[#allocation2 + $0x28] sm:$0xff]
        %v966 = vld [vmem:[#allocation2 + $0x30] sm:$0xff]
        %v967 = vld [vmem:[#allocation2 + $0x38] sm:$0xff]
        %v968 = vld [vmem:[#allocation2 + $0x40] sm:$0xff]
        %v969 = vld [vmem:[#allocation2 + $0x48] sm:$0xff]
        %v970 = vld [vmem:[#allocation2 + $0x50] sm:$0xff]
        %v971 = vld [vmem:[#allocation2 + $0x58] sm:$0xff]
        %v972 = vld [vmem:[#allocation2 + $0x60] sm:$0xff]
        %v973 = vld [vmem:[#allocation2 + $0x68] sm:$0xff]
        %v974 = vld [vmem:[#allocation2 + $0x70] sm:$0xff]
        %v975 = vld [vmem:[#allocation2 + $0x78] sm:$0xff]
        %v976 = vld [vmem:[#allocation2 + $0x80] sm:$0xff]
        %v977 = vld [vmem:[#allocation2 + $0x88] sm:$0xff]
        %v978 = vld [vmem:[#allocation2 + $0x90] sm:$0xff]
        %v979 = vld [vmem:[#allocation2 + $0x98] sm:$0xff]
        %v980 = vld [vmem:[#allocation2 + $0xa0] sm:$0xff]
        %v981 = vld [vmem:[#allocation2 + $0xa8] sm:$0xff]
        %v982 = vld [vmem:[#allocation2 + $0xb0] sm:$0xff]
        %v983 = vld [vmem:[#allocation2 + $0xb8] sm:$0xff]
        %v984 = vld [vmem:[#allocation2 + $0xc0] sm:$0xff]
        %v985 = vld [vmem:[#allocation2 + $0xc8] sm:$0xff]
        %v986 = vld [vmem:[#allocation2 + $0xd0] sm:$0xff]
        %v987 = vld [vmem:[#allocation2 + $0xd8] sm:$0xff]
        %v988 = vld [vmem:[#allocation2 + $0xe0] sm:$0xff]
        %v989 = vld [vmem:[#allocation2 + $0xe8] sm:$0xff]
        %v990 = vld [vmem:[#allocation2 + $0xf0] sm:$0xff]
        %v991 = vld [vmem:[#allocation2 + $0xf8] sm:$0xff]
        %v992 = vld [vmem:[#allocation2 + $0x100] sm:$0xff]
        %v993 = vld [vmem:[#allocation2 + $0x108] sm:$0xff]
        %v994 = vld [vmem:[#allocation2 + $0x110] sm:$0xff]
        %v995 = vld [vmem:[#allocation2 + $0x118] sm:$0xff]
        %v996 = vld [vmem:[#allocation2 + $0x120] sm:$0xff]
        %v997 = vld [vmem:[#allocation2 + $0x128] sm:$0xff]
        %v998 = vld [vmem:[#allocation2 + $0x130] sm:$0xff]
        %v999 = vld [vmem:[#allocation2 + $0x138] sm:$0xff]
        %v1000 = vld [vmem:[#allocation2 + $0x140] sm:$0xff]
        %v1001 = vld [vmem:[#allocation2 + $0x148] sm:$0xff]
        %v1002 = vld [vmem:[#allocation2 + $0x150] sm:$0xff]
        %v1003 = vld [vmem:[#allocation2 + $0x158] sm:$0xff]
        %v1004 = vld [vmem:[#allocation2 + $0x160] sm:$0xff]
        %v1005 = vld [vmem:[#allocation2 + $0x168] sm:$0xff]
        %v1006 = vld [vmem:[#allocation2 + $0x170] sm:$0xff]
        %v1007 = vld [vmem:[#allocation2 + $0x178] sm:$0xff]
        %v1008 = vld [vmem:[#allocation2 + $0x180] sm:$0xff]
        %v1009 = vld [vmem:[#allocation2 + $0x188] sm:$0xff]
        %v1010 = vld [vmem:[#allocation2 + $0x190] sm:$0xff]
        %v1011 = vld [vmem:[#allocation2 + $0x198] sm:$0xff]
        %v1012 = vld [vmem:[#allocation2 + $0x1a0] sm:$0xff]
        %v1013 = vld [vmem:[#allocation2 + $0x1a8] sm:$0xff]
        %v1014 = vld [vmem:[#allocation2 + $0x1b0] sm:$0xff]
        %v1015 = vld [vmem:[#allocation2 + $0x1b8] sm:$0xff]
        %v1016 = vld [vmem:[#allocation2 + $0x1c0] sm:$0xff]
        %v1017 = vld [vmem:[#allocation2 + $0x1c8] sm:$0xff]
        %v1018 = vld [vmem:[#allocation2 + $0x1d0] sm:$0xff]
        %v1019 = vld [vmem:[#allocation2 + $0x1d8] sm:$0xff]
        %v1020 = vld [vmem:[#allocation2 + $0x1e0] sm:$0xff]
        %v1021 = vld [vmem:[#allocation2 + $0x1e8] sm:$0xff]
        %v1022 = vld [vmem:[#allocation2 + $0x1f0] sm:$0xff]
        %v1023 = vld [vmem:[#allocation2 + $0x1f8] sm:$0xff]
        %v1024 = vld [vmem:[#allocation2 + $0x200] sm:$0xff]
        %v1025 = vld [vmem:[#allocation2 + $0x208] sm:$0xff]
        %v1026 = vld [vmem:[#allocation2 + $0x210] sm:$0xff]
        %v1027 = vld [vmem:[#allocation2 + $0x218] sm:$0xff]
        %v1028 = vld [vmem:[#allocation2 + $0x220] sm:$0xff]
        %v1029 = vld [vmem:[#allocation2 + $0x228] sm:$0xff]
        %v1030 = vld [vmem:[#allocation2 + $0x230] sm:$0xff]
        %v1031 = vld [vmem:[#allocation2 + $0x238] sm:$0xff]
        %vm1032 = vcmask 523264
        %v1034 = vsel %vm1032, %v958, 0
        %1036 = vmatprep.subr.mxu0 %v1006
        %1037 = vmatpush1.msra.mxu0 %v1005
        %1038 = vmatprep.subr.mxu0 %v1003
        %1039 = vmatpush1.msra.mxu0 %v1002
        %1040 = vmatprep.subr.mxu0 %v1000
        %1041 = vmatpush1.msra.mxu0 %v999
        %1042 = vmatprep.subr.mxu0 %v997
        %1043 = vmatpush1.msra.mxu0 %v996
        %1044 = vmatprep.subr.mxu0 %v994
        %1045 = vmatpush1.msra.mxu0 %v993
        %1046 = vmatprep.subr.mxu0 %v991
        %1047 = vmatpush1.msra.mxu0 %v990
        %1048 = vmatprep.subr.mxu0 %v988
        %1049 = vmatpush1.msra.mxu0 %v987
        %1050 = vmatprep.subr.mxu0 %v985
        %1051 = vmatpush1.msra.mxu0 %v984
        %1052 = vmatprep.subr.mxu0 %v982
        %1053 = vmatpush1.msra.mxu0 %v981
        %1054 = vmatprep.subr.mxu0 %v979
        %1055 = vmatpush1.msra.mxu0 %v978
        %1056 = vmatprep.subr.mxu0 %v976
        %1057 = vmatpush1.msra.mxu0 %v975
        %1058 = vmatprep.subr.mxu0 %v973
        %1059 = vmatpush1.msra.mxu0 %v972
        %1060 = vmatprep.subr.mxu0 %v970
        %1061 = vmatpush1.msra.mxu0 %v969
        %1062 = vmatprep.subr.mxu0 %v967
        %1063 = vmatpush1.msra.mxu0 %v966
        %1064 = vmatprep.subr.mxu0 %v964
        %1065 = vmatpush1.msra.mxu0 %v963
        %1066 = vmatprep.subr.mxu0 %v961
        %1067 = vmatpush1.msra.mxu0 %v960
        %1068 = vmatprep.subr.mxu0 0.0
        %1069 = vmatpush2.msra.mxu0 0.0
        %1070 = vmatprep.subr.mxu0 0.0
        %1071 = vmatpush2.msra.mxu0 0.0
        %1072 = vmatprep.subr.mxu0 0.0
        %1073 = vmatpush2.msra.mxu0 0.0
        %1074 = vmatprep.subr.mxu0 0.0
        %1075 = vmatpush2.msra.mxu0 0.0
        %1076 = vmatprep.subr.mxu0 0.0
        %1077 = vmatpush2.msra.mxu0 0.0
        %1078 = vmatprep.subr.mxu0 0.0
        %1079 = vmatpush2.msra.mxu0 0.0
        %1080 = vmatprep.subr.mxu0 0.0
        %1081 = vmatpush2.msra.mxu0 0.0
        %1082 = vmatprep.subr.mxu0 0.0
        %1083 = vmatpush2.msra.mxu0 0.0
        %1084 = vmatprep.subr.mxu0 %v1030
        %1085 = vmatpush2.msra.mxu0 %v1029
        %1086 = vmatprep.subr.mxu0 %v1027
        %1087 = vmatpush2.msra.mxu0 %v1026
        %1088 = vmatprep.subr.mxu0 %v1024
        %1089 = vmatpush2.msra.mxu0 %v1023
        %1090 = vmatprep.subr.mxu0 %v1021
        %1091 = vmatpush2.msra.mxu0 %v1020
        %1092 = vmatprep.subr.mxu0 %v1018
        %1093 = vmatpush2.msra.mxu0 %v1017
        %1094 = vmatprep.subr.mxu0 %v1015
        %1095 = vmatpush2.msra.mxu0 %v1014
        %1096 = vmatprep.subr.mxu0 %v1012
        %1097 = vmatpush2.msra.mxu0 %v1011
        %1098 = vmatprep.subr.mxu0 %v1009
        %1099 = vmatpush2.msra.mxu0 %v1008
        %1100 = vmatprep.mubr.f32.mxu0 %v1034
        %1101 = vmatmul.mubr.f32.gmra.mxu0 %v956
        %v1102 = vpop.f32.mrf.mxu0
        %v1103 = vadd.f32 0.0, %v1102
        %v1104 = vpop.f32.mrf.mxu0
        %v1105 = vadd.f32 0.0, %v1104
        %1106 = vdwg.mxu0
        %1107 = vmatprep.subr.mxu0 0.0
        %1108 = vmatpush1.msra.mxu0 %v1007
        %1109 = vmatprep.subr.mxu0 0.0
        %1110 = vmatpush1.msra.mxu0 %v1004
        %1111 = vmatprep.subr.mxu0 0.0
        %1112 = vmatpush1.msra.mxu0 %v1001
        %1113 = vmatprep.subr.mxu0 0.0
        %1114 = vmatpush1.msra.mxu0 %v998
        %1115 = vmatprep.subr.mxu0 0.0
        %1116 = vmatpush1.msra.mxu0 %v995
        %1117 = vmatprep.subr.mxu0 0.0
        %1118 = vmatpush1.msra.mxu0 %v992
        %1119 = vmatprep.subr.mxu0 0.0
        %1120 = vmatpush1.msra.mxu0 %v989
        %1121 = vmatprep.subr.mxu0 0.0
        %1122 = vmatpush1.msra.mxu0 %v986
        %1123 = vmatprep.subr.mxu0 0.0
        %1124 = vmatpush1.msra.mxu0 %v983
        %1125 = vmatprep.subr.mxu0 0.0
        %1126 = vmatpush1.msra.mxu0 %v980
        %1127 = vmatprep.subr.mxu0 0.0
        %1128 = vmatpush1.msra.mxu0 %v977
        %1129 = vmatprep.subr.mxu0 0.0
        %1130 = vmatpush1.msra.mxu0 %v974
        %1131 = vmatprep.subr.mxu0 0.0
        %1132 = vmatpush1.msra.mxu0 %v971
        %1133 = vmatprep.subr.mxu0 0.0
        %1134 = vmatpush1.msra.mxu0 %v968
        %1135 = vmatprep.subr.mxu0 0.0
        %1136 = vmatpush1.msra.mxu0 %v965
        %1137 = vmatprep.subr.mxu0 0.0
        %1138 = vmatpush1.msra.mxu0 %v962
        %1139 = vmatprep.subr.mxu0 0.0
        %1140 = vmatpush2.msra.mxu0 0.0
        %1141 = vmatprep.subr.mxu0 0.0
        %1142 = vmatpush2.msra.mxu0 0.0
        %1143 = vmatprep.subr.mxu0 0.0
        %1144 = vmatpush2.msra.mxu0 0.0
        %1145 = vmatprep.subr.mxu0 0.0
        %1146 = vmatpush2.msra.mxu0 0.0
        %1147 = vmatprep.subr.mxu0 0.0
        %1148 = vmatpush2.msra.mxu0 0.0
        %1149 = vmatprep.subr.mxu0 0.0
        %1150 = vmatpush2.msra.mxu0 0.0
        %1151 = vmatprep.subr.mxu0 0.0
        %1152 = vmatpush2.msra.mxu0 0.0
        %1153 = vmatprep.subr.mxu0 0.0
        %1154 = vmatpush2.msra.mxu0 0.0
        %1155 = vmatprep.subr.mxu0 0.0
        %1156 = vmatpush2.msra.mxu0 %v1031
        %1157 = vmatprep.subr.mxu0 0.0
        %1158 = vmatpush2.msra.mxu0 %v1028
        %1159 = vmatprep.subr.mxu0 0.0
        %1160 = vmatpush2.msra.mxu0 %v1025
        %1161 = vmatprep.subr.mxu0 0.0
        %1162 = vmatpush2.msra.mxu0 %v1022
        %1163 = vmatprep.subr.mxu0 0.0
        %1164 = vmatpush2.msra.mxu0 %v1019
        %1165 = vmatprep.subr.mxu0 0.0
        %1166 = vmatpush2.msra.mxu0 %v1016
        %1167 = vmatprep.subr.mxu0 0.0
        %1168 = vmatpush2.msra.mxu0 %v1013
        %1169 = vmatprep.subr.mxu0 0.0
        %1170 = vmatpush2.msra.mxu0 %v1010
        %1171 = vmatprep.mubr.f32.mxu0 %v1034
        %1172 = vmatmul.mubr.f32.gmra.mxu0 %v956
        %v1173 = vpop.f32.mrf.mxu0
        %v1174 = vadd.f32 0.0, %v1173
        %v1175 = vpop.f32.mrf.mxu0
        %1176 = vdwg.mxu0
        %v1177 = vld [vmem:[#allocation5] sm:$0xff]
        %v1178 = vld [vmem:[#allocation5 + $0x8] sm:$0xff]
        %v1179 = vld [vmem:[#allocation5 + $0x10] sm:$0xff]
        %v1180 = vld [vmem:[#allocation5 + $0x18] sm:$0xff]
        %v1181 = vld [vmem:[#allocation5 + $0x20] sm:$0xff]
        %v1182 = vld [vmem:[#allocation5 + $0x28] sm:$0xff]
        %v1183 = vld [vmem:[#allocation5 + $0x30] sm:$0xff]
        %v1184 = vld [vmem:[#allocation5 + $0x38] sm:$0xff]
        %v1185 = vld [vmem:[#allocation5 + $0x40] sm:$0xff]
        %v1186 = vld [vmem:[#allocation5 + $0x48] sm:$0xff]
        %v1187 = vld [vmem:[#allocation5 + $0x50] sm:$0xff]
        %v1188 = vld [vmem:[#allocation5 + $0x58] sm:$0xff]
        %v1189 = vld [vmem:[#allocation5 + $0x60] sm:$0xff]
        %v1190 = vld [vmem:[#allocation5 + $0x68] sm:$0xff]
        %v1191 = vld [vmem:[#allocation5 + $0x70] sm:$0xff]
        %v1192 = vld [vmem:[#allocation5 + $0x78] sm:$0xff]
        %v1193 = vld [vmem:[#allocation5 + $0x80] sm:$0xff]
        %v1194 = vld [vmem:[#allocation5 + $0x88] sm:$0xff]
        %v1195 = vld [vmem:[#allocation5 + $0x90] sm:$0xff]
        %v1196 = vld [vmem:[#allocation5 + $0x98] sm:$0xff]
        %v1197 = vld [vmem:[#allocation5 + $0xa0] sm:$0xff]
        %v1198 = vld [vmem:[#allocation5 + $0xa8] sm:$0xff]
        %v1199 = vld [vmem:[#allocation5 + $0xb0] sm:$0xff]
        %v1200 = vld [vmem:[#allocation5 + $0xb8] sm:$0xff]
        %v1201 = vld [vmem:[#allocation5 + $0xc0] sm:$0xff]
        %v1202 = vld [vmem:[#allocation5 + $0xc8] sm:$0xff]
        %v1203 = vld [vmem:[#allocation5 + $0xd0] sm:$0xff]
        %v1204 = vld [vmem:[#allocation5 + $0xd8] sm:$0xff]
        %v1205 = vld [vmem:[#allocation5 + $0xe0] sm:$0xff]
        %v1206 = vld [vmem:[#allocation5 + $0xe8] sm:$0xff]
        %v1207 = vld [vmem:[#allocation5 + $0xf0] sm:$0xff]
        %v1208 = vld [vmem:[#allocation5 + $0xf8] sm:$0xff]
        %v1209 = vld [vmem:[#allocation5 + $0x100] sm:$0xff]
        %v1210 = vld [vmem:[#allocation5 + $0x108] sm:$0xff]
        %v1211 = vld [vmem:[#allocation5 + $0x110] sm:$0xff]
        %v1212 = vld [vmem:[#allocation5 + $0x118] sm:$0xff]
        %v1213 = vld [vmem:[#allocation5 + $0x120] sm:$0xff]
        %v1214 = vld [vmem:[#allocation5 + $0x128] sm:$0xff]
        %v1215 = vld [vmem:[#allocation5 + $0x130] sm:$0xff]
        %v1216 = vld [vmem:[#allocation5 + $0x138] sm:$0xff]
        %v1217 = vld [vmem:[#allocation5 + $0x140] sm:$0xff]
        %v1218 = vld [vmem:[#allocation5 + $0x148] sm:$0xff]
        %v1219 = vld [vmem:[#allocation5 + $0x150] sm:$0xff]
        %v1220 = vld [vmem:[#allocation5 + $0x158] sm:$0xff]
        %v1221 = vld [vmem:[#allocation5 + $0x160] sm:$0xff]
        %v1222 = vld [vmem:[#allocation5 + $0x168] sm:$0xff]
        %v1223 = vld [vmem:[#allocation5 + $0x170] sm:$0xff]
        %v1224 = vld [vmem:[#allocation5 + $0x178] sm:$0xff]
        %v1225 = vld [vmem:[#allocation5 + $0x180] sm:$0xff]
        %v1226 = vld [vmem:[#allocation5 + $0x188] sm:$0xff]
        %v1227 = vld [vmem:[#allocation5 + $0x190] sm:$0xff]
        %v1228 = vld [vmem:[#allocation5 + $0x198] sm:$0xff]
        %v1229 = vld [vmem:[#allocation5 + $0x1a0] sm:$0xff]
        %v1230 = vld [vmem:[#allocation5 + $0x1a8] sm:$0xff]
        %v1231 = vld [vmem:[#allocation5 + $0x1b0] sm:$0xff]
        %v1232 = vld [vmem:[#allocation5 + $0x1b8] sm:$0xff]
        %v1233 = vld [vmem:[#allocation5 + $0x1c0] sm:$0xff]
        %v1234 = vld [vmem:[#allocation5 + $0x1c8] sm:$0xff]
        %v1235 = vld [vmem:[#allocation5 + $0x1d0] sm:$0xff]
        %v1236 = vld [vmem:[#allocation5 + $0x1d8] sm:$0xff]
        %v1237 = vld [vmem:[#allocation5 + $0x1e0] sm:$0xff]
        %v1238 = vld [vmem:[#allocation5 + $0x1e8] sm:$0xff]
        %v1239 = vld [vmem:[#allocation5 + $0x1f0] sm:$0xff]
        %v1240 = vld [vmem:[#allocation5 + $0x1f8] sm:$0xff]
        %v1241 = vld [vmem:[#allocation5 + $0x200] sm:$0xff]
        %v1242 = vld [vmem:[#allocation5 + $0x208] sm:$0xff]
        %v1243 = vld [vmem:[#allocation5 + $0x210] sm:$0xff]
        %v1244 = vld [vmem:[#allocation5 + $0x218] sm:$0xff]
        %v1245 = vld [vmem:[#allocation5 + $0x220] sm:$0xff]
        %v1246 = vld [vmem:[#allocation5 + $0x228] sm:$0xff]
        %v1247 = vld [vmem:[#allocation5 + $0x230] sm:$0xff]
        %v1248 = vld [vmem:[#allocation5 + $0x238] sm:$0xff]
        %v1249 = vld [vmem:[#allocation5 + $0x240] sm:$0xff]
        %v1250 = vld [vmem:[#allocation5 + $0x248] sm:$0xff]
        %v1251 = vld [vmem:[#allocation5 + $0x250] sm:$0xff]
        %v1252 = vld [vmem:[#allocation5 + $0x258] sm:$0xff]
        %v1253 = vld [vmem:[#allocation5 + $0x260] sm:$0xff]
        %v1254 = vld [vmem:[#allocation5 + $0x268] sm:$0xff]
        %v1255 = vld [vmem:[#allocation5 + $0x270] sm:$0xff]
        %v1256 = vld [vmem:[#allocation5 + $0x278] sm:$0xff]
        %v1257 = vld [vmem:[#allocation5 + $0x280] sm:$0xff]
        %v1258 = vld [vmem:[#allocation5 + $0x288] sm:$0xff]
        %v1259 = vld [vmem:[#allocation5 + $0x290] sm:$0xff]
        %v1260 = vld [vmem:[#allocation5 + $0x298] sm:$0xff]
        %v1261 = vld [vmem:[#allocation5 + $0x2a0] sm:$0xff]
        %v1262 = vld [vmem:[#allocation5 + $0x2a8] sm:$0xff]
        %v1263 = vld [vmem:[#allocation5 + $0x2b0] sm:$0xff]
        %v1264 = vld [vmem:[#allocation5 + $0x2b8] sm:$0xff]
        %v1265 = vld [vmem:[#allocation5 + $0x2c0] sm:$0xff]
        %v1266 = vld [vmem:[#allocation5 + $0x2c8] sm:$0xff]
        %v1267 = vld [vmem:[#allocation5 + $0x2d0] sm:$0xff]
        %v1268 = vld [vmem:[#allocation5 + $0x2d8] sm:$0xff]
        %v1269 = vld [vmem:[#allocation5 + $0x2e0] sm:$0xff]
        %v1270 = vld [vmem:[#allocation5 + $0x2e8] sm:$0xff]
        %v1271 = vld [vmem:[#allocation5 + $0x2f0] sm:$0xff]
        %v1272 = vld [vmem:[#allocation5 + $0x2f8] sm:$0xff]
        %v1273 = vld [vmem:[%s6] sm:$0x3]
        %v1275 = vlaneseq
        %v1276 = vshrl.u32 %v1275, 7
        %v1277 = vsub.s32 0, %v1276
        %v1278 = vrot.slane %v1273, %v1277
        %v1279 = vlaneseq
        %v1280 = vshrl.u32 %v1279, 7
        %v1281 = vsub.s32 1, %v1280
        %v1282 = vrot.slane %v1273, %v1281
        %1285 = vmatprep.subr.mxu0 %v1208
        %1286 = vmatpush1.msra.mxu0 %v1207
        %1287 = vmatprep.subr.mxu0 %v1206
        %1288 = vmatpush1.msra.mxu0 %v1205
        %1289 = vmatprep.subr.mxu0 %v1204
        %1290 = vmatpush1.msra.mxu0 %v1203
        %1291 = vmatprep.subr.mxu0 %v1202
        %1292 = vmatpush1.msra.mxu0 %v1201
        %1293 = vmatprep.subr.mxu0 %v1200
        %1294 = vmatpush1.msra.mxu0 %v1199
        %1295 = vmatprep.subr.mxu0 %v1198
        %1296 = vmatpush1.msra.mxu0 %v1197
        %1297 = vmatprep.subr.mxu0 %v1196
        %1298 = vmatpush1.msra.mxu0 %v1195
        %1299 = vmatprep.subr.mxu0 %v1194
        %1300 = vmatpush1.msra.mxu0 %v1193
        %1301 = vmatprep.subr.mxu0 %v1192
        %1302 = vmatpush1.msra.mxu0 %v1191
        %1303 = vmatprep.subr.mxu0 %v1190
        %1304 = vmatpush1.msra.mxu0 %v1189
        %1305 = vmatprep.subr.mxu0 %v1188
        %1306 = vmatpush1.msra.mxu0 %v1187
        %1307 = vmatprep.subr.mxu0 %v1186
        %1308 = vmatpush1.msra.mxu0 %v1185
        %1309 = vmatprep.subr.mxu0 %v1184
        %1310 = vmatpush1.msra.mxu0 %v1183
        %1311 = vmatprep.subr.mxu0 %v1182
        %1312 = vmatpush1.msra.mxu0 %v1181
        %1313 = vmatprep.subr.mxu0 %v1180
        %1314 = vmatpush1.msra.mxu0 %v1179
        %1315 = vmatprep.subr.mxu0 %v1178
        %1316 = vmatpush1.msra.mxu0 %v1177
        %1317 = vmatprep.subr.mxu0 %v1240
        %1318 = vmatpush2.msra.mxu0 %v1239
        %1319 = vmatprep.subr.mxu0 %v1238
        %1320 = vmatpush2.msra.mxu0 %v1237
        %1321 = vmatprep.subr.mxu0 %v1236
        %1322 = vmatpush2.msra.mxu0 %v1235
        %1323 = vmatprep.subr.mxu0 %v1234
        %1324 = vmatpush2.msra.mxu0 %v1233
        %1325 = vmatprep.subr.mxu0 %v1232
        %1326 = vmatpush2.msra.mxu0 %v1231
        %1327 = vmatprep.subr.mxu0 %v1230
        %1328 = vmatpush2.msra.mxu0 %v1229
        %1329 = vmatprep.subr.mxu0 %v1228
        %1330 = vmatpush2.msra.mxu0 %v1227
        %1331 = vmatprep.subr.mxu0 %v1226
        %1332 = vmatpush2.msra.mxu0 %v1225
        %1333 = vmatprep.subr.mxu0 %v1224
        %1334 = vmatpush2.msra.mxu0 %v1223
        %1335 = vmatprep.subr.mxu0 %v1222
        %1336 = vmatpush2.msra.mxu0 %v1221
        %1337 = vmatprep.subr.mxu0 %v1220
        %1338 = vmatpush2.msra.mxu0 %v1219
        %1339 = vmatprep.subr.mxu0 %v1218
        %1340 = vmatpush2.msra.mxu0 %v1217
        %1341 = vmatprep.subr.mxu0 %v1216
        %1342 = vmatpush2.msra.mxu0 %v1215
        %1343 = vmatprep.subr.mxu0 %v1214
        %1344 = vmatpush2.msra.mxu0 %v1213
        %1345 = vmatprep.subr.mxu0 %v1212
        %1346 = vmatpush2.msra.mxu0 %v1211
        %1347 = vmatprep.subr.mxu0 %v1210
        %1348 = vmatpush2.msra.mxu0 %v1209
        %1349 = vmatprep.mubr.f32.mxu0 %v1105
        %1350 = vmatmul.mubr.f32.gmra.mxu0 %v1103
        %v1351 = vpop.f32.mrf.mxu0
        %v1352 = vadd.f32 %v1278, %v1351
        %v1353 = vpop.f32.mrf.mxu0
        %v1354 = vadd.f32 %v1282, %v1353
        %1355 = vdwg.mxu0
        %1356 = vmatprep.subr.mxu0 %v1272
        %1357 = vmatpush1.msra.mxu0 %v1271
        %1358 = vmatprep.subr.mxu0 %v1270
        %1359 = vmatpush1.msra.mxu0 %v1269
        %1360 = vmatprep.subr.mxu0 %v1268
        %1361 = vmatpush1.msra.mxu0 %v1267
        %1362 = vmatprep.subr.mxu0 %v1266
        %1363 = vmatpush1.msra.mxu0 %v1265
        %1364 = vmatprep.subr.mxu0 %v1264
        %1365 = vmatpush1.msra.mxu0 %v1263
        %1366 = vmatprep.subr.mxu0 %v1262
        %1367 = vmatpush1.msra.mxu0 %v1261
        %1368 = vmatprep.subr.mxu0 %v1260
        %1369 = vmatpush1.msra.mxu0 %v1259
        %1370 = vmatprep.subr.mxu0 %v1258
        %1371 = vmatpush1.msra.mxu0 %v1257
        %1372 = vmatprep.subr.mxu0 %v1256
        %1373 = vmatpush1.msra.mxu0 %v1255
        %1374 = vmatprep.subr.mxu0 %v1254
        %1375 = vmatpush1.msra.mxu0 %v1253
        %1376 = vmatprep.subr.mxu0 %v1252
        %1377 = vmatpush1.msra.mxu0 %v1251
        %1378 = vmatprep.subr.mxu0 %v1250
        %1379 = vmatpush1.msra.mxu0 %v1249
        %1380 = vmatprep.subr.mxu0 %v1248
        %1381 = vmatpush1.msra.mxu0 %v1247
        %1382 = vmatprep.subr.mxu0 %v1246
        %1383 = vmatpush1.msra.mxu0 %v1245
        %1384 = vmatprep.subr.mxu0 %v1244
        %1385 = vmatpush1.msra.mxu0 %v1243
        %1386 = vmatprep.subr.mxu0 %v1242
        %1387 = vmatpush1.msra.mxu0 %v1241
        %1388 = vmatprep.subr.mxu0 0.0
        %1389 = vmatpush2.msra.mxu0 0.0
        %1390 = vmatprep.subr.mxu0 0.0
        %1391 = vmatpush2.msra.mxu0 0.0
        %1392 = vmatprep.subr.mxu0 0.0
        %1393 = vmatpush2.msra.mxu0 0.0
        %1394 = vmatprep.subr.mxu0 0.0
        %1395 = vmatpush2.msra.mxu0 0.0
        %1396 = vmatprep.subr.mxu0 0.0
        %1397 = vmatpush2.msra.mxu0 0.0
        %1398 = vmatprep.subr.mxu0 0.0
        %1399 = vmatpush2.msra.mxu0 0.0
        %1400 = vmatprep.subr.mxu0 0.0
        %1401 = vmatpush2.msra.mxu0 0.0
        %1402 = vmatprep.subr.mxu0 0.0
        %1403 = vmatpush2.msra.mxu0 0.0
        %1404 = vmatprep.subr.mxu0 0.0
        %1405 = vmatpush2.msra.mxu0 0.0
        %1406 = vmatprep.subr.mxu0 0.0
        %1407 = vmatpush2.msra.mxu0 0.0
        %1408 = vmatprep.subr.mxu0 0.0
        %1409 = vmatpush2.msra.mxu0 0.0
        %1410 = vmatprep.subr.mxu0 0.0
        %1411 = vmatpush2.msra.mxu0 0.0
        %1412 = vmatprep.subr.mxu0 0.0
        %1413 = vmatpush2.msra.mxu0 0.0
        %1414 = vmatprep.subr.mxu0 0.0
        %1415 = vmatpush2.msra.mxu0 0.0
        %1416 = vmatprep.subr.mxu0 0.0
        %1417 = vmatpush2.msra.mxu0 0.0
        %1418 = vmatprep.subr.mxu0 0.0
        %1419 = vmatpush2.msra.mxu0 0.0
        %1420 = vmatprep.mubr.f32.mxu0 0.0
        %1421 = vmatmul.mubr.f32.gmra.mxu0 %v1174
        %v1422 = vpop.f32.mrf.mxu0
        %v1423 = vadd.f32 %v1352, %v1422
        %v1424 = vpop.f32.mrf.mxu0
        %v1425 = vadd.f32 %v1354, %v1424
        %1426 = vdwg.mxu0
        %v1427 = vld [vmem:[%s7] sm:$0xff]
        %v1428 = vld [vmem:[%s7 + $0x8] sm:$0xff]
        %vm1429 = vcmask 64512
        %v1431 = vsel %vm1429, %v1427, 0
        %v1434 = vsel %vm1429, %v1428, 0
        %1436 = vmatprep.subr.mxu0 0.0
        %1437 = vmatpush1.msra.mxu0 0.0
        %1438 = vmatprep.subr.mxu0 0.0
        %1439 = vmatpush1.msra.mxu0 0.0
        %1440 = vmatprep.subr.mxu0 0.0
        %1441 = vmatpush1.msra.mxu0 0.0
        %1442 = vmatprep.subr.mxu0 0.0
        %1443 = vmatpush1.msra.mxu0 0.0
        %1444 = vmatprep.subr.mxu0 0.0
        %1445 = vmatpush1.msra.mxu0 0.0
        %1446 = vmatprep.subr.mxu0 0.0
        %1447 = vmatpush1.msra.mxu0 0.0
        %1448 = vmatprep.subr.mxu0 0.0
        %1449 = vmatpush1.msra.mxu0 0.0
        %1450 = vmatprep.subr.mxu0 0.0
        %1451 = vmatpush1.msra.mxu0 0.0
        %1452 = vmatprep.subr.mxu0 0.0
        %1453 = vmatpush1.msra.mxu0 0.0
        %1454 = vmatprep.subr.mxu0 0.0
        %1455 = vmatpush1.msra.mxu0 0.0
        %1456 = vmatprep.subr.mxu0 0.0
        %1457 = vmatpush1.msra.mxu0 0.0
        %1458 = vmatprep.subr.mxu0 0.0
        %1459 = vmatpush1.msra.mxu0 0.0
        %1460 = vmatprep.subr.mxu0 0.0
        %1461 = vmatpush1.msra.mxu0 0.0
        %1462 = vmatprep.subr.mxu0 0.0
        %1463 = vmatpush1.msra.mxu0 0.0
        %1464 = vmatprep.subr.mxu0 0.0
        %1465 = vmatpush1.msra.mxu0 0.0
        %1466 = vmatprep.subr.mxu0 %v1425
        %1467 = vmatpush1.msra.mxu0 %v1423
        %1468 = vmatprep.subr.mxu0 0.0
        %1469 = vmatpush2.msra.mxu0 0.0
        %1470 = vmatprep.subr.mxu0 0.0
        %1471 = vmatpush2.msra.mxu0 0.0
        %1472 = vmatprep.subr.mxu0 0.0
        %1473 = vmatpush2.msra.mxu0 0.0
        %1474 = vmatprep.subr.mxu0 0.0
        %1475 = vmatpush2.msra.mxu0 0.0
        %1476 = vmatprep.subr.mxu0 0.0
        %1477 = vmatpush2.msra.mxu0 0.0
        %1478 = vmatprep.subr.mxu0 0.0
        %1479 = vmatpush2.msra.mxu0 0.0
        %1480 = vmatprep.subr.mxu0 0.0
        %1481 = vmatpush2.msra.mxu0 0.0
        %1482 = vmatprep.subr.mxu0 0.0
        %1483 = vmatpush2.msra.mxu0 0.0
        %1484 = vmatprep.subr.mxu0 0.0
        %1485 = vmatpush2.msra.mxu0 0.0
        %1486 = vmatprep.subr.mxu0 0.0
        %1487 = vmatpush2.msra.mxu0 0.0
        %1488 = vmatprep.subr.mxu0 0.0
        %1489 = vmatpush2.msra.mxu0 0.0
        %1490 = vmatprep.subr.mxu0 0.0
        %1491 = vmatpush2.msra.mxu0 0.0
        %1492 = vmatprep.subr.mxu0 0.0
        %1493 = vmatpush2.msra.mxu0 0.0
        %1494 = vmatprep.subr.mxu0 0.0
        %1495 = vmatpush2.msra.mxu0 0.0
        %1496 = vmatprep.subr.mxu0 0.0
        %1497 = vmatpush2.msra.mxu0 0.0
        %1498 = vmatprep.subr.mxu0 0.0
        %1499 = vmatpush2.msra.mxu0 0.0
        %1500 = vmatprep.mubr.f32.mxu0 0.0
        %1501 = vmatmul.mubr.f32.gmra.mxu0 %v1431
        %v1502 = vpop.f32.mrf.mxu0
        %v1503 = vadd.f32 0.0, %v1502
        %v1504 = vpop.f32.mrf.mxu0
        %v1505 = vadd.f32 0.0, %v1504
        %1506 = vmatprep.mubr.f32.mxu0 0.0
        %1507 = vmatmul.mubr.f32.gmra.mxu0 %v1434
        %v1508 = vpop.f32.mrf.mxu0
        %v1509 = vadd.f32 0.0, %v1508
        %v1510 = vpop.f32.mrf.mxu0
        %v1511 = vadd.f32 0.0, %v1510
        %1512 = vdwg.mxu0
        %v1513 = vld [vmem:[%s8] sm:$0xff]
        %v1514 = vld [vmem:[%s8 + $0x8] sm:$0xff]
        %v1515 = vld [vmem:[%s8 + $0x10] sm:$0xff]
        %v1516 = vld [vmem:[%s8 + $0x18] sm:$0xff]
        %v1517 = vld [vmem:[%s8 + $0x20] sm:$0xff]
        %v1518 = vld [vmem:[%s8 + $0x28] sm:$0xff]
        %v1519 = vld [vmem:[%s8 + $0x30] sm:$0xff]
        %v1520 = vld [vmem:[%s8 + $0x38] sm:$0xff]
        %v1521 = vld [vmem:[%s8 + $0x40] sm:$0xff]
        %v1522 = vld [vmem:[%s8 + $0x48] sm:$0xff]
        %v1523 = vld [vmem:[%s8 + $0x50] sm:$0xff]
        %v1524 = vld [vmem:[%s8 + $0x58] sm:$0xff]
        %v1525 = vld [vmem:[%s8 + $0x60] sm:$0xff]
        %v1526 = vld [vmem:[%s8 + $0x68] sm:$0xff]
        %v1527 = vld [vmem:[%s8 + $0x70] sm:$0xff]
        %v1528 = vld [vmem:[%s8 + $0x78] sm:$0xff]
        %v1529 = vld [vmem:[%s8 + $0x80] sm:$0xff]
        %v1530 = vld [vmem:[%s8 + $0x88] sm:$0xff]
        %v1531 = vld [vmem:[%s8 + $0x90] sm:$0xff]
        %v1532 = vld [vmem:[%s8 + $0x98] sm:$0xff]
        %v1533 = vld [vmem:[%s8 + $0xa0] sm:$0xff]
        %v1534 = vld [vmem:[%s8 + $0xa8] sm:$0xff]
        %v1535 = vld [vmem:[%s8 + $0xb0] sm:$0xff]
        %v1536 = vld [vmem:[%s8 + $0xb8] sm:$0xff]
        %v1537 = vld [vmem:[%s8 + $0xc0] sm:$0xff]
        %v1538 = vld [vmem:[%s8 + $0xc8] sm:$0xff]
        %v1539 = vld [vmem:[%s8 + $0xd0] sm:$0xff]
        %v1540 = vld [vmem:[%s8 + $0xd8] sm:$0xff]
        %v1541 = vld [vmem:[%s8 + $0xe0] sm:$0xff]
        %v1542 = vld [vmem:[%s8 + $0xe8] sm:$0xff]
        %v1543 = vld [vmem:[%s8 + $0xf0] sm:$0xff]
        %v1544 = vld [vmem:[%s8 + $0xf8] sm:$0xff]
        %v1545 = vld [vmem:[%s8 + $0x100] sm:$0xff]
        %v1546 = vld [vmem:[%s8 + $0x108] sm:$0xff]
        %v1547 = vld [vmem:[%s8 + $0x110] sm:$0xff]
        %v1548 = vld [vmem:[%s8 + $0x118] sm:$0xff]
        %v1549 = vld [vmem:[%s8 + $0x120] sm:$0xff]
        %v1550 = vld [vmem:[%s8 + $0x128] sm:$0xff]
        %v1551 = vld [vmem:[%s8 + $0x130] sm:$0xff]
        %v1552 = vld [vmem:[%s8 + $0x138] sm:$0xff]
        %v1553 = vld [vmem:[%s8 + $0x140] sm:$0xff]
        %v1554 = vld [vmem:[%s8 + $0x148] sm:$0xff]
        %v1555 = vld [vmem:[%s8 + $0x150] sm:$0xff]
        %v1556 = vld [vmem:[%s8 + $0x158] sm:$0xff]
        %v1557 = vld [vmem:[%s8 + $0x160] sm:$0xff]
        %v1558 = vld [vmem:[%s8 + $0x168] sm:$0xff]
        %v1559 = vld [vmem:[%s8 + $0x170] sm:$0xff]
        %v1560 = vld [vmem:[%s8 + $0x178] sm:$0xff]
        %v1561 = vld [vmem:[%s8 + $0x180] sm:$0xff]
        %v1562 = vld [vmem:[%s8 + $0x188] sm:$0xff]
        %v1563 = vld [vmem:[%s8 + $0x190] sm:$0xff]
        %v1564 = vld [vmem:[%s8 + $0x198] sm:$0xff]
        %v1565 = vld [vmem:[%s8 + $0x1a0] sm:$0xff]
        %v1566 = vld [vmem:[%s8 + $0x1a8] sm:$0xff]
        %v1567 = vld [vmem:[%s8 + $0x1b0] sm:$0xff]
        %v1568 = vld [vmem:[%s8 + $0x1b8] sm:$0xff]
        %v1569 = vld [vmem:[%s8 + $0x1c0] sm:$0xff]
        %v1570 = vld [vmem:[%s8 + $0x1c8] sm:$0xff]
        %v1571 = vld [vmem:[%s8 + $0x1d0] sm:$0xff]
        %v1572 = vld [vmem:[%s8 + $0x1d8] sm:$0xff]
        %v1573 = vld [vmem:[%s8 + $0x1e0] sm:$0xff]
        %v1574 = vld [vmem:[%s8 + $0x1e8] sm:$0xff]
        %v1575 = vld [vmem:[%s8 + $0x1f0] sm:$0xff]
        %v1576 = vld [vmem:[%s8 + $0x1f8] sm:$0xff]
        %v1577 = vld [vmem:[%s8 + $0x200] sm:$0xff]
        %v1578 = vld [vmem:[%s8 + $0x208] sm:$0xff]
        %v1579 = vld [vmem:[%s8 + $0x210] sm:$0xff]
        %v1580 = vld [vmem:[%s8 + $0x218] sm:$0xff]
        %v1581 = vld [vmem:[%s8 + $0x220] sm:$0xff]
        %v1582 = vld [vmem:[%s8 + $0x228] sm:$0xff]
        %v1583 = vld [vmem:[%s8 + $0x230] sm:$0xff]
        %v1584 = vld [vmem:[%s8 + $0x238] sm:$0xff]
        %v1585 = vld [vmem:[%s8 + $0x240] sm:$0xff]
        %v1586 = vld [vmem:[%s8 + $0x248] sm:$0xff]
        %v1587 = vld [vmem:[%s8 + $0x250] sm:$0xff]
        %v1588 = vld [vmem:[%s8 + $0x258] sm:$0xff]
        %v1589 = vld [vmem:[%s8 + $0x260] sm:$0xff]
        %v1590 = vld [vmem:[%s8 + $0x268] sm:$0xff]
        %v1591 = vld [vmem:[%s8 + $0x270] sm:$0xff]
        %v1592 = vld [vmem:[%s8 + $0x278] sm:$0xff]
        %v1593 = vld [vmem:[%s8 + $0x280] sm:$0xff]
        %v1594 = vld [vmem:[%s8 + $0x288] sm:$0xff]
        %v1595 = vld [vmem:[%s8 + $0x290] sm:$0xff]
        %v1596 = vld [vmem:[%s8 + $0x298] sm:$0xff]
        %v1597 = vld [vmem:[%s8 + $0x2a0] sm:$0xff]
        %v1598 = vld [vmem:[%s8 + $0x2a8] sm:$0xff]
        %v1599 = vld [vmem:[%s8 + $0x2b0] sm:$0xff]
        %v1600 = vld [vmem:[%s8 + $0x2b8] sm:$0xff]
        %v1601 = vld [vmem:[%s8 + $0x2c0] sm:$0xff]
        %v1602 = vld [vmem:[%s8 + $0x2c8] sm:$0xff]
        %v1603 = vld [vmem:[%s8 + $0x2d0] sm:$0xff]
        %v1604 = vld [vmem:[%s8 + $0x2d8] sm:$0xff]
        %v1605 = vld [vmem:[%s8 + $0x2e0] sm:$0xff]
        %v1606 = vld [vmem:[%s8 + $0x2e8] sm:$0xff]
        %v1607 = vld [vmem:[%s8 + $0x2f0] sm:$0xff]
        %v1608 = vld [vmem:[%s8 + $0x2f8] sm:$0xff]
        %v1609 = vld [vmem:[%s8 + $0x300] sm:$0xff]
        %v1610 = vld [vmem:[%s8 + $0x308] sm:$0xff]
        %v1611 = vld [vmem:[%s8 + $0x310] sm:$0xff]
        %v1612 = vld [vmem:[%s8 + $0x318] sm:$0xff]
        %v1613 = vld [vmem:[%s8 + $0x320] sm:$0xff]
        %v1614 = vld [vmem:[%s8 + $0x328] sm:$0xff]
        %v1615 = vld [vmem:[%s8 + $0x330] sm:$0xff]
        %v1616 = vld [vmem:[%s8 + $0x338] sm:$0xff]
        %v1617 = vld [vmem:[%s8 + $0x340] sm:$0xff]
        %v1618 = vld [vmem:[%s8 + $0x348] sm:$0xff]
        %v1619 = vld [vmem:[%s8 + $0x350] sm:$0xff]
        %v1620 = vld [vmem:[%s8 + $0x358] sm:$0xff]
        %v1621 = vld [vmem:[%s8 + $0x360] sm:$0xff]
        %v1622 = vld [vmem:[%s8 + $0x368] sm:$0xff]
        %v1623 = vld [vmem:[%s8 + $0x370] sm:$0xff]
        %v1624 = vld [vmem:[%s8 + $0x378] sm:$0xff]
        %v1625 = vld [vmem:[%s8 + $0x380] sm:$0xff]
        %v1626 = vld [vmem:[%s8 + $0x388] sm:$0xff]
        %v1627 = vld [vmem:[%s8 + $0x390] sm:$0xff]
        %v1628 = vld [vmem:[%s8 + $0x398] sm:$0xff]
        %v1629 = vld [vmem:[%s8 + $0x3a0] sm:$0xff]
        %v1630 = vld [vmem:[%s8 + $0x3a8] sm:$0xff]
        %v1631 = vld [vmem:[%s8 + $0x3b0] sm:$0xff]
        %v1632 = vld [vmem:[%s8 + $0x3b8] sm:$0xff]
        %v1633 = vld [vmem:[%s8 + $0x3c0] sm:$0xff]
        %v1634 = vld [vmem:[%s8 + $0x3c8] sm:$0xff]
        %v1635 = vld [vmem:[%s8 + $0x3d0] sm:$0xff]
        %v1636 = vld [vmem:[%s8 + $0x3d8] sm:$0xff]
        %v1637 = vld [vmem:[%s8 + $0x3e0] sm:$0xff]
        %v1638 = vld [vmem:[%s8 + $0x3e8] sm:$0xff]
        %v1639 = vld [vmem:[%s8 + $0x3f0] sm:$0xff]
        %v1640 = vld [vmem:[%s8 + $0x3f8] sm:$0xff]
        %1641 = vmatprep.subr.mxu0 %v1574
        %1642 = vmatpush1.msra.mxu0 %v1573
        %1643 = vmatprep.subr.mxu0 %v1570
        %1644 = vmatpush1.msra.mxu0 %v1569
        %1645 = vmatprep.subr.mxu0 %v1566
        %1646 = vmatpush1.msra.mxu0 %v1565
        %1647 = vmatprep.subr.mxu0 %v1562
        %1648 = vmatpush1.msra.mxu0 %v1561
        %1649 = vmatprep.subr.mxu0 %v1558
        %1650 = vmatpush1.msra.mxu0 %v1557
        %1651 = vmatprep.subr.mxu0 %v1554
        %1652 = vmatpush1.msra.mxu0 %v1553
        %1653 = vmatprep.subr.mxu0 %v1550
        %1654 = vmatpush1.msra.mxu0 %v1549
        %1655 = vmatprep.subr.mxu0 %v1546
        %1656 = vmatpush1.msra.mxu0 %v1545
        %1657 = vmatprep.subr.mxu0 %v1542
        %1658 = vmatpush1.msra.mxu0 %v1541
        %1659 = vmatprep.subr.mxu0 %v1538
        %1660 = vmatpush1.msra.mxu0 %v1537
        %1661 = vmatprep.subr.mxu0 %v1534
        %1662 = vmatpush1.msra.mxu0 %v1533
        %1663 = vmatprep.subr.mxu0 %v1530
        %1664 = vmatpush1.msra.mxu0 %v1529
        %1665 = vmatprep.subr.mxu0 %v1526
        %1666 = vmatpush1.msra.mxu0 %v1525
        %1667 = vmatprep.subr.mxu0 %v1522
        %1668 = vmatpush1.msra.mxu0 %v1521
        %1669 = vmatprep.subr.mxu0 %v1518
        %1670 = vmatpush1.msra.mxu0 %v1517
        %1671 = vmatprep.subr.mxu0 %v1514
        %1672 = vmatpush1.msra.mxu0 %v1513
        %1673 = vmatprep.subr.mxu0 %v1638
        %1674 = vmatpush2.msra.mxu0 %v1637
        %1675 = vmatprep.subr.mxu0 %v1634
        %1676 = vmatpush2.msra.mxu0 %v1633
        %1677 = vmatprep.subr.mxu0 %v1630
        %1678 = vmatpush2.msra.mxu0 %v1629
        %1679 = vmatprep.subr.mxu0 %v1626
        %1680 = vmatpush2.msra.mxu0 %v1625
        %1681 = vmatprep.subr.mxu0 %v1622
        %1682 = vmatpush2.msra.mxu0 %v1621
        %1683 = vmatprep.subr.mxu0 %v1618
        %1684 = vmatpush2.msra.mxu0 %v1617
        %1685 = vmatprep.subr.mxu0 %v1614
        %1686 = vmatpush2.msra.mxu0 %v1613
        %1687 = vmatprep.subr.mxu0 %v1610
        %1688 = vmatpush2.msra.mxu0 %v1609
        %1689 = vmatprep.subr.mxu0 %v1606
        %1690 = vmatpush2.msra.mxu0 %v1605
        %1691 = vmatprep.subr.mxu0 %v1602
        %1692 = vmatpush2.msra.mxu0 %v1601
        %1693 = vmatprep.subr.mxu0 %v1598
        %1694 = vmatpush2.msra.mxu0 %v1597
        %1695 = vmatprep.subr.mxu0 %v1594
        %1696 = vmatpush2.msra.mxu0 %v1593
        %1697 = vmatprep.subr.mxu0 %v1590
        %1698 = vmatpush2.msra.mxu0 %v1589
        %1699 = vmatprep.subr.mxu0 %v1586
        %1700 = vmatpush2.msra.mxu0 %v1585
        %1701 = vmatprep.subr.mxu0 %v1582
        %1702 = vmatpush2.msra.mxu0 %v1581
        %1703 = vmatprep.subr.mxu0 %v1578
        %1704 = vmatpush2.msra.mxu0 %v1577
        %1705 = vmatprep.mubr.f32.mxu0 %v1505
        %1706 = vmatmul.mubr.f32.gmra.mxu0 %v1503
        %v1707 = vpop.f32.mrf.mxu0
        %v1708 = vadd.f32 0.0, %v1707
        %v1709 = vpop.f32.mrf.mxu0
        %v1710 = vadd.f32 0.0, %v1709
        %1711 = vmatprep.mubr.f32.mxu0 %v1511
        %1712 = vmatmul.mubr.f32.gmra.mxu0 %v1509
        %v1713 = vpop.f32.mrf.mxu0
        %v1714 = vadd.f32 0.0, %v1713
        %v1715 = vpop.f32.mrf.mxu0
        %v1716 = vadd.f32 0.0, %v1715
        %1717 = vdwg.mxu0
        %1718 = vmatprep.subr.mxu0 %v1576
        %1719 = vmatpush1.msra.mxu0 %v1575
        %1720 = vmatprep.subr.mxu0 %v1572
        %1721 = vmatpush1.msra.mxu0 %v1571
        %1722 = vmatprep.subr.mxu0 %v1568
        %1723 = vmatpush1.msra.mxu0 %v1567
        %1724 = vmatprep.subr.mxu0 %v1564
        %1725 = vmatpush1.msra.mxu0 %v1563
        %1726 = vmatprep.subr.mxu0 %v1560
        %1727 = vmatpush1.msra.mxu0 %v1559
        %1728 = vmatprep.subr.mxu0 %v1556
        %1729 = vmatpush1.msra.mxu0 %v1555
        %1730 = vmatprep.subr.mxu0 %v1552
        %1731 = vmatpush1.msra.mxu0 %v1551
        %1732 = vmatprep.subr.mxu0 %v1548
        %1733 = vmatpush1.msra.mxu0 %v1547
        %1734 = vmatprep.subr.mxu0 %v1544
        %1735 = vmatpush1.msra.mxu0 %v1543
        %1736 = vmatprep.subr.mxu0 %v1540
        %1737 = vmatpush1.msra.mxu0 %v1539
        %1738 = vmatprep.subr.mxu0 %v1536
        %1739 = vmatpush1.msra.mxu0 %v1535
        %1740 = vmatprep.subr.mxu0 %v1532
        %1741 = vmatpush1.msra.mxu0 %v1531
        %1742 = vmatprep.subr.mxu0 %v1528
        %1743 = vmatpush1.msra.mxu0 %v1527
        %1744 = vmatprep.subr.mxu0 %v1524
        %1745 = vmatpush1.msra.mxu0 %v1523
        %1746 = vmatprep.subr.mxu0 %v1520
        %1747 = vmatpush1.msra.mxu0 %v1519
        %1748 = vmatprep.subr.mxu0 %v1516
        %1749 = vmatpush1.msra.mxu0 %v1515
        %1750 = vmatprep.subr.mxu0 %v1640
        %1751 = vmatpush2.msra.mxu0 %v1639
        %1752 = vmatprep.subr.mxu0 %v1636
        %1753 = vmatpush2.msra.mxu0 %v1635
        %1754 = vmatprep.subr.mxu0 %v1632
        %1755 = vmatpush2.msra.mxu0 %v1631
        %1756 = vmatprep.subr.mxu0 %v1628
        %1757 = vmatpush2.msra.mxu0 %v1627
        %1758 = vmatprep.subr.mxu0 %v1624
        %1759 = vmatpush2.msra.mxu0 %v1623
        %1760 = vmatprep.subr.mxu0 %v1620
        %1761 = vmatpush2.msra.mxu0 %v1619
        %1762 = vmatprep.subr.mxu0 %v1616
        %1763 = vmatpush2.msra.mxu0 %v1615
        %1764 = vmatprep.subr.mxu0 %v1612
        %1765 = vmatpush2.msra.mxu0 %v1611
        %1766 = vmatprep.subr.mxu0 %v1608
        %1767 = vmatpush2.msra.mxu0 %v1607
        %1768 = vmatprep.subr.mxu0 %v1604
        %1769 = vmatpush2.msra.mxu0 %v1603
        %1770 = vmatprep.subr.mxu0 %v1600
        %1771 = vmatpush2.msra.mxu0 %v1599
        %1772 = vmatprep.subr.mxu0 %v1596
        %1773 = vmatpush2.msra.mxu0 %v1595
        %1774 = vmatprep.subr.mxu0 %v1592
        %1775 = vmatpush2.msra.mxu0 %v1591
        %1776 = vmatprep.subr.mxu0 %v1588
        %1777 = vmatpush2.msra.mxu0 %v1587
        %1778 = vmatprep.subr.mxu0 %v1584
        %1779 = vmatpush2.msra.mxu0 %v1583
        %1780 = vmatprep.subr.mxu0 %v1580
        %1781 = vmatpush2.msra.mxu0 %v1579
        %1782 = vmatprep.mubr.f32.mxu0 %v1505
        %1783 = vmatmul.mubr.f32.gmra.mxu0 %v1503
        %v1784 = vpop.f32.mrf.mxu0
        %v1785 = vadd.f32 0.0, %v1784
        %v1786 = vpop.f32.mrf.mxu0
        %v1787 = vadd.f32 0.0, %v1786
        %1788 = vmatprep.mubr.f32.mxu0 %v1511
        %1789 = vmatmul.mubr.f32.gmra.mxu0 %v1509
        %v1790 = vpop.f32.mrf.mxu0
        %v1791 = vadd.f32 0.0, %v1790
        %v1792 = vpop.f32.mrf.mxu0
        %v1793 = vadd.f32 0.0, %v1792
        %1794 = vdwg.mxu0
        %v1795 = vld [vmem:[%s9] sm:$0xff]
        %v1796 = vld [vmem:[%s9 + $0x8] sm:$0xff]
        %v1797 = vld [vmem:[%s9 + $0x10] sm:$0xff]
        %v1798 = vld [vmem:[%s9 + $0x18] sm:$0xff]
        %v1799 = vld [vmem:[%s9 + $0x20] sm:$0xff]
        %v1800 = vld [vmem:[%s9 + $0x28] sm:$0xff]
        %v1801 = vld [vmem:[%s9 + $0x30] sm:$0xff]
        %v1802 = vld [vmem:[%s9 + $0x38] sm:$0xff]
        %v1803 = vld [vmem:[%s9 + $0x40] sm:$0xff]
        %v1804 = vld [vmem:[%s9 + $0x48] sm:$0xff]
        %v1805 = vld [vmem:[%s9 + $0x50] sm:$0xff]
        %v1806 = vld [vmem:[%s9 + $0x58] sm:$0xff]
        %v1807 = vld [vmem:[%s9 + $0x60] sm:$0xff]
        %v1808 = vld [vmem:[%s9 + $0x68] sm:$0xff]
        %v1809 = vld [vmem:[%s9 + $0x70] sm:$0xff]
        %v1810 = vld [vmem:[%s9 + $0x78] sm:$0xff]
        %v1811 = vld [vmem:[%s9 + $0x80] sm:$0xff]
        %v1812 = vld [vmem:[%s9 + $0x88] sm:$0xff]
        %v1813 = vld [vmem:[%s9 + $0x90] sm:$0xff]
        %v1814 = vld [vmem:[%s9 + $0x98] sm:$0xff]
        %v1815 = vld [vmem:[%s9 + $0xa0] sm:$0xff]
        %v1816 = vld [vmem:[%s9 + $0xa8] sm:$0xff]
        %v1817 = vld [vmem:[%s9 + $0xb0] sm:$0xff]
        %v1818 = vld [vmem:[%s9 + $0xb8] sm:$0xff]
        %v1819 = vld [vmem:[%s9 + $0xc0] sm:$0xff]
        %v1820 = vld [vmem:[%s9 + $0xc8] sm:$0xff]
        %v1821 = vld [vmem:[%s9 + $0xd0] sm:$0xff]
        %v1822 = vld [vmem:[%s9 + $0xd8] sm:$0xff]
        %v1823 = vld [vmem:[%s9 + $0xe0] sm:$0xff]
        %v1824 = vld [vmem:[%s9 + $0xe8] sm:$0xff]
        %v1825 = vld [vmem:[%s9 + $0xf0] sm:$0xff]
        %v1826 = vld [vmem:[%s9 + $0xf8] sm:$0xff]
        %v1827 = vld [vmem:[%s9 + $0x100] sm:$0xff]
        %v1828 = vld [vmem:[%s9 + $0x108] sm:$0xff]
        %v1829 = vld [vmem:[%s9 + $0x110] sm:$0xff]
        %v1830 = vld [vmem:[%s9 + $0x118] sm:$0xff]
        %v1831 = vld [vmem:[%s9 + $0x120] sm:$0xff]
        %v1832 = vld [vmem:[%s9 + $0x128] sm:$0xff]
        %v1833 = vld [vmem:[%s9 + $0x130] sm:$0xff]
        %v1834 = vld [vmem:[%s9 + $0x138] sm:$0xff]
        %v1835 = vld [vmem:[%s9 + $0x140] sm:$0xff]
        %v1836 = vld [vmem:[%s9 + $0x148] sm:$0xff]
        %v1837 = vld [vmem:[%s9 + $0x150] sm:$0xff]
        %v1838 = vld [vmem:[%s9 + $0x158] sm:$0xff]
        %v1839 = vld [vmem:[%s9 + $0x160] sm:$0xff]
        %v1840 = vld [vmem:[%s9 + $0x168] sm:$0xff]
        %v1841 = vld [vmem:[%s9 + $0x170] sm:$0xff]
        %v1842 = vld [vmem:[%s9 + $0x178] sm:$0xff]
        %v1843 = vld [vmem:[%s9 + $0x180] sm:$0xff]
        %v1844 = vld [vmem:[%s9 + $0x188] sm:$0xff]
        %v1845 = vld [vmem:[%s9 + $0x190] sm:$0xff]
        %v1846 = vld [vmem:[%s9 + $0x198] sm:$0xff]
        %v1847 = vld [vmem:[%s9 + $0x1a0] sm:$0xff]
        %v1848 = vld [vmem:[%s9 + $0x1a8] sm:$0xff]
        %v1849 = vld [vmem:[%s9 + $0x1b0] sm:$0xff]
        %v1850 = vld [vmem:[%s9 + $0x1b8] sm:$0xff]
        %v1851 = vld [vmem:[%s9 + $0x1c0] sm:$0xff]
        %v1852 = vld [vmem:[%s9 + $0x1c8] sm:$0xff]
        %v1853 = vld [vmem:[%s9 + $0x1d0] sm:$0xff]
        %v1854 = vld [vmem:[%s9 + $0x1d8] sm:$0xff]
        %v1855 = vld [vmem:[%s9 + $0x1e0] sm:$0xff]
        %v1856 = vld [vmem:[%s9 + $0x1e8] sm:$0xff]
        %v1857 = vld [vmem:[%s9 + $0x1f0] sm:$0xff]
        %v1858 = vld [vmem:[%s9 + $0x1f8] sm:$0xff]
        %v1859 = vld [vmem:[%s9 + $0x200] sm:$0xff]
        %v1860 = vld [vmem:[%s9 + $0x208] sm:$0xff]
        %v1861 = vld [vmem:[%s9 + $0x210] sm:$0xff]
        %v1862 = vld [vmem:[%s9 + $0x218] sm:$0xff]
        %v1863 = vld [vmem:[%s9 + $0x220] sm:$0xff]
        %v1864 = vld [vmem:[%s9 + $0x228] sm:$0xff]
        %v1865 = vld [vmem:[%s9 + $0x230] sm:$0xff]
        %v1866 = vld [vmem:[%s9 + $0x238] sm:$0xff]
        %v1867 = vld [vmem:[%s9 + $0x240] sm:$0xff]
        %v1868 = vld [vmem:[%s9 + $0x248] sm:$0xff]
        %v1869 = vld [vmem:[%s9 + $0x250] sm:$0xff]
        %v1870 = vld [vmem:[%s9 + $0x258] sm:$0xff]
        %v1871 = vld [vmem:[%s9 + $0x260] sm:$0xff]
        %v1872 = vld [vmem:[%s9 + $0x268] sm:$0xff]
        %v1873 = vld [vmem:[%s9 + $0x270] sm:$0xff]
        %v1874 = vld [vmem:[%s9 + $0x278] sm:$0xff]
        %v1875 = vld [vmem:[%s9 + $0x280] sm:$0xff]
        %v1876 = vld [vmem:[%s9 + $0x288] sm:$0xff]
        %v1877 = vld [vmem:[%s9 + $0x290] sm:$0xff]
        %v1878 = vld [vmem:[%s9 + $0x298] sm:$0xff]
        %v1879 = vld [vmem:[%s9 + $0x2a0] sm:$0xff]
        %v1880 = vld [vmem:[%s9 + $0x2a8] sm:$0xff]
        %v1881 = vld [vmem:[%s9 + $0x2b0] sm:$0xff]
        %v1882 = vld [vmem:[%s9 + $0x2b8] sm:$0xff]
        %v1883 = vld [vmem:[%s9 + $0x2c0] sm:$0xff]
        %v1884 = vld [vmem:[%s9 + $0x2c8] sm:$0xff]
        %v1885 = vld [vmem:[%s9 + $0x2d0] sm:$0xff]
        %v1886 = vld [vmem:[%s9 + $0x2d8] sm:$0xff]
        %v1887 = vld [vmem:[%s9 + $0x2e0] sm:$0xff]
        %v1888 = vld [vmem:[%s9 + $0x2e8] sm:$0xff]
        %v1889 = vld [vmem:[%s9 + $0x2f0] sm:$0xff]
        %v1890 = vld [vmem:[%s9 + $0x2f8] sm:$0xff]
        %v1891 = vld [vmem:[%s9 + $0x300] sm:$0xff]
        %v1892 = vld [vmem:[%s9 + $0x308] sm:$0xff]
        %v1893 = vld [vmem:[%s9 + $0x310] sm:$0xff]
        %v1894 = vld [vmem:[%s9 + $0x318] sm:$0xff]
        %v1895 = vld [vmem:[%s9 + $0x320] sm:$0xff]
        %v1896 = vld [vmem:[%s9 + $0x328] sm:$0xff]
        %v1897 = vld [vmem:[%s9 + $0x330] sm:$0xff]
        %v1898 = vld [vmem:[%s9 + $0x338] sm:$0xff]
        %v1899 = vld [vmem:[%s9 + $0x340] sm:$0xff]
        %v1900 = vld [vmem:[%s9 + $0x348] sm:$0xff]
        %v1901 = vld [vmem:[%s9 + $0x350] sm:$0xff]
        %v1902 = vld [vmem:[%s9 + $0x358] sm:$0xff]
        %v1903 = vld [vmem:[%s9 + $0x360] sm:$0xff]
        %v1904 = vld [vmem:[%s9 + $0x368] sm:$0xff]
        %v1905 = vld [vmem:[%s9 + $0x370] sm:$0xff]
        %v1906 = vld [vmem:[%s9 + $0x378] sm:$0xff]
        %v1907 = vld [vmem:[%s9 + $0x380] sm:$0xff]
        %v1908 = vld [vmem:[%s9 + $0x388] sm:$0xff]
        %v1909 = vld [vmem:[%s9 + $0x390] sm:$0xff]
        %v1910 = vld [vmem:[%s9 + $0x398] sm:$0xff]
        %v1911 = vld [vmem:[%s9 + $0x3a0] sm:$0xff]
        %v1912 = vld [vmem:[%s9 + $0x3a8] sm:$0xff]
        %v1913 = vld [vmem:[%s9 + $0x3b0] sm:$0xff]
        %v1914 = vld [vmem:[%s9 + $0x3b8] sm:$0xff]
        %v1915 = vld [vmem:[%s9 + $0x3c0] sm:$0xff]
        %v1916 = vld [vmem:[%s9 + $0x3c8] sm:$0xff]
        %v1917 = vld [vmem:[%s9 + $0x3d0] sm:$0xff]
        %v1918 = vld [vmem:[%s9 + $0x3d8] sm:$0xff]
        %v1919 = vld [vmem:[%s9 + $0x3e0] sm:$0xff]
        %v1920 = vld [vmem:[%s9 + $0x3e8] sm:$0xff]
        %v1921 = vld [vmem:[%s9 + $0x3f0] sm:$0xff]
        %v1922 = vld [vmem:[%s9 + $0x3f8] sm:$0xff]
        %v1923 = vld [vmem:[%s10] sm:$0x3]
        %v1925 = vlaneseq
        %v1926 = vshrl.u32 %v1925, 7
        %v1927 = vsub.s32 0, %v1926
        %v1928 = vrot.slane %v1923, %v1927
        %v1929 = vlaneseq
        %v1930 = vshrl.u32 %v1929, 7
        %v1931 = vsub.s32 1, %v1930
        %v1932 = vrot.slane %v1923, %v1931
        %1935 = vmatprep.subr.mxu0 %v1826
        %1936 = vmatpush1.msra.mxu0 %v1825
        %1937 = vmatprep.subr.mxu0 %v1824
        %1938 = vmatpush1.msra.mxu0 %v1823
        %1939 = vmatprep.subr.mxu0 %v1822
        %1940 = vmatpush1.msra.mxu0 %v1821
        %1941 = vmatprep.subr.mxu0 %v1820
        %1942 = vmatpush1.msra.mxu0 %v1819
        %1943 = vmatprep.subr.mxu0 %v1818
        %1944 = vmatpush1.msra.mxu0 %v1817
        %1945 = vmatprep.subr.mxu0 %v1816
        %1946 = vmatpush1.msra.mxu0 %v1815
        %1947 = vmatprep.subr.mxu0 %v1814
        %1948 = vmatpush1.msra.mxu0 %v1813
        %1949 = vmatprep.subr.mxu0 %v1812
        %1950 = vmatpush1.msra.mxu0 %v1811
        %1951 = vmatprep.subr.mxu0 %v1810
        %1952 = vmatpush1.msra.mxu0 %v1809
        %1953 = vmatprep.subr.mxu0 %v1808
        %1954 = vmatpush1.msra.mxu0 %v1807
        %1955 = vmatprep.subr.mxu0 %v1806
        %1956 = vmatpush1.msra.mxu0 %v1805
        %1957 = vmatprep.subr.mxu0 %v1804
        %1958 = vmatpush1.msra.mxu0 %v1803
        %1959 = vmatprep.subr.mxu0 %v1802
        %1960 = vmatpush1.msra.mxu0 %v1801
        %1961 = vmatprep.subr.mxu0 %v1800
        %1962 = vmatpush1.msra.mxu0 %v1799
        %1963 = vmatprep.subr.mxu0 %v1798
        %1964 = vmatpush1.msra.mxu0 %v1797
        %1965 = vmatprep.subr.mxu0 %v1796
        %1966 = vmatpush1.msra.mxu0 %v1795
        %1967 = vmatprep.subr.mxu0 %v1858
        %1968 = vmatpush2.msra.mxu0 %v1857
        %1969 = vmatprep.subr.mxu0 %v1856
        %1970 = vmatpush2.msra.mxu0 %v1855
        %1971 = vmatprep.subr.mxu0 %v1854
        %1972 = vmatpush2.msra.mxu0 %v1853
        %1973 = vmatprep.subr.mxu0 %v1852
        %1974 = vmatpush2.msra.mxu0 %v1851
        %1975 = vmatprep.subr.mxu0 %v1850
        %1976 = vmatpush2.msra.mxu0 %v1849
        %1977 = vmatprep.subr.mxu0 %v1848
        %1978 = vmatpush2.msra.mxu0 %v1847
        %1979 = vmatprep.subr.mxu0 %v1846
        %1980 = vmatpush2.msra.mxu0 %v1845
        %1981 = vmatprep.subr.mxu0 %v1844
        %1982 = vmatpush2.msra.mxu0 %v1843
        %1983 = vmatprep.subr.mxu0 %v1842
        %1984 = vmatpush2.msra.mxu0 %v1841
        %1985 = vmatprep.subr.mxu0 %v1840
        %1986 = vmatpush2.msra.mxu0 %v1839
        %1987 = vmatprep.subr.mxu0 %v1838
        %1988 = vmatpush2.msra.mxu0 %v1837
        %1989 = vmatprep.subr.mxu0 %v1836
        %1990 = vmatpush2.msra.mxu0 %v1835
        %1991 = vmatprep.subr.mxu0 %v1834
        %1992 = vmatpush2.msra.mxu0 %v1833
        %1993 = vmatprep.subr.mxu0 %v1832
        %1994 = vmatpush2.msra.mxu0 %v1831
        %1995 = vmatprep.subr.mxu0 %v1830
        %1996 = vmatpush2.msra.mxu0 %v1829
        %1997 = vmatprep.subr.mxu0 %v1828
        %1998 = vmatpush2.msra.mxu0 %v1827
        %1999 = vmatprep.mubr.f32.mxu0 %v1710
        %2000 = vmatmul.mubr.f32.gmra.mxu0 %v1708
        %v2001 = vpop.f32.mrf.mxu0
        %v2002 = vadd.f32 %v1928, %v2001
        %v2003 = vpop.f32.mrf.mxu0
        %v2004 = vadd.f32 %v1932, %v2003
        %2005 = vmatprep.mubr.f32.mxu0 %v1716
        %2006 = vmatmul.mubr.f32.gmra.mxu0 %v1714
        %v2007 = vpop.f32.mrf.mxu0
        %v2008 = vadd.f32 %v1928, %v2007
        %v2009 = vpop.f32.mrf.mxu0
        %v2010 = vadd.f32 %v1932, %v2009
        %2011 = vdwg.mxu0
        %2012 = vmatprep.subr.mxu0 %v1890
        %2013 = vmatpush1.msra.mxu0 %v1889
        %2014 = vmatprep.subr.mxu0 %v1888
        %2015 = vmatpush1.msra.mxu0 %v1887
        %2016 = vmatprep.subr.mxu0 %v1886
        %2017 = vmatpush1.msra.mxu0 %v1885
        %2018 = vmatprep.subr.mxu0 %v1884
        %2019 = vmatpush1.msra.mxu0 %v1883
        %2020 = vmatprep.subr.mxu0 %v1882
        %2021 = vmatpush1.msra.mxu0 %v1881
        %2022 = vmatprep.subr.mxu0 %v1880
        %2023 = vmatpush1.msra.mxu0 %v1879
        %2024 = vmatprep.subr.mxu0 %v1878
        %2025 = vmatpush1.msra.mxu0 %v1877
        %2026 = vmatprep.subr.mxu0 %v1876
        %2027 = vmatpush1.msra.mxu0 %v1875
        %2028 = vmatprep.subr.mxu0 %v1874
        %2029 = vmatpush1.msra.mxu0 %v1873
        %2030 = vmatprep.subr.mxu0 %v1872
        %2031 = vmatpush1.msra.mxu0 %v1871
        %2032 = vmatprep.subr.mxu0 %v1870
        %2033 = vmatpush1.msra.mxu0 %v1869
        %2034 = vmatprep.subr.mxu0 %v1868
        %2035 = vmatpush1.msra.mxu0 %v1867
        %2036 = vmatprep.subr.mxu0 %v1866
        %2037 = vmatpush1.msra.mxu0 %v1865
        %2038 = vmatprep.subr.mxu0 %v1864
        %2039 = vmatpush1.msra.mxu0 %v1863
        %2040 = vmatprep.subr.mxu0 %v1862
        %2041 = vmatpush1.msra.mxu0 %v1861
        %2042 = vmatprep.subr.mxu0 %v1860
        %2043 = vmatpush1.msra.mxu0 %v1859
        %2044 = vmatprep.subr.mxu0 %v1922
        %2045 = vmatpush2.msra.mxu0 %v1921
        %2046 = vmatprep.subr.mxu0 %v1920
        %2047 = vmatpush2.msra.mxu0 %v1919
        %2048 = vmatprep.subr.mxu0 %v1918
        %2049 = vmatpush2.msra.mxu0 %v1917
        %2050 = vmatprep.subr.mxu0 %v1916
        %2051 = vmatpush2.msra.mxu0 %v1915
        %2052 = vmatprep.subr.mxu0 %v1914
        %2053 = vmatpush2.msra.mxu0 %v1913
        %2054 = vmatprep.subr.mxu0 %v1912
        %2055 = vmatpush2.msra.mxu0 %v1911
        %2056 = vmatprep.subr.mxu0 %v1910
        %2057 = vmatpush2.msra.mxu0 %v1909
        %2058 = vmatprep.subr.mxu0 %v1908
        %2059 = vmatpush2.msra.mxu0 %v1907
        %2060 = vmatprep.subr.mxu0 %v1906
        %2061 = vmatpush2.msra.mxu0 %v1905
        %2062 = vmatprep.subr.mxu0 %v1904
        %2063 = vmatpush2.msra.mxu0 %v1903
        %2064 = vmatprep.subr.mxu0 %v1902
        %2065 = vmatpush2.msra.mxu0 %v1901
        %2066 = vmatprep.subr.mxu0 %v1900
        %2067 = vmatpush2.msra.mxu0 %v1899
        %2068 = vmatprep.subr.mxu0 %v1898
        %2069 = vmatpush2.msra.mxu0 %v1897
        %2070 = vmatprep.subr.mxu0 %v1896
        %2071 = vmatpush2.msra.mxu0 %v1895
        %2072 = vmatprep.subr.mxu0 %v1894
        %2073 = vmatpush2.msra.mxu0 %v1893
        %2074 = vmatprep.subr.mxu0 %v1892
        %2075 = vmatpush2.msra.mxu0 %v1891
        %2076 = vmatprep.mubr.f32.mxu0 %v1787
        %2077 = vmatmul.mubr.f32.gmra.mxu0 %v1785
        %v2078 = vpop.f32.mrf.mxu0
        %v2079 = vadd.f32 %v2002, %v2078
        %v2080 = vpop.f32.mrf.mxu0
        %v2081 = vadd.f32 %v2004, %v2080
        %2082 = vmatprep.mubr.f32.mxu0 %v1793
        %2083 = vmatmul.mubr.f32.gmra.mxu0 %v1791
        %v2084 = vpop.f32.mrf.mxu0
        %v2085 = vadd.f32 %v2008, %v2084
        %v2086 = vpop.f32.mrf.mxu0
        %v2087 = vadd.f32 %v2010, %v2086
        %2088 = vdwg.mxu0
        %v2089 = vld [vmem:[%s11] sm:$0xff]
        %v2090 = vld [vmem:[%s11 + $0x8] sm:$0xff]
        %v2091 = vld [vmem:[%s11 + $0x10] sm:$0xff]
        %v2092 = vld [vmem:[%s11 + $0x18] sm:$0xff]
        %vm2093 = vcmask 130048
        %v2095 = vsel %vm2093, %v2089, 0
        %v2098 = vsel %vm2093, %v2090, 0
        %v2101 = vsel %vm2093, %v2091, 0
        %v2104 = vsel %vm2093, %v2092, 0
        %2106 = vmatprep.subr.mxu0 0.0
        %2107 = vmatpush1.msra.mxu0 0.0
        %2108 = vmatprep.subr.mxu0 0.0
        %2109 = vmatpush1.msra.mxu0 0.0
        %2110 = vmatprep.subr.mxu0 0.0
        %2111 = vmatpush1.msra.mxu0 0.0
        %2112 = vmatprep.subr.mxu0 0.0
        %2113 = vmatpush1.msra.mxu0 0.0
        %2114 = vmatprep.subr.mxu0 0.0
        %2115 = vmatpush1.msra.mxu0 0.0
        %2116 = vmatprep.subr.mxu0 0.0
        %2117 = vmatpush1.msra.mxu0 0.0
        %2118 = vmatprep.subr.mxu0 0.0
        %2119 = vmatpush1.msra.mxu0 0.0
        %2120 = vmatprep.subr.mxu0 0.0
        %2121 = vmatpush1.msra.mxu0 0.0
        %2122 = vmatprep.subr.mxu0 0.0
        %2123 = vmatpush1.msra.mxu0 0.0
        %2124 = vmatprep.subr.mxu0 0.0
        %2125 = vmatpush1.msra.mxu0 0.0
        %2126 = vmatprep.subr.mxu0 0.0
        %2127 = vmatpush1.msra.mxu0 0.0
        %2128 = vmatprep.subr.mxu0 0.0
        %2129 = vmatpush1.msra.mxu0 0.0
        %2130 = vmatprep.subr.mxu0 0.0
        %2131 = vmatpush1.msra.mxu0 0.0
        %2132 = vmatprep.subr.mxu0 0.0
        %2133 = vmatpush1.msra.mxu0 0.0
        %2134 = vmatprep.subr.mxu0 %v2087
        %2135 = vmatpush1.msra.mxu0 %v2085
        %2136 = vmatprep.subr.mxu0 %v2081
        %2137 = vmatpush1.msra.mxu0 %v2079
        %2138 = vmatprep.subr.mxu0 0.0
        %2139 = vmatpush2.msra.mxu0 0.0
        %2140 = vmatprep.subr.mxu0 0.0
        %2141 = vmatpush2.msra.mxu0 0.0
        %2142 = vmatprep.subr.mxu0 0.0
        %2143 = vmatpush2.msra.mxu0 0.0
        %2144 = vmatprep.subr.mxu0 0.0
        %2145 = vmatpush2.msra.mxu0 0.0
        %2146 = vmatprep.subr.mxu0 0.0
        %2147 = vmatpush2.msra.mxu0 0.0
        %2148 = vmatprep.subr.mxu0 0.0
        %2149 = vmatpush2.msra.mxu0 0.0
        %2150 = vmatprep.subr.mxu0 0.0
        %2151 = vmatpush2.msra.mxu0 0.0
        %2152 = vmatprep.subr.mxu0 0.0
        %2153 = vmatpush2.msra.mxu0 0.0
        %2154 = vmatprep.subr.mxu0 0.0
        %2155 = vmatpush2.msra.mxu0 0.0
        %2156 = vmatprep.subr.mxu0 0.0
        %2157 = vmatpush2.msra.mxu0 0.0
        %2158 = vmatprep.subr.mxu0 0.0
        %2159 = vmatpush2.msra.mxu0 0.0
        %2160 = vmatprep.subr.mxu0 0.0
        %2161 = vmatpush2.msra.mxu0 0.0
        %2162 = vmatprep.subr.mxu0 0.0
        %2163 = vmatpush2.msra.mxu0 0.0
        %2164 = vmatprep.subr.mxu0 0.0
        %2165 = vmatpush2.msra.mxu0 0.0
        %2166 = vmatprep.subr.mxu0 0.0
        %2167 = vmatpush2.msra.mxu0 0.0
        %2168 = vmatprep.subr.mxu0 0.0
        %2169 = vmatpush2.msra.mxu0 0.0
        %2170 = vmatprep.mubr.f32.mxu0 0.0
        %2171 = vmatmul.mubr.f32.gmra.mxu0 %v2095
        %v2172 = vpop.f32.mrf.mxu0
        %v2173 = vadd.f32 0.0, %v2172
        %v2174 = vpop.f32.mrf.mxu0
        %v2175 = vadd.f32 0.0, %v2174
        %2176 = vmatprep.mubr.f32.mxu0 0.0
        %2177 = vmatmul.mubr.f32.gmra.mxu0 %v2098
        %v2178 = vpop.f32.mrf.mxu0
        %v2179 = vadd.f32 0.0, %v2178
        %v2180 = vpop.f32.mrf.mxu0
        %v2181 = vadd.f32 0.0, %v2180
        %2182 = vmatprep.mubr.f32.mxu0 0.0
        %2183 = vmatmul.mubr.f32.gmra.mxu0 %v2101
        %v2184 = vpop.f32.mrf.mxu0
        %v2185 = vadd.f32 0.0, %v2184
        %v2186 = vpop.f32.mrf.mxu0
        %v2187 = vadd.f32 0.0, %v2186
        %2188 = vmatprep.mubr.f32.mxu0 0.0
        %2189 = vmatmul.mubr.f32.gmra.mxu0 %v2104
        %v2190 = vpop.f32.mrf.mxu0
        %v2191 = vadd.f32 0.0, %v2190
        %v2192 = vpop.f32.mrf.mxu0
        %v2193 = vadd.f32 0.0, %v2192
        %2194 = vdwg.mxu0
        %v2195 = vld [vmem:[%s12] sm:$0xff]
        %v2196 = vld [vmem:[%s12 + $0x8] sm:$0xff]
        %v2197 = vld [vmem:[%s12 + $0x10] sm:$0xff]
        %v2198 = vld [vmem:[%s12 + $0x18] sm:$0xff]
        %v2199 = vld [vmem:[%s12 + $0x20] sm:$0xff]
        %v2200 = vld [vmem:[%s12 + $0x28] sm:$0xff]
        %v2201 = vld [vmem:[%s12 + $0x30] sm:$0xff]
        %v2202 = vld [vmem:[%s12 + $0x38] sm:$0xff]
        %v2203 = vld [vmem:[%s12 + $0x40] sm:$0xff]
        %v2204 = vld [vmem:[%s12 + $0x48] sm:$0xff]
        %v2205 = vld [vmem:[%s12 + $0x50] sm:$0xff]
        %v2206 = vld [vmem:[%s12 + $0x58] sm:$0xff]
        %v2207 = vld [vmem:[%s12 + $0x60] sm:$0xff]
        %v2208 = vld [vmem:[%s12 + $0x68] sm:$0xff]
        %v2209 = vld [vmem:[%s12 + $0x70] sm:$0xff]
        %v2210 = vld [vmem:[%s12 + $0x78] sm:$0xff]
        %v2211 = vld [vmem:[%s12 + $0x80] sm:$0xff]
        %v2212 = vld [vmem:[%s12 + $0x88] sm:$0xff]
        %v2213 = vld [vmem:[%s12 + $0x90] sm:$0xff]
        %v2214 = vld [vmem:[%s12 + $0x98] sm:$0xff]
        %v2215 = vld [vmem:[%s12 + $0xa0] sm:$0xff]
        %v2216 = vld [vmem:[%s12 + $0xa8] sm:$0xff]
        %v2217 = vld [vmem:[%s12 + $0xb0] sm:$0xff]
        %v2218 = vld [vmem:[%s12 + $0xb8] sm:$0xff]
        %v2219 = vld [vmem:[%s12 + $0xc0] sm:$0xff]
        %v2220 = vld [vmem:[%s12 + $0xc8] sm:$0xff]
        %v2221 = vld [vmem:[%s12 + $0xd0] sm:$0xff]
        %v2222 = vld [vmem:[%s12 + $0xd8] sm:$0xff]
        %v2223 = vld [vmem:[%s12 + $0xe0] sm:$0xff]
        %v2224 = vld [vmem:[%s12 + $0xe8] sm:$0xff]
        %v2225 = vld [vmem:[%s12 + $0xf0] sm:$0xff]
        %v2226 = vld [vmem:[%s12 + $0xf8] sm:$0xff]
        %v2227 = vld [vmem:[%s12 + $0x100] sm:$0xff]
        %v2228 = vld [vmem:[%s12 + $0x108] sm:$0xff]
        %v2229 = vld [vmem:[%s12 + $0x110] sm:$0xff]
        %v2230 = vld [vmem:[%s12 + $0x118] sm:$0xff]
        %v2231 = vld [vmem:[%s12 + $0x120] sm:$0xff]
        %v2232 = vld [vmem:[%s12 + $0x128] sm:$0xff]
        %v2233 = vld [vmem:[%s12 + $0x130] sm:$0xff]
        %v2234 = vld [vmem:[%s12 + $0x138] sm:$0xff]
        %v2235 = vld [vmem:[%s12 + $0x140] sm:$0xff]
        %v2236 = vld [vmem:[%s12 + $0x148] sm:$0xff]
        %v2237 = vld [vmem:[%s12 + $0x150] sm:$0xff]
        %v2238 = vld [vmem:[%s12 + $0x158] sm:$0xff]
        %v2239 = vld [vmem:[%s12 + $0x160] sm:$0xff]
        %v2240 = vld [vmem:[%s12 + $0x168] sm:$0xff]
        %v2241 = vld [vmem:[%s12 + $0x170] sm:$0xff]
        %v2242 = vld [vmem:[%s12 + $0x178] sm:$0xff]
        %v2243 = vld [vmem:[%s12 + $0x180] sm:$0xff]
        %v2244 = vld [vmem:[%s12 + $0x188] sm:$0xff]
        %v2245 = vld [vmem:[%s12 + $0x190] sm:$0xff]
        %v2246 = vld [vmem:[%s12 + $0x198] sm:$0xff]
        %v2247 = vld [vmem:[%s12 + $0x1a0] sm:$0xff]
        %v2248 = vld [vmem:[%s12 + $0x1a8] sm:$0xff]
        %v2249 = vld [vmem:[%s12 + $0x1b0] sm:$0xff]
        %v2250 = vld [vmem:[%s12 + $0x1b8] sm:$0xff]
        %v2251 = vld [vmem:[%s12 + $0x1c0] sm:$0xff]
        %v2252 = vld [vmem:[%s12 + $0x1c8] sm:$0xff]
        %v2253 = vld [vmem:[%s12 + $0x1d0] sm:$0xff]
        %v2254 = vld [vmem:[%s12 + $0x1d8] sm:$0xff]
        %v2255 = vld [vmem:[%s12 + $0x1e0] sm:$0xff]
        %v2256 = vld [vmem:[%s12 + $0x1e8] sm:$0xff]
        %v2257 = vld [vmem:[%s12 + $0x1f0] sm:$0xff]
        %v2258 = vld [vmem:[%s12 + $0x1f8] sm:$0xff]
        %v2259 = vld [vmem:[%s12 + $0x200] sm:$0xff]
        %v2260 = vld [vmem:[%s12 + $0x208] sm:$0xff]
        %v2261 = vld [vmem:[%s12 + $0x210] sm:$0xff]
        %v2262 = vld [vmem:[%s12 + $0x218] sm:$0xff]
        %v2263 = vld [vmem:[%s12 + $0x220] sm:$0xff]
        %v2264 = vld [vmem:[%s12 + $0x228] sm:$0xff]
        %v2265 = vld [vmem:[%s12 + $0x230] sm:$0xff]
        %v2266 = vld [vmem:[%s12 + $0x238] sm:$0xff]
        %v2267 = vld [vmem:[%s12 + $0x240] sm:$0xff]
        %v2268 = vld [vmem:[%s12 + $0x248] sm:$0xff]
        %v2269 = vld [vmem:[%s12 + $0x250] sm:$0xff]
        %v2270 = vld [vmem:[%s12 + $0x258] sm:$0xff]
        %v2271 = vld [vmem:[%s12 + $0x260] sm:$0xff]
        %v2272 = vld [vmem:[%s12 + $0x268] sm:$0xff]
        %v2273 = vld [vmem:[%s12 + $0x270] sm:$0xff]
        %v2274 = vld [vmem:[%s12 + $0x278] sm:$0xff]
        %v2275 = vld [vmem:[%s12 + $0x280] sm:$0xff]
        %v2276 = vld [vmem:[%s12 + $0x288] sm:$0xff]
        %v2277 = vld [vmem:[%s12 + $0x290] sm:$0xff]
        %v2278 = vld [vmem:[%s12 + $0x298] sm:$0xff]
        %v2279 = vld [vmem:[%s12 + $0x2a0] sm:$0xff]
        %v2280 = vld [vmem:[%s12 + $0x2a8] sm:$0xff]
        %v2281 = vld [vmem:[%s12 + $0x2b0] sm:$0xff]
        %v2282 = vld [vmem:[%s12 + $0x2b8] sm:$0xff]
        %v2283 = vld [vmem:[%s12 + $0x2c0] sm:$0xff]
        %v2284 = vld [vmem:[%s12 + $0x2c8] sm:$0xff]
        %v2285 = vld [vmem:[%s12 + $0x2d0] sm:$0xff]
        %v2286 = vld [vmem:[%s12 + $0x2d8] sm:$0xff]
        %v2287 = vld [vmem:[%s12 + $0x2e0] sm:$0xff]
        %v2288 = vld [vmem:[%s12 + $0x2e8] sm:$0xff]
        %v2289 = vld [vmem:[%s12 + $0x2f0] sm:$0xff]
        %v2290 = vld [vmem:[%s12 + $0x2f8] sm:$0xff]
        %v2291 = vld [vmem:[%s12 + $0x300] sm:$0xff]
        %v2292 = vld [vmem:[%s12 + $0x308] sm:$0xff]
        %v2293 = vld [vmem:[%s12 + $0x310] sm:$0xff]
        %v2294 = vld [vmem:[%s12 + $0x318] sm:$0xff]
        %v2295 = vld [vmem:[%s12 + $0x320] sm:$0xff]
        %v2296 = vld [vmem:[%s12 + $0x328] sm:$0xff]
        %v2297 = vld [vmem:[%s12 + $0x330] sm:$0xff]
        %v2298 = vld [vmem:[%s12 + $0x338] sm:$0xff]
        %v2299 = vld [vmem:[%s12 + $0x340] sm:$0xff]
        %v2300 = vld [vmem:[%s12 + $0x348] sm:$0xff]
        %v2301 = vld [vmem:[%s12 + $0x350] sm:$0xff]
        %v2302 = vld [vmem:[%s12 + $0x358] sm:$0xff]
        %v2303 = vld [vmem:[%s12 + $0x360] sm:$0xff]
        %v2304 = vld [vmem:[%s12 + $0x368] sm:$0xff]
        %v2305 = vld [vmem:[%s12 + $0x370] sm:$0xff]
        %v2306 = vld [vmem:[%s12 + $0x378] sm:$0xff]
        %v2307 = vld [vmem:[%s12 + $0x380] sm:$0xff]
        %v2308 = vld [vmem:[%s12 + $0x388] sm:$0xff]
        %v2309 = vld [vmem:[%s12 + $0x390] sm:$0xff]
        %v2310 = vld [vmem:[%s12 + $0x398] sm:$0xff]
        %v2311 = vld [vmem:[%s12 + $0x3a0] sm:$0xff]
        %v2312 = vld [vmem:[%s12 + $0x3a8] sm:$0xff]
        %v2313 = vld [vmem:[%s12 + $0x3b0] sm:$0xff]
        %v2314 = vld [vmem:[%s12 + $0x3b8] sm:$0xff]
        %v2315 = vld [vmem:[%s12 + $0x3c0] sm:$0xff]
        %v2316 = vld [vmem:[%s12 + $0x3c8] sm:$0xff]
        %v2317 = vld [vmem:[%s12 + $0x3d0] sm:$0xff]
        %v2318 = vld [vmem:[%s12 + $0x3d8] sm:$0xff]
        %v2319 = vld [vmem:[%s12 + $0x3e0] sm:$0xff]
        %v2320 = vld [vmem:[%s12 + $0x3e8] sm:$0xff]
        %v2321 = vld [vmem:[%s12 + $0x3f0] sm:$0xff]
        %v2322 = vld [vmem:[%s12 + $0x3f8] sm:$0xff]
        %2323 = vmatprep.subr.mxu0 %v2256
        %2324 = vmatpush1.msra.mxu0 %v2255
        %2325 = vmatprep.subr.mxu0 %v2252
        %2326 = vmatpush1.msra.mxu0 %v2251
        %2327 = vmatprep.subr.mxu0 %v2248
        %2328 = vmatpush1.msra.mxu0 %v2247
        %2329 = vmatprep.subr.mxu0 %v2244
        %2330 = vmatpush1.msra.mxu0 %v2243
        %2331 = vmatprep.subr.mxu0 %v2240
        %2332 = vmatpush1.msra.mxu0 %v2239
        %2333 = vmatprep.subr.mxu0 %v2236
        %2334 = vmatpush1.msra.mxu0 %v2235
        %2335 = vmatprep.subr.mxu0 %v2232
        %2336 = vmatpush1.msra.mxu0 %v2231
        %2337 = vmatprep.subr.mxu0 %v2228
        %2338 = vmatpush1.msra.mxu0 %v2227
        %2339 = vmatprep.subr.mxu0 %v2224
        %2340 = vmatpush1.msra.mxu0 %v2223
        %2341 = vmatprep.subr.mxu0 %v2220
        %2342 = vmatpush1.msra.mxu0 %v2219
        %2343 = vmatprep.subr.mxu0 %v2216
        %2344 = vmatpush1.msra.mxu0 %v2215
        %2345 = vmatprep.subr.mxu0 %v2212
        %2346 = vmatpush1.msra.mxu0 %v2211
        %2347 = vmatprep.subr.mxu0 %v2208
        %2348 = vmatpush1.msra.mxu0 %v2207
        %2349 = vmatprep.subr.mxu0 %v2204
        %2350 = vmatpush1.msra.mxu0 %v2203
        %2351 = vmatprep.subr.mxu0 %v2200
        %2352 = vmatpush1.msra.mxu0 %v2199
        %2353 = vmatprep.subr.mxu0 %v2196
        %2354 = vmatpush1.msra.mxu0 %v2195
        %2355 = vmatprep.subr.mxu0 %v2320
        %2356 = vmatpush2.msra.mxu0 %v2319
        %2357 = vmatprep.subr.mxu0 %v2316
        %2358 = vmatpush2.msra.mxu0 %v2315
        %2359 = vmatprep.subr.mxu0 %v2312
        %2360 = vmatpush2.msra.mxu0 %v2311
        %2361 = vmatprep.subr.mxu0 %v2308
        %2362 = vmatpush2.msra.mxu0 %v2307
        %2363 = vmatprep.subr.mxu0 %v2304
        %2364 = vmatpush2.msra.mxu0 %v2303
        %2365 = vmatprep.subr.mxu0 %v2300
        %2366 = vmatpush2.msra.mxu0 %v2299
        %2367 = vmatprep.subr.mxu0 %v2296
        %2368 = vmatpush2.msra.mxu0 %v2295
        %2369 = vmatprep.subr.mxu0 %v2292
        %2370 = vmatpush2.msra.mxu0 %v2291
        %2371 = vmatprep.subr.mxu0 %v2288
        %2372 = vmatpush2.msra.mxu0 %v2287
        %2373 = vmatprep.subr.mxu0 %v2284
        %2374 = vmatpush2.msra.mxu0 %v2283
        %2375 = vmatprep.subr.mxu0 %v2280
        %2376 = vmatpush2.msra.mxu0 %v2279
        %2377 = vmatprep.subr.mxu0 %v2276
        %2378 = vmatpush2.msra.mxu0 %v2275
        %2379 = vmatprep.subr.mxu0 %v2272
        %2380 = vmatpush2.msra.mxu0 %v2271
        %2381 = vmatprep.subr.mxu0 %v2268
        %2382 = vmatpush2.msra.mxu0 %v2267
        %2383 = vmatprep.subr.mxu0 %v2264
        %2384 = vmatpush2.msra.mxu0 %v2263
        %2385 = vmatprep.subr.mxu0 %v2260
        %2386 = vmatpush2.msra.mxu0 %v2259
        %2387 = vmatprep.mubr.f32.mxu0 %v2175
        %2388 = vmatmul.mubr.f32.gmra.mxu0 %v2173
        %v2389 = vpop.f32.mrf.mxu0
        %v2390 = vadd.f32 0.0, %v2389
        %v2391 = vpop.f32.mrf.mxu0
        %v2392 = vadd.f32 0.0, %v2391
        %2393 = vmatprep.mubr.f32.mxu0 %v2181
        %2394 = vmatmul.mubr.f32.gmra.mxu0 %v2179
        %v2395 = vpop.f32.mrf.mxu0
        %v2396 = vadd.f32 0.0, %v2395
        %v2397 = vpop.f32.mrf.mxu0
        %v2398 = vadd.f32 0.0, %v2397
        %2399 = vmatprep.mubr.f32.mxu0 %v2187
        %2400 = vmatmul.mubr.f32.gmra.mxu0 %v2185
        %v2401 = vpop.f32.mrf.mxu0
        %v2402 = vadd.f32 0.0, %v2401
        %v2403 = vpop.f32.mrf.mxu0
        %v2404 = vadd.f32 0.0, %v2403
        %2405 = vmatprep.mubr.f32.mxu0 %v2193
        %2406 = vmatmul.mubr.f32.gmra.mxu0 %v2191
        %v2407 = vpop.f32.mrf.mxu0
        %v2408 = vadd.f32 0.0, %v2407
        %v2409 = vpop.f32.mrf.mxu0
        %v2410 = vadd.f32 0.0, %v2409
        %2411 = vdwg.mxu0
        %2412 = vmatprep.subr.mxu0 %v2258
        %2413 = vmatpush1.msra.mxu0 %v2257
        %2414 = vmatprep.subr.mxu0 %v2254
        %2415 = vmatpush1.msra.mxu0 %v2253
        %2416 = vmatprep.subr.mxu0 %v2250
        %2417 = vmatpush1.msra.mxu0 %v2249
        %2418 = vmatprep.subr.mxu0 %v2246
        %2419 = vmatpush1.msra.mxu0 %v2245
        %2420 = vmatprep.subr.mxu0 %v2242
        %2421 = vmatpush1.msra.mxu0 %v2241
        %2422 = vmatprep.subr.mxu0 %v2238
        %2423 = vmatpush1.msra.mxu0 %v2237
        %2424 = vmatprep.subr.mxu0 %v2234
        %2425 = vmatpush1.msra.mxu0 %v2233
        %2426 = vmatprep.subr.mxu0 %v2230
        %2427 = vmatpush1.msra.mxu0 %v2229
        %2428 = vmatprep.subr.mxu0 %v2226
        %2429 = vmatpush1.msra.mxu0 %v2225
        %2430 = vmatprep.subr.mxu0 %v2222
        %2431 = vmatpush1.msra.mxu0 %v2221
        %2432 = vmatprep.subr.mxu0 %v2218
        %2433 = vmatpush1.msra.mxu0 %v2217
        %2434 = vmatprep.subr.mxu0 %v2214
        %2435 = vmatpush1.msra.mxu0 %v2213
        %2436 = vmatprep.subr.mxu0 %v2210
        %2437 = vmatpush1.msra.mxu0 %v2209
        %2438 = vmatprep.subr.mxu0 %v2206
        %2439 = vmatpush1.msra.mxu0 %v2205
        %2440 = vmatprep.subr.mxu0 %v2202
        %2441 = vmatpush1.msra.mxu0 %v2201
        %2442 = vmatprep.subr.mxu0 %v2198
        %2443 = vmatpush1.msra.mxu0 %v2197
        %2444 = vmatprep.subr.mxu0 %v2322
        %2445 = vmatpush2.msra.mxu0 %v2321
        %2446 = vmatprep.subr.mxu0 %v2318
        %2447 = vmatpush2.msra.mxu0 %v2317
        %2448 = vmatprep.subr.mxu0 %v2314
        %2449 = vmatpush2.msra.mxu0 %v2313
        %2450 = vmatprep.subr.mxu0 %v2310
        %2451 = vmatpush2.msra.mxu0 %v2309
        %2452 = vmatprep.subr.mxu0 %v2306
        %2453 = vmatpush2.msra.mxu0 %v2305
        %2454 = vmatprep.subr.mxu0 %v2302
        %2455 = vmatpush2.msra.mxu0 %v2301
        %2456 = vmatprep.subr.mxu0 %v2298
        %2457 = vmatpush2.msra.mxu0 %v2297
        %2458 = vmatprep.subr.mxu0 %v2294
        %2459 = vmatpush2.msra.mxu0 %v2293
        %2460 = vmatprep.subr.mxu0 %v2290
        %2461 = vmatpush2.msra.mxu0 %v2289
        %2462 = vmatprep.subr.mxu0 %v2286
        %2463 = vmatpush2.msra.mxu0 %v2285
        %2464 = vmatprep.subr.mxu0 %v2282
        %2465 = vmatpush2.msra.mxu0 %v2281
        %2466 = vmatprep.subr.mxu0 %v2278
        %2467 = vmatpush2.msra.mxu0 %v2277
        %2468 = vmatprep.subr.mxu0 %v2274
        %2469 = vmatpush2.msra.mxu0 %v2273
        %2470 = vmatprep.subr.mxu0 %v2270
        %2471 = vmatpush2.msra.mxu0 %v2269
        %2472 = vmatprep.subr.mxu0 %v2266
        %2473 = vmatpush2.msra.mxu0 %v2265
        %2474 = vmatprep.subr.mxu0 %v2262
        %2475 = vmatpush2.msra.mxu0 %v2261
        %2476 = vmatprep.mubr.f32.mxu0 %v2175
        %2477 = vmatmul.mubr.f32.gmra.mxu0 %v2173
        %v2478 = vpop.f32.mrf.mxu0
        %v2479 = vadd.f32 0.0, %v2478
        %v2480 = vpop.f32.mrf.mxu0
        %v2481 = vadd.f32 0.0, %v2480
        %2482 = vmatprep.mubr.f32.mxu0 %v2181
        %2483 = vmatmul.mubr.f32.gmra.mxu0 %v2179
        %v2484 = vpop.f32.mrf.mxu0
        %v2485 = vadd.f32 0.0, %v2484
        %v2486 = vpop.f32.mrf.mxu0
        %v2487 = vadd.f32 0.0, %v2486
        %2488 = vmatprep.mubr.f32.mxu0 %v2187
        %2489 = vmatmul.mubr.f32.gmra.mxu0 %v2185
        %v2490 = vpop.f32.mrf.mxu0
        %v2491 = vadd.f32 0.0, %v2490
        %v2492 = vpop.f32.mrf.mxu0
        %v2493 = vadd.f32 0.0, %v2492
        %2494 = vmatprep.mubr.f32.mxu0 %v2193
        %2495 = vmatmul.mubr.f32.gmra.mxu0 %v2191
        %v2496 = vpop.f32.mrf.mxu0
        %v2497 = vadd.f32 0.0, %v2496
        %v2498 = vpop.f32.mrf.mxu0
        %v2499 = vadd.f32 0.0, %v2498
        %2500 = vdwg.mxu0
        %v2501 = vld [vmem:[%s13] sm:$0xff]
        %v2502 = vld [vmem:[%s13 + $0x8] sm:$0xff]
        %v2503 = vld [vmem:[%s13 + $0x10] sm:$0xff]
        %v2504 = vld [vmem:[%s13 + $0x18] sm:$0xff]
        %v2505 = vld [vmem:[%s13 + $0x20] sm:$0xff]
        %v2506 = vld [vmem:[%s13 + $0x28] sm:$0xff]
        %v2507 = vld [vmem:[%s13 + $0x30] sm:$0xff]
        %v2508 = vld [vmem:[%s13 + $0x38] sm:$0xff]
        %v2509 = vld [vmem:[%s13 + $0x40] sm:$0xff]
        %v2510 = vld [vmem:[%s13 + $0x48] sm:$0xff]
        %v2511 = vld [vmem:[%s13 + $0x50] sm:$0xff]
        %v2512 = vld [vmem:[%s13 + $0x58] sm:$0xff]
        %v2513 = vld [vmem:[%s13 + $0x60] sm:$0xff]
        %v2514 = vld [vmem:[%s13 + $0x68] sm:$0xff]
        %v2515 = vld [vmem:[%s13 + $0x70] sm:$0xff]
        %v2516 = vld [vmem:[%s13 + $0x78] sm:$0xff]
        %v2517 = vld [vmem:[%s13 + $0x80] sm:$0xff]
        %v2518 = vld [vmem:[%s13 + $0x88] sm:$0xff]
        %v2519 = vld [vmem:[%s13 + $0x90] sm:$0xff]
        %v2520 = vld [vmem:[%s13 + $0x98] sm:$0xff]
        %v2521 = vld [vmem:[%s13 + $0xa0] sm:$0xff]
        %v2522 = vld [vmem:[%s13 + $0xa8] sm:$0xff]
        %v2523 = vld [vmem:[%s13 + $0xb0] sm:$0xff]
        %v2524 = vld [vmem:[%s13 + $0xb8] sm:$0xff]
        %v2525 = vld [vmem:[%s13 + $0xc0] sm:$0xff]
        %v2526 = vld [vmem:[%s13 + $0xc8] sm:$0xff]
        %v2527 = vld [vmem:[%s13 + $0xd0] sm:$0xff]
        %v2528 = vld [vmem:[%s13 + $0xd8] sm:$0xff]
        %v2529 = vld [vmem:[%s13 + $0xe0] sm:$0xff]
        %v2530 = vld [vmem:[%s13 + $0xe8] sm:$0xff]
        %v2531 = vld [vmem:[%s13 + $0xf0] sm:$0xff]
        %v2532 = vld [vmem:[%s13 + $0xf8] sm:$0xff]
        %v2533 = vld [vmem:[%s13 + $0x100] sm:$0xff]
        %v2534 = vld [vmem:[%s13 + $0x108] sm:$0xff]
        %v2535 = vld [vmem:[%s13 + $0x110] sm:$0xff]
        %v2536 = vld [vmem:[%s13 + $0x118] sm:$0xff]
        %v2537 = vld [vmem:[%s13 + $0x120] sm:$0xff]
        %v2538 = vld [vmem:[%s13 + $0x128] sm:$0xff]
        %v2539 = vld [vmem:[%s13 + $0x130] sm:$0xff]
        %v2540 = vld [vmem:[%s13 + $0x138] sm:$0xff]
        %v2541 = vld [vmem:[%s13 + $0x140] sm:$0xff]
        %v2542 = vld [vmem:[%s13 + $0x148] sm:$0xff]
        %v2543 = vld [vmem:[%s13 + $0x150] sm:$0xff]
        %v2544 = vld [vmem:[%s13 + $0x158] sm:$0xff]
        %v2545 = vld [vmem:[%s13 + $0x160] sm:$0xff]
        %v2546 = vld [vmem:[%s13 + $0x168] sm:$0xff]
        %v2547 = vld [vmem:[%s13 + $0x170] sm:$0xff]
        %v2548 = vld [vmem:[%s13 + $0x178] sm:$0xff]
        %v2549 = vld [vmem:[%s13 + $0x180] sm:$0xff]
        %v2550 = vld [vmem:[%s13 + $0x188] sm:$0xff]
        %v2551 = vld [vmem:[%s13 + $0x190] sm:$0xff]
        %v2552 = vld [vmem:[%s13 + $0x198] sm:$0xff]
        %v2553 = vld [vmem:[%s13 + $0x1a0] sm:$0xff]
        %v2554 = vld [vmem:[%s13 + $0x1a8] sm:$0xff]
        %v2555 = vld [vmem:[%s13 + $0x1b0] sm:$0xff]
        %v2556 = vld [vmem:[%s13 + $0x1b8] sm:$0xff]
        %v2557 = vld [vmem:[%s13 + $0x1c0] sm:$0xff]
        %v2558 = vld [vmem:[%s13 + $0x1c8] sm:$0xff]
        %v2559 = vld [vmem:[%s13 + $0x1d0] sm:$0xff]
        %v2560 = vld [vmem:[%s13 + $0x1d8] sm:$0xff]
        %v2561 = vld [vmem:[%s13 + $0x1e0] sm:$0xff]
        %v2562 = vld [vmem:[%s13 + $0x1e8] sm:$0xff]
        %v2563 = vld [vmem:[%s13 + $0x1f0] sm:$0xff]
        %v2564 = vld [vmem:[%s13 + $0x1f8] sm:$0xff]
        %v2565 = vld [vmem:[%s13 + $0x200] sm:$0xff]
        %v2566 = vld [vmem:[%s13 + $0x208] sm:$0xff]
        %v2567 = vld [vmem:[%s13 + $0x210] sm:$0xff]
        %v2568 = vld [vmem:[%s13 + $0x218] sm:$0xff]
        %v2569 = vld [vmem:[%s13 + $0x220] sm:$0xff]
        %v2570 = vld [vmem:[%s13 + $0x228] sm:$0xff]
        %v2571 = vld [vmem:[%s13 + $0x230] sm:$0xff]
        %v2572 = vld [vmem:[%s13 + $0x238] sm:$0xff]
        %v2573 = vld [vmem:[%s13 + $0x240] sm:$0xff]
        %v2574 = vld [vmem:[%s13 + $0x248] sm:$0xff]
        %v2575 = vld [vmem:[%s13 + $0x250] sm:$0xff]
        %v2576 = vld [vmem:[%s13 + $0x258] sm:$0xff]
        %v2577 = vld [vmem:[%s13 + $0x260] sm:$0xff]
        %v2578 = vld [vmem:[%s13 + $0x268] sm:$0xff]
        %v2579 = vld [vmem:[%s13 + $0x270] sm:$0xff]
        %v2580 = vld [vmem:[%s13 + $0x278] sm:$0xff]
        %v2581 = vld [vmem:[%s13 + $0x280] sm:$0xff]
        %v2582 = vld [vmem:[%s13 + $0x288] sm:$0xff]
        %v2583 = vld [vmem:[%s13 + $0x290] sm:$0xff]
        %v2584 = vld [vmem:[%s13 + $0x298] sm:$0xff]
        %v2585 = vld [vmem:[%s13 + $0x2a0] sm:$0xff]
        %v2586 = vld [vmem:[%s13 + $0x2a8] sm:$0xff]
        %v2587 = vld [vmem:[%s13 + $0x2b0] sm:$0xff]
        %v2588 = vld [vmem:[%s13 + $0x2b8] sm:$0xff]
        %v2589 = vld [vmem:[%s13 + $0x2c0] sm:$0xff]
        %v2590 = vld [vmem:[%s13 + $0x2c8] sm:$0xff]
        %v2591 = vld [vmem:[%s13 + $0x2d0] sm:$0xff]
        %v2592 = vld [vmem:[%s13 + $0x2d8] sm:$0xff]
        %v2593 = vld [vmem:[%s13 + $0x2e0] sm:$0xff]
        %v2594 = vld [vmem:[%s13 + $0x2e8] sm:$0xff]
        %v2595 = vld [vmem:[%s13 + $0x2f0] sm:$0xff]
        %v2596 = vld [vmem:[%s13 + $0x2f8] sm:$0xff]
        %v2597 = vld [vmem:[%s13 + $0x300] sm:$0xff]
        %v2598 = vld [vmem:[%s13 + $0x308] sm:$0xff]
        %v2599 = vld [vmem:[%s13 + $0x310] sm:$0xff]
        %v2600 = vld [vmem:[%s13 + $0x318] sm:$0xff]
        %v2601 = vld [vmem:[%s13 + $0x320] sm:$0xff]
        %v2602 = vld [vmem:[%s13 + $0x328] sm:$0xff]
        %v2603 = vld [vmem:[%s13 + $0x330] sm:$0xff]
        %v2604 = vld [vmem:[%s13 + $0x338] sm:$0xff]
        %v2605 = vld [vmem:[%s13 + $0x340] sm:$0xff]
        %v2606 = vld [vmem:[%s13 + $0x348] sm:$0xff]
        %v2607 = vld [vmem:[%s13 + $0x350] sm:$0xff]
        %v2608 = vld [vmem:[%s13 + $0x358] sm:$0xff]
        %v2609 = vld [vmem:[%s13 + $0x360] sm:$0xff]
        %v2610 = vld [vmem:[%s13 + $0x368] sm:$0xff]
        %v2611 = vld [vmem:[%s13 + $0x370] sm:$0xff]
        %v2612 = vld [vmem:[%s13 + $0x378] sm:$0xff]
        %v2613 = vld [vmem:[%s13 + $0x380] sm:$0xff]
        %v2614 = vld [vmem:[%s13 + $0x388] sm:$0xff]
        %v2615 = vld [vmem:[%s13 + $0x390] sm:$0xff]
        %v2616 = vld [vmem:[%s13 + $0x398] sm:$0xff]
        %v2617 = vld [vmem:[%s13 + $0x3a0] sm:$0xff]
        %v2618 = vld [vmem:[%s13 + $0x3a8] sm:$0xff]
        %v2619 = vld [vmem:[%s13 + $0x3b0] sm:$0xff]
        %v2620 = vld [vmem:[%s13 + $0x3b8] sm:$0xff]
        %v2621 = vld [vmem:[%s13 + $0x3c0] sm:$0xff]
        %v2622 = vld [vmem:[%s13 + $0x3c8] sm:$0xff]
        %v2623 = vld [vmem:[%s13 + $0x3d0] sm:$0xff]
        %v2624 = vld [vmem:[%s13 + $0x3d8] sm:$0xff]
        %v2625 = vld [vmem:[%s13 + $0x3e0] sm:$0xff]
        %v2626 = vld [vmem:[%s13 + $0x3e8] sm:$0xff]
        %v2627 = vld [vmem:[%s13 + $0x3f0] sm:$0xff]
        %v2628 = vld [vmem:[%s13 + $0x3f8] sm:$0xff]
        %v2629 = vld [vmem:[%s14] sm:$0x3]
        %v2631 = vlaneseq
        %v2632 = vshrl.u32 %v2631, 7
        %v2633 = vsub.s32 0, %v2632
        %v2634 = vrot.slane %v2629, %v2633
        %v2635 = vlaneseq
        %v2636 = vshrl.u32 %v2635, 7
        %v2637 = vsub.s32 1, %v2636
        %v2638 = vrot.slane %v2629, %v2637
        %2641 = vmatprep.subr.mxu0 %v2532
        %2642 = vmatpush1.msra.mxu0 %v2531
        %2643 = vmatprep.subr.mxu0 %v2530
        %2644 = vmatpush1.msra.mxu0 %v2529
        %2645 = vmatprep.subr.mxu0 %v2528
        %2646 = vmatpush1.msra.mxu0 %v2527
        %2647 = vmatprep.subr.mxu0 %v2526
        %2648 = vmatpush1.msra.mxu0 %v2525
        %2649 = vmatprep.subr.mxu0 %v2524
        %2650 = vmatpush1.msra.mxu0 %v2523
        %2651 = vmatprep.subr.mxu0 %v2522
        %2652 = vmatpush1.msra.mxu0 %v2521
        %2653 = vmatprep.subr.mxu0 %v2520
        %2654 = vmatpush1.msra.mxu0 %v2519
        %2655 = vmatprep.subr.mxu0 %v2518
        %2656 = vmatpush1.msra.mxu0 %v2517
        %2657 = vmatprep.subr.mxu0 %v2516
        %2658 = vmatpush1.msra.mxu0 %v2515
        %2659 = vmatprep.subr.mxu0 %v2514
        %2660 = vmatpush1.msra.mxu0 %v2513
        %2661 = vmatprep.subr.mxu0 %v2512
        %2662 = vmatpush1.msra.mxu0 %v2511
        %2663 = vmatprep.subr.mxu0 %v2510
        %2664 = vmatpush1.msra.mxu0 %v2509
        %2665 = vmatprep.subr.mxu0 %v2508
        %2666 = vmatpush1.msra.mxu0 %v2507
        %2667 = vmatprep.subr.mxu0 %v2506
        %2668 = vmatpush1.msra.mxu0 %v2505
        %2669 = vmatprep.subr.mxu0 %v2504
        %2670 = vmatpush1.msra.mxu0 %v2503
        %2671 = vmatprep.subr.mxu0 %v2502
        %2672 = vmatpush1.msra.mxu0 %v2501
        %2673 = vmatprep.subr.mxu0 %v2564
        %2674 = vmatpush2.msra.mxu0 %v2563
        %2675 = vmatprep.subr.mxu0 %v2562
        %2676 = vmatpush2.msra.mxu0 %v2561
        %2677 = vmatprep.subr.mxu0 %v2560
        %2678 = vmatpush2.msra.mxu0 %v2559
        %2679 = vmatprep.subr.mxu0 %v2558
        %2680 = vmatpush2.msra.mxu0 %v2557
        %2681 = vmatprep.subr.mxu0 %v2556
        %2682 = vmatpush2.msra.mxu0 %v2555
        %2683 = vmatprep.subr.mxu0 %v2554
        %2684 = vmatpush2.msra.mxu0 %v2553
        %2685 = vmatprep.subr.mxu0 %v2552
        %2686 = vmatpush2.msra.mxu0 %v2551
        %2687 = vmatprep.subr.mxu0 %v2550
        %2688 = vmatpush2.msra.mxu0 %v2549
        %2689 = vmatprep.subr.mxu0 %v2548
        %2690 = vmatpush2.msra.mxu0 %v2547
        %2691 = vmatprep.subr.mxu0 %v2546
        %2692 = vmatpush2.msra.mxu0 %v2545
        %2693 = vmatprep.subr.mxu0 %v2544
        %2694 = vmatpush2.msra.mxu0 %v2543
        %2695 = vmatprep.subr.mxu0 %v2542
        %2696 = vmatpush2.msra.mxu0 %v2541
        %2697 = vmatprep.subr.mxu0 %v2540
        %2698 = vmatpush2.msra.mxu0 %v2539
        %2699 = vmatprep.subr.mxu0 %v2538
        %2700 = vmatpush2.msra.mxu0 %v2537
        %2701 = vmatprep.subr.mxu0 %v2536
        %2702 = vmatpush2.msra.mxu0 %v2535
        %2703 = vmatprep.subr.mxu0 %v2534
        %2704 = vmatpush2.msra.mxu0 %v2533
        %2705 = vmatprep.mubr.f32.mxu0 %v2392
        %2706 = vmatmul.mubr.f32.gmra.mxu0 %v2390
        %v2707 = vpop.f32.mrf.mxu0
        %v2708 = vadd.f32 %v2634, %v2707
        %v2709 = vpop.f32.mrf.mxu0
        %v2710 = vadd.f32 %v2638, %v2709
        %2711 = vmatprep.mubr.f32.mxu0 %v2398
        %2712 = vmatmul.mubr.f32.gmra.mxu0 %v2396
        %v2713 = vpop.f32.mrf.mxu0
        %v2714 = vadd.f32 %v2634, %v2713
        %v2715 = vpop.f32.mrf.mxu0
        %v2716 = vadd.f32 %v2638, %v2715
        %2717 = vmatprep.mubr.f32.mxu0 %v2404
        %2718 = vmatmul.mubr.f32.gmra.mxu0 %v2402
        %v2719 = vpop.f32.mrf.mxu0
        %v2720 = vadd.f32 %v2634, %v2719
        %v2721 = vpop.f32.mrf.mxu0
        %v2722 = vadd.f32 %v2638, %v2721
        %2723 = vmatprep.mubr.f32.mxu0 %v2410
        %2724 = vmatmul.mubr.f32.gmra.mxu0 %v2408
        %v2725 = vpop.f32.mrf.mxu0
        %v2726 = vadd.f32 %v2634, %v2725
        %v2727 = vpop.f32.mrf.mxu0
        %v2728 = vadd.f32 %v2638, %v2727
        %2729 = vdwg.mxu0
        %2730 = vmatprep.subr.mxu0 %v2596
        %2731 = vmatpush1.msra.mxu0 %v2595
        %2732 = vmatprep.subr.mxu0 %v2594
        %2733 = vmatpush1.msra.mxu0 %v2593
        %2734 = vmatprep.subr.mxu0 %v2592
        %2735 = vmatpush1.msra.mxu0 %v2591
        %2736 = vmatprep.subr.mxu0 %v2590
        %2737 = vmatpush1.msra.mxu0 %v2589
        %2738 = vmatprep.subr.mxu0 %v2588
        %2739 = vmatpush1.msra.mxu0 %v2587
        %2740 = vmatprep.subr.mxu0 %v2586
        %2741 = vmatpush1.msra.mxu0 %v2585
        %2742 = vmatprep.subr.mxu0 %v2584
        %2743 = vmatpush1.msra.mxu0 %v2583
        %2744 = vmatprep.subr.mxu0 %v2582
        %2745 = vmatpush1.msra.mxu0 %v2581
        %2746 = vmatprep.subr.mxu0 %v2580
        %2747 = vmatpush1.msra.mxu0 %v2579
        %2748 = vmatprep.subr.mxu0 %v2578
        %2749 = vmatpush1.msra.mxu0 %v2577
        %2750 = vmatprep.subr.mxu0 %v2576
        %2751 = vmatpush1.msra.mxu0 %v2575
        %2752 = vmatprep.subr.mxu0 %v2574
        %2753 = vmatpush1.msra.mxu0 %v2573
        %2754 = vmatprep.subr.mxu0 %v2572
        %2755 = vmatpush1.msra.mxu0 %v2571
        %2756 = vmatprep.subr.mxu0 %v2570
        %2757 = vmatpush1.msra.mxu0 %v2569
        %2758 = vmatprep.subr.mxu0 %v2568
        %2759 = vmatpush1.msra.mxu0 %v2567
        %2760 = vmatprep.subr.mxu0 %v2566
        %2761 = vmatpush1.msra.mxu0 %v2565
        %2762 = vmatprep.subr.mxu0 %v2628
        %2763 = vmatpush2.msra.mxu0 %v2627
        %2764 = vmatprep.subr.mxu0 %v2626
        %2765 = vmatpush2.msra.mxu0 %v2625
        %2766 = vmatprep.subr.mxu0 %v2624
        %2767 = vmatpush2.msra.mxu0 %v2623
        %2768 = vmatprep.subr.mxu0 %v2622
        %2769 = vmatpush2.msra.mxu0 %v2621
        %2770 = vmatprep.subr.mxu0 %v2620
        %2771 = vmatpush2.msra.mxu0 %v2619
        %2772 = vmatprep.subr.mxu0 %v2618
        %2773 = vmatpush2.msra.mxu0 %v2617
        %2774 = vmatprep.subr.mxu0 %v2616
        %2775 = vmatpush2.msra.mxu0 %v2615
        %2776 = vmatprep.subr.mxu0 %v2614
        %2777 = vmatpush2.msra.mxu0 %v2613
        %2778 = vmatprep.subr.mxu0 %v2612
        %2779 = vmatpush2.msra.mxu0 %v2611
        %2780 = vmatprep.subr.mxu0 %v2610
        %2781 = vmatpush2.msra.mxu0 %v2609
        %2782 = vmatprep.subr.mxu0 %v2608
        %2783 = vmatpush2.msra.mxu0 %v2607
        %2784 = vmatprep.subr.mxu0 %v2606
        %2785 = vmatpush2.msra.mxu0 %v2605
        %2786 = vmatprep.subr.mxu0 %v2604
        %2787 = vmatpush2.msra.mxu0 %v2603
        %2788 = vmatprep.subr.mxu0 %v2602
        %2789 = vmatpush2.msra.mxu0 %v2601
        %2790 = vmatprep.subr.mxu0 %v2600
        %2791 = vmatpush2.msra.mxu0 %v2599
        %2792 = vmatprep.subr.mxu0 %v2598
        %2793 = vmatpush2.msra.mxu0 %v2597
        %2794 = vmatprep.mubr.f32.mxu0 %v2481
        %2795 = vmatmul.mubr.f32.gmra.mxu0 %v2479
        %v2796 = vpop.f32.mrf.mxu0
        %v2797 = vadd.f32 %v2708, %v2796
        %v2798 = vpop.f32.mrf.mxu0
        %v2799 = vadd.f32 %v2710, %v2798
        %2800 = vmatprep.mubr.f32.mxu0 %v2487
        %2801 = vmatmul.mubr.f32.gmra.mxu0 %v2485
        %v2802 = vpop.f32.mrf.mxu0
        %v2803 = vadd.f32 %v2714, %v2802
        %v2804 = vpop.f32.mrf.mxu0
        %v2805 = vadd.f32 %v2716, %v2804
        %2806 = vmatprep.mubr.f32.mxu0 %v2493
        %2807 = vmatmul.mubr.f32.gmra.mxu0 %v2491
        %v2808 = vpop.f32.mrf.mxu0
        %v2809 = vadd.f32 %v2720, %v2808
        %v2810 = vpop.f32.mrf.mxu0
        %v2811 = vadd.f32 %v2722, %v2810
        %2812 = vmatprep.mubr.f32.mxu0 %v2499
        %2813 = vmatmul.mubr.f32.gmra.mxu0 %v2497
        %v2814 = vpop.f32.mrf.mxu0
        %v2815 = vadd.f32 %v2726, %v2814
        %v2816 = vpop.f32.mrf.mxu0
        %v2817 = vadd.f32 %v2728, %v2816
        %2818 = vdwg.mxu0
        %v2819 = vld [vmem:[%s15] sm:$0xff]
        %v2820 = vld [vmem:[%s15 + $0x8] sm:$0xff]
        %v2821 = vld [vmem:[%s15 + $0x10] sm:$0xff]
        %v2822 = vld [vmem:[%s15 + $0x18] sm:$0xff]
        %v2823 = vld [vmem:[%s15 + $0x20] sm:$0xff]
        %v2824 = vld [vmem:[%s15 + $0x28] sm:$0xff]
        %v2825 = vld [vmem:[%s15 + $0x30] sm:$0xff]
        %v2826 = vld [vmem:[%s15 + $0x38] sm:$0xff]
        %vm2827 = vcmask 261120
        %v2829 = vsel %vm2827, %v2819, 0
        %v2832 = vsel %vm2827, %v2820, 0
        %v2835 = vsel %vm2827, %v2821, 0
        %v2838 = vsel %vm2827, %v2822, 0
        %v2841 = vsel %vm2827, %v2823, 0
        %v2844 = vsel %vm2827, %v2824, 0
        %v2847 = vsel %vm2827, %v2825, 0
        %v2850 = vsel %vm2827, %v2826, 0
        %2852 = vmatprep.subr.mxu0 0.0
        %2853 = vmatpush1.msra.mxu0 0.0
        %2854 = vmatprep.subr.mxu0 0.0
        %2855 = vmatpush1.msra.mxu0 0.0
        %2856 = vmatprep.subr.mxu0 0.0
        %2857 = vmatpush1.msra.mxu0 0.0
        %2858 = vmatprep.subr.mxu0 0.0
        %2859 = vmatpush1.msra.mxu0 0.0
        %2860 = vmatprep.subr.mxu0 0.0
        %2861 = vmatpush1.msra.mxu0 0.0
        %2862 = vmatprep.subr.mxu0 0.0
        %2863 = vmatpush1.msra.mxu0 0.0
        %2864 = vmatprep.subr.mxu0 0.0
        %2865 = vmatpush1.msra.mxu0 0.0
        %2866 = vmatprep.subr.mxu0 0.0
        %2867 = vmatpush1.msra.mxu0 0.0
        %2868 = vmatprep.subr.mxu0 0.0
        %2869 = vmatpush1.msra.mxu0 0.0
        %2870 = vmatprep.subr.mxu0 0.0
        %2871 = vmatpush1.msra.mxu0 0.0
        %2872 = vmatprep.subr.mxu0 0.0
        %2873 = vmatpush1.msra.mxu0 0.0
        %2874 = vmatprep.subr.mxu0 0.0
        %2875 = vmatpush1.msra.mxu0 0.0
        %2876 = vmatprep.subr.mxu0 %v2817
        %2877 = vmatpush1.msra.mxu0 %v2815
        %2878 = vmatprep.subr.mxu0 %v2811
        %2879 = vmatpush1.msra.mxu0 %v2809
        %2880 = vmatprep.subr.mxu0 %v2805
        %2881 = vmatpush1.msra.mxu0 %v2803
        %2882 = vmatprep.subr.mxu0 %v2799
        %2883 = vmatpush1.msra.mxu0 %v2797
        %2884 = vmatprep.subr.mxu0 0.0
        %2885 = vmatpush2.msra.mxu0 0.0
        %2886 = vmatprep.subr.mxu0 0.0
        %2887 = vmatpush2.msra.mxu0 0.0
        %2888 = vmatprep.subr.mxu0 0.0
        %2889 = vmatpush2.msra.mxu0 0.0
        %2890 = vmatprep.subr.mxu0 0.0
        %2891 = vmatpush2.msra.mxu0 0.0
        %2892 = vmatprep.subr.mxu0 0.0
        %2893 = vmatpush2.msra.mxu0 0.0
        %2894 = vmatprep.subr.mxu0 0.0
        %2895 = vmatpush2.msra.mxu0 0.0
        %2896 = vmatprep.subr.mxu0 0.0
        %2897 = vmatpush2.msra.mxu0 0.0
        %2898 = vmatprep.subr.mxu0 0.0
        %2899 = vmatpush2.msra.mxu0 0.0
        %2900 = vmatprep.subr.mxu0 0.0
        %2901 = vmatpush2.msra.mxu0 0.0
        %2902 = vmatprep.subr.mxu0 0.0
        %2903 = vmatpush2.msra.mxu0 0.0
        %2904 = vmatprep.subr.mxu0 0.0
        %2905 = vmatpush2.msra.mxu0 0.0
        %2906 = vmatprep.subr.mxu0 0.0
        %2907 = vmatpush2.msra.mxu0 0.0
        %2908 = vmatprep.subr.mxu0 0.0
        %2909 = vmatpush2.msra.mxu0 0.0
        %2910 = vmatprep.subr.mxu0 0.0
        %2911 = vmatpush2.msra.mxu0 0.0
        %2912 = vmatprep.subr.mxu0 0.0
        %2913 = vmatpush2.msra.mxu0 0.0
        %2914 = vmatprep.subr.mxu0 0.0
        %2915 = vmatpush2.msra.mxu0 0.0
        %2916 = vmatprep.mubr.f32.mxu0 0.0
        %2917 = vmatmul.mubr.f32.gmra.mxu0 %v2829
        %v2918 = vpop.f32.mrf.mxu0
        %v2919 = vadd.f32 0.0, %v2918
        %v2920 = vpop.f32.mrf.mxu0
        %v2921 = vadd.f32 0.0, %v2920
        %2922 = vmatprep.mubr.f32.mxu0 0.0
        %2923 = vmatmul.mubr.f32.gmra.mxu0 %v2832
        %v2924 = vpop.f32.mrf.mxu0
        %v2925 = vadd.f32 0.0, %v2924
        %v2926 = vpop.f32.mrf.mxu0
        %v2927 = vadd.f32 0.0, %v2926
        %2928 = vmatprep.mubr.f32.mxu0 0.0
        %2929 = vmatmul.mubr.f32.gmra.mxu0 %v2835
        %v2930 = vpop.f32.mrf.mxu0
        %v2931 = vadd.f32 0.0, %v2930
        %v2932 = vpop.f32.mrf.mxu0
        %v2933 = vadd.f32 0.0, %v2932
        %2934 = vmatprep.mubr.f32.mxu0 0.0
        %2935 = vmatmul.mubr.f32.gmra.mxu0 %v2838
        %v2936 = vpop.f32.mrf.mxu0
        %v2937 = vadd.f32 0.0, %v2936
        %v2938 = vpop.f32.mrf.mxu0
        %v2939 = vadd.f32 0.0, %v2938
        %2940 = vmatprep.mubr.f32.mxu0 0.0
        %2941 = vmatmul.mubr.f32.gmra.mxu0 %v2841
        %v2942 = vpop.f32.mrf.mxu0
        %v2943 = vadd.f32 0.0, %v2942
        %v2944 = vpop.f32.mrf.mxu0
        %v2945 = vadd.f32 0.0, %v2944
        %2946 = vmatprep.mubr.f32.mxu0 0.0
        %2947 = vmatmul.mubr.f32.gmra.mxu0 %v2844
        %v2948 = vpop.f32.mrf.mxu0
        %v2949 = vadd.f32 0.0, %v2948
        %v2950 = vpop.f32.mrf.mxu0
        %v2951 = vadd.f32 0.0, %v2950
        %2952 = vmatprep.mubr.f32.mxu0 0.0
        %2953 = vmatmul.mubr.f32.gmra.mxu0 %v2847
        %v2954 = vpop.f32.mrf.mxu0
        %v2955 = vadd.f32 0.0, %v2954
        %v2956 = vpop.f32.mrf.mxu0
        %v2957 = vadd.f32 0.0, %v2956
        %2958 = vmatprep.mubr.f32.mxu0 0.0
        %2959 = vmatmul.mubr.f32.gmra.mxu0 %v2850
        %v2960 = vpop.f32.mrf.mxu0
        %v2961 = vadd.f32 0.0, %v2960
        %v2962 = vpop.f32.mrf.mxu0
        %v2963 = vadd.f32 0.0, %v2962
        %2964 = vdwg.mxu0
        %v2965 = vld [vmem:[#allocation7] sm:$0xff]
        %v2966 = vld [vmem:[#allocation7 + $0x8] sm:$0xff]
        %v2967 = vld [vmem:[#allocation7 + $0x10] sm:$0xff]
        %v2968 = vld [vmem:[#allocation7 + $0x18] sm:$0xff]
        %v2969 = vld [vmem:[#allocation7 + $0x20] sm:$0xff]
        %v2970 = vld [vmem:[#allocation7 + $0x28] sm:$0xff]
        %v2971 = vld [vmem:[#allocation7 + $0x30] sm:$0xff]
        %v2972 = vld [vmem:[#allocation7 + $0x38] sm:$0xff]
        %v2973 = vld [vmem:[#allocation7 + $0x40] sm:$0xff]
        %v2974 = vld [vmem:[#allocation7 + $0x48] sm:$0xff]
        %v2975 = vld [vmem:[#allocation7 + $0x50] sm:$0xff]
        %v2976 = vld [vmem:[#allocation7 + $0x58] sm:$0xff]
        %v2977 = vld [vmem:[#allocation7 + $0x60] sm:$0xff]
        %v2978 = vld [vmem:[#allocation7 + $0x68] sm:$0xff]
        %v2979 = vld [vmem:[#allocation7 + $0x70] sm:$0xff]
        %v2980 = vld [vmem:[#allocation7 + $0x78] sm:$0xff]
        %v2981 = vld [vmem:[#allocation7 + $0x80] sm:$0xff]
        %v2982 = vld [vmem:[#allocation7 + $0x88] sm:$0xff]
        %v2983 = vld [vmem:[#allocation7 + $0x90] sm:$0xff]
        %v2984 = vld [vmem:[#allocation7 + $0x98] sm:$0xff]
        %v2985 = vld [vmem:[#allocation7 + $0xa0] sm:$0xff]
        %v2986 = vld [vmem:[#allocation7 + $0xa8] sm:$0xff]
        %v2987 = vld [vmem:[#allocation7 + $0xb0] sm:$0xff]
        %v2988 = vld [vmem:[#allocation7 + $0xb8] sm:$0xff]
        %v2989 = vld [vmem:[#allocation7 + $0xc0] sm:$0xff]
        %v2990 = vld [vmem:[#allocation7 + $0xc8] sm:$0xff]
        %v2991 = vld [vmem:[#allocation7 + $0xd0] sm:$0xff]
        %v2992 = vld [vmem:[#allocation7 + $0xd8] sm:$0xff]
        %v2993 = vld [vmem:[#allocation7 + $0xe0] sm:$0xff]
        %v2994 = vld [vmem:[#allocation7 + $0xe8] sm:$0xff]
        %v2995 = vld [vmem:[#allocation7 + $0xf0] sm:$0xff]
        %v2996 = vld [vmem:[#allocation7 + $0xf8] sm:$0xff]
        %v2997 = vld [vmem:[#allocation7 + $0x100] sm:$0xff]
        %v2998 = vld [vmem:[#allocation7 + $0x108] sm:$0xff]
        %v2999 = vld [vmem:[#allocation7 + $0x110] sm:$0xff]
        %v3000 = vld [vmem:[#allocation7 + $0x118] sm:$0xff]
        %v3001 = vld [vmem:[#allocation7 + $0x120] sm:$0xff]
        %v3002 = vld [vmem:[#allocation7 + $0x128] sm:$0xff]
        %v3003 = vld [vmem:[#allocation7 + $0x130] sm:$0xff]
        %v3004 = vld [vmem:[#allocation7 + $0x138] sm:$0xff]
        %v3005 = vld [vmem:[#allocation7 + $0x140] sm:$0xff]
        %v3006 = vld [vmem:[#allocation7 + $0x148] sm:$0xff]
        %v3007 = vld [vmem:[#allocation7 + $0x150] sm:$0xff]
        %v3008 = vld [vmem:[#allocation7 + $0x158] sm:$0xff]
        %v3009 = vld [vmem:[#allocation7 + $0x160] sm:$0xff]
        %v3010 = vld [vmem:[#allocation7 + $0x168] sm:$0xff]
        %v3011 = vld [vmem:[#allocation7 + $0x170] sm:$0xff]
        %v3012 = vld [vmem:[#allocation7 + $0x178] sm:$0xff]
        %v3013 = vld [vmem:[#allocation7 + $0x180] sm:$0xff]
        %v3014 = vld [vmem:[#allocation7 + $0x188] sm:$0xff]
        %v3015 = vld [vmem:[#allocation7 + $0x190] sm:$0xff]
        %v3016 = vld [vmem:[#allocation7 + $0x198] sm:$0xff]
        %v3017 = vld [vmem:[#allocation7 + $0x1a0] sm:$0xff]
        %v3018 = vld [vmem:[#allocation7 + $0x1a8] sm:$0xff]
        %v3019 = vld [vmem:[#allocation7 + $0x1b0] sm:$0xff]
        %v3020 = vld [vmem:[#allocation7 + $0x1b8] sm:$0xff]
        %v3021 = vld [vmem:[#allocation7 + $0x1c0] sm:$0xff]
        %v3022 = vld [vmem:[#allocation7 + $0x1c8] sm:$0xff]
        %v3023 = vld [vmem:[#allocation7 + $0x1d0] sm:$0xff]
        %v3024 = vld [vmem:[#allocation7 + $0x1d8] sm:$0xff]
        %v3025 = vld [vmem:[#allocation7 + $0x1e0] sm:$0xff]
        %v3026 = vld [vmem:[#allocation7 + $0x1e8] sm:$0xff]
        %v3027 = vld [vmem:[#allocation7 + $0x1f0] sm:$0xff]
        %v3028 = vld [vmem:[#allocation7 + $0x1f8] sm:$0xff]
        %v3029 = vld [vmem:[#allocation7 + $0x200] sm:$0xff]
        %v3030 = vld [vmem:[#allocation7 + $0x208] sm:$0xff]
        %v3031 = vld [vmem:[#allocation7 + $0x210] sm:$0xff]
        %v3032 = vld [vmem:[#allocation7 + $0x218] sm:$0xff]
        %v3033 = vld [vmem:[#allocation7 + $0x220] sm:$0xff]
        %v3034 = vld [vmem:[#allocation7 + $0x228] sm:$0xff]
        %v3035 = vld [vmem:[#allocation7 + $0x230] sm:$0xff]
        %v3036 = vld [vmem:[#allocation7 + $0x238] sm:$0xff]
        %v3037 = vld [vmem:[#allocation7 + $0x240] sm:$0xff]
        %v3038 = vld [vmem:[#allocation7 + $0x248] sm:$0xff]
        %v3039 = vld [vmem:[#allocation7 + $0x250] sm:$0xff]
        %v3040 = vld [vmem:[#allocation7 + $0x258] sm:$0xff]
        %v3041 = vld [vmem:[#allocation7 + $0x260] sm:$0xff]
        %v3042 = vld [vmem:[#allocation7 + $0x268] sm:$0xff]
        %v3043 = vld [vmem:[#allocation7 + $0x270] sm:$0xff]
        %v3044 = vld [vmem:[#allocation7 + $0x278] sm:$0xff]
        %v3045 = vld [vmem:[#allocation7 + $0x280] sm:$0xff]
        %v3046 = vld [vmem:[#allocation7 + $0x288] sm:$0xff]
        %v3047 = vld [vmem:[#allocation7 + $0x290] sm:$0xff]
        %v3048 = vld [vmem:[#allocation7 + $0x298] sm:$0xff]
        %v3049 = vld [vmem:[#allocation7 + $0x2a0] sm:$0xff]
        %v3050 = vld [vmem:[#allocation7 + $0x2a8] sm:$0xff]
        %v3051 = vld [vmem:[#allocation7 + $0x2b0] sm:$0xff]
        %v3052 = vld [vmem:[#allocation7 + $0x2b8] sm:$0xff]
        %v3053 = vld [vmem:[#allocation7 + $0x2c0] sm:$0xff]
        %v3054 = vld [vmem:[#allocation7 + $0x2c8] sm:$0xff]
        %v3055 = vld [vmem:[#allocation7 + $0x2d0] sm:$0xff]
        %v3056 = vld [vmem:[#allocation7 + $0x2d8] sm:$0xff]
        %v3057 = vld [vmem:[#allocation7 + $0x2e0] sm:$0xff]
        %v3058 = vld [vmem:[#allocation7 + $0x2e8] sm:$0xff]
        %v3059 = vld [vmem:[#allocation7 + $0x2f0] sm:$0xff]
        %v3060 = vld [vmem:[#allocation7 + $0x2f8] sm:$0xff]
        %v3061 = vld [vmem:[#allocation7 + $0x300] sm:$0xff]
        %v3062 = vld [vmem:[#allocation7 + $0x308] sm:$0xff]
        %v3063 = vld [vmem:[#allocation7 + $0x310] sm:$0xff]
        %v3064 = vld [vmem:[#allocation7 + $0x318] sm:$0xff]
        %v3065 = vld [vmem:[#allocation7 + $0x320] sm:$0xff]
        %v3066 = vld [vmem:[#allocation7 + $0x328] sm:$0xff]
        %v3067 = vld [vmem:[#allocation7 + $0x330] sm:$0xff]
        %v3068 = vld [vmem:[#allocation7 + $0x338] sm:$0xff]
        %v3069 = vld [vmem:[#allocation7 + $0x340] sm:$0xff]
        %v3070 = vld [vmem:[#allocation7 + $0x348] sm:$0xff]
        %v3071 = vld [vmem:[#allocation7 + $0x350] sm:$0xff]
        %v3072 = vld [vmem:[#allocation7 + $0x358] sm:$0xff]
        %v3073 = vld [vmem:[#allocation7 + $0x360] sm:$0xff]
        %v3074 = vld [vmem:[#allocation7 + $0x368] sm:$0xff]
        %v3075 = vld [vmem:[#allocation7 + $0x370] sm:$0xff]
        %v3076 = vld [vmem:[#allocation7 + $0x378] sm:$0xff]
        %v3077 = vld [vmem:[#allocation7 + $0x380] sm:$0xff]
        %v3078 = vld [vmem:[#allocation7 + $0x388] sm:$0xff]
        %v3079 = vld [vmem:[#allocation7 + $0x390] sm:$0xff]
        %v3080 = vld [vmem:[#allocation7 + $0x398] sm:$0xff]
        %v3081 = vld [vmem:[#allocation7 + $0x3a0] sm:$0xff]
        %v3082 = vld [vmem:[#allocation7 + $0x3a8] sm:$0xff]
        %v3083 = vld [vmem:[#allocation7 + $0x3b0] sm:$0xff]
        %v3084 = vld [vmem:[#allocation7 + $0x3b8] sm:$0xff]
        %v3085 = vld [vmem:[#allocation7 + $0x3c0] sm:$0xff]
        %v3086 = vld [vmem:[#allocation7 + $0x3c8] sm:$0xff]
        %v3087 = vld [vmem:[#allocation7 + $0x3d0] sm:$0xff]
        %v3088 = vld [vmem:[#allocation7 + $0x3d8] sm:$0xff]
        %v3089 = vld [vmem:[#allocation7 + $0x3e0] sm:$0xff]
        %v3090 = vld [vmem:[#allocation7 + $0x3e8] sm:$0xff]
        %v3091 = vld [vmem:[#allocation7 + $0x3f0] sm:$0xff]
        %v3092 = vld [vmem:[#allocation7 + $0x3f8] sm:$0xff]
        %3093 = vmatprep.subr.mxu0 %v3026
        %3094 = vmatpush1.msra.mxu0 %v3025
        %3095 = vmatprep.subr.mxu0 %v3022
        %3096 = vmatpush1.msra.mxu0 %v3021
        %3097 = vmatprep.subr.mxu0 %v3018
        %3098 = vmatpush1.msra.mxu0 %v3017
        %3099 = vmatprep.subr.mxu0 %v3014
        %3100 = vmatpush1.msra.mxu0 %v3013
        %3101 = vmatprep.subr.mxu0 %v3010
        %3102 = vmatpush1.msra.mxu0 %v3009
        %3103 = vmatprep.subr.mxu0 %v3006
        %3104 = vmatpush1.msra.mxu0 %v3005
        %3105 = vmatprep.subr.mxu0 %v3002
        %3106 = vmatpush1.msra.mxu0 %v3001
        %3107 = vmatprep.subr.mxu0 %v2998
        %3108 = vmatpush1.msra.mxu0 %v2997
        %3109 = vmatprep.subr.mxu0 %v2994
        %3110 = vmatpush1.msra.mxu0 %v2993
        %3111 = vmatprep.subr.mxu0 %v2990
        %3112 = vmatpush1.msra.mxu0 %v2989
        %3113 = vmatprep.subr.mxu0 %v2986
        %3114 = vmatpush1.msra.mxu0 %v2985
        %3115 = vmatprep.subr.mxu0 %v2982
        %3116 = vmatpush1.msra.mxu0 %v2981
        %3117 = vmatprep.subr.mxu0 %v2978
        %3118 = vmatpush1.msra.mxu0 %v2977
        %3119 = vmatprep.subr.mxu0 %v2974
        %3120 = vmatpush1.msra.mxu0 %v2973
        %3121 = vmatprep.subr.mxu0 %v2970
        %3122 = vmatpush1.msra.mxu0 %v2969
        %3123 = vmatprep.subr.mxu0 %v2966
        %3124 = vmatpush1.msra.mxu0 %v2965
        %3125 = vmatprep.subr.mxu0 %v3090
        %3126 = vmatpush2.msra.mxu0 %v3089
        %3127 = vmatprep.subr.mxu0 %v3086
        %3128 = vmatpush2.msra.mxu0 %v3085
        %3129 = vmatprep.subr.mxu0 %v3082
        %3130 = vmatpush2.msra.mxu0 %v3081
        %3131 = vmatprep.subr.mxu0 %v3078
        %3132 = vmatpush2.msra.mxu0 %v3077
        %3133 = vmatprep.subr.mxu0 %v3074
        %3134 = vmatpush2.msra.mxu0 %v3073
        %3135 = vmatprep.subr.mxu0 %v3070
        %3136 = vmatpush2.msra.mxu0 %v3069
        %3137 = vmatprep.subr.mxu0 %v3066
        %3138 = vmatpush2.msra.mxu0 %v3065
        %3139 = vmatprep.subr.mxu0 %v3062
        %3140 = vmatpush2.msra.mxu0 %v3061
        %3141 = vmatprep.subr.mxu0 %v3058
        %3142 = vmatpush2.msra.mxu0 %v3057
        %3143 = vmatprep.subr.mxu0 %v3054
        %3144 = vmatpush2.msra.mxu0 %v3053
        %3145 = vmatprep.subr.mxu0 %v3050
        %3146 = vmatpush2.msra.mxu0 %v3049
        %3147 = vmatprep.subr.mxu0 %v3046
        %3148 = vmatpush2.msra.mxu0 %v3045
        %3149 = vmatprep.subr.mxu0 %v3042
        %3150 = vmatpush2.msra.mxu0 %v3041
        %3151 = vmatprep.subr.mxu0 %v3038
        %3152 = vmatpush2.msra.mxu0 %v3037
        %3153 = vmatprep.subr.mxu0 %v3034
        %3154 = vmatpush2.msra.mxu0 %v3033
        %3155 = vmatprep.subr.mxu0 %v3030
        %3156 = vmatpush2.msra.mxu0 %v3029
        %3157 = vmatprep.mubr.f32.mxu0 %v2921
        %3158 = vmatmul.mubr.f32.gmra.mxu0 %v2919
        %v3159 = vpop.f32.mrf.mxu0
        %v3160 = vadd.f32 0.0, %v3159
        %v3161 = vpop.f32.mrf.mxu0
        %v3162 = vadd.f32 0.0, %v3161
        %3163 = vmatprep.mubr.f32.mxu0 %v2927
        %3164 = vmatmul.mubr.f32.gmra.mxu0 %v2925
        %v3165 = vpop.f32.mrf.mxu0
        %v3166 = vadd.f32 0.0, %v3165
        %v3167 = vpop.f32.mrf.mxu0
        %v3168 = vadd.f32 0.0, %v3167
        %3169 = vmatprep.mubr.f32.mxu0 %v2933
        %3170 = vmatmul.mubr.f32.gmra.mxu0 %v2931
        %v3171 = vpop.f32.mrf.mxu0
        %v3172 = vadd.f32 0.0, %v3171
        %v3173 = vpop.f32.mrf.mxu0
        %v3174 = vadd.f32 0.0, %v3173
        %3175 = vmatprep.mubr.f32.mxu0 %v2939
        %3176 = vmatmul.mubr.f32.gmra.mxu0 %v2937
        %v3177 = vpop.f32.mrf.mxu0
        %v3178 = vadd.f32 0.0, %v3177
        %v3179 = vpop.f32.mrf.mxu0
        %v3180 = vadd.f32 0.0, %v3179
        %3181 = vmatprep.mubr.f32.mxu0 %v2945
        %3182 = vmatmul.mubr.f32.gmra.mxu0 %v2943
        %v3183 = vpop.f32.mrf.mxu0
        %v3184 = vadd.f32 0.0, %v3183
        %v3185 = vpop.f32.mrf.mxu0
        %v3186 = vadd.f32 0.0, %v3185
        %3187 = vmatprep.mubr.f32.mxu0 %v2951
        %3188 = vmatmul.mubr.f32.gmra.mxu0 %v2949
        %v3189 = vpop.f32.mrf.mxu0
        %v3190 = vadd.f32 0.0, %v3189
        %v3191 = vpop.f32.mrf.mxu0
        %v3192 = vadd.f32 0.0, %v3191
        %3193 = vmatprep.mubr.f32.mxu0 %v2957
        %3194 = vmatmul.mubr.f32.gmra.mxu0 %v2955
        %v3195 = vpop.f32.mrf.mxu0
        %v3196 = vadd.f32 0.0, %v3195
        %v3197 = vpop.f32.mrf.mxu0
        %v3198 = vadd.f32 0.0, %v3197
        %3199 = vmatprep.mubr.f32.mxu0 %v2963
        %3200 = vmatmul.mubr.f32.gmra.mxu0 %v2961
        %v3201 = vpop.f32.mrf.mxu0
        %v3202 = vadd.f32 0.0, %v3201
        %v3203 = vpop.f32.mrf.mxu0
        %v3204 = vadd.f32 0.0, %v3203
        %3205 = vdwg.mxu0
        %3206 = vmatprep.subr.mxu0 %v3028
        %3207 = vmatpush1.msra.mxu0 %v3027
        %3208 = vmatprep.subr.mxu0 %v3024
        %3209 = vmatpush1.msra.mxu0 %v3023
        %3210 = vmatprep.subr.mxu0 %v3020
        %3211 = vmatpush1.msra.mxu0 %v3019
        %3212 = vmatprep.subr.mxu0 %v3016
        %3213 = vmatpush1.msra.mxu0 %v3015
        %3214 = vmatprep.subr.mxu0 %v3012
        %3215 = vmatpush1.msra.mxu0 %v3011
        %3216 = vmatprep.subr.mxu0 %v3008
        %3217 = vmatpush1.msra.mxu0 %v3007
        %3218 = vmatprep.subr.mxu0 %v3004
        %3219 = vmatpush1.msra.mxu0 %v3003
        %3220 = vmatprep.subr.mxu0 %v3000
        %3221 = vmatpush1.msra.mxu0 %v2999
        %3222 = vmatprep.subr.mxu0 %v2996
        %3223 = vmatpush1.msra.mxu0 %v2995
        %3224 = vmatprep.subr.mxu0 %v2992
        %3225 = vmatpush1.msra.mxu0 %v2991
        %3226 = vmatprep.subr.mxu0 %v2988
        %3227 = vmatpush1.msra.mxu0 %v2987
        %3228 = vmatprep.subr.mxu0 %v2984
        %3229 = vmatpush1.msra.mxu0 %v2983
        %3230 = vmatprep.subr.mxu0 %v2980
        %3231 = vmatpush1.msra.mxu0 %v2979
        %3232 = vmatprep.subr.mxu0 %v2976
        %3233 = vmatpush1.msra.mxu0 %v2975
        %3234 = vmatprep.subr.mxu0 %v2972
        %3235 = vmatpush1.msra.mxu0 %v2971
        %3236 = vmatprep.subr.mxu0 %v2968
        %3237 = vmatpush1.msra.mxu0 %v2967
        %3238 = vmatprep.subr.mxu0 %v3092
        %3239 = vmatpush2.msra.mxu0 %v3091
        %3240 = vmatprep.subr.mxu0 %v3088
        %3241 = vmatpush2.msra.mxu0 %v3087
        %3242 = vmatprep.subr.mxu0 %v3084
        %3243 = vmatpush2.msra.mxu0 %v3083
        %3244 = vmatprep.subr.mxu0 %v3080
        %3245 = vmatpush2.msra.mxu0 %v3079
        %3246 = vmatprep.subr.mxu0 %v3076
        %3247 = vmatpush2.msra.mxu0 %v3075
        %3248 = vmatprep.subr.mxu0 %v3072
        %3249 = vmatpush2.msra.mxu0 %v3071
        %3250 = vmatprep.subr.mxu0 %v3068
        %3251 = vmatpush2.msra.mxu0 %v3067
        %3252 = vmatprep.subr.mxu0 %v3064
        %3253 = vmatpush2.msra.mxu0 %v3063
        %3254 = vmatprep.subr.mxu0 %v3060
        %3255 = vmatpush2.msra.mxu0 %v3059
        %3256 = vmatprep.subr.mxu0 %v3056
        %3257 = vmatpush2.msra.mxu0 %v3055
        %3258 = vmatprep.subr.mxu0 %v3052
        %3259 = vmatpush2.msra.mxu0 %v3051
        %3260 = vmatprep.subr.mxu0 %v3048
        %3261 = vmatpush2.msra.mxu0 %v3047
        %3262 = vmatprep.subr.mxu0 %v3044
        %3263 = vmatpush2.msra.mxu0 %v3043
        %3264 = vmatprep.subr.mxu0 %v3040
        %3265 = vmatpush2.msra.mxu0 %v3039
        %3266 = vmatprep.subr.mxu0 %v3036
        %3267 = vmatpush2.msra.mxu0 %v3035
        %3268 = vmatprep.subr.mxu0 %v3032
        %3269 = vmatpush2.msra.mxu0 %v3031
        %3270 = vmatprep.mubr.f32.mxu0 %v2921
        %3271 = vmatmul.mubr.f32.gmra.mxu0 %v2919
        %v3272 = vpop.f32.mrf.mxu0
        %v3273 = vadd.f32 0.0, %v3272
        %v3274 = vpop.f32.mrf.mxu0
        %v3275 = vadd.f32 0.0, %v3274
        %3276 = vmatprep.mubr.f32.mxu0 %v2927
        %3277 = vmatmul.mubr.f32.gmra.mxu0 %v2925
        %v3278 = vpop.f32.mrf.mxu0
        %v3279 = vadd.f32 0.0, %v3278
        %v3280 = vpop.f32.mrf.mxu0
        %v3281 = vadd.f32 0.0, %v3280
        %3282 = vmatprep.mubr.f32.mxu0 %v2933
        %3283 = vmatmul.mubr.f32.gmra.mxu0 %v2931
        %v3284 = vpop.f32.mrf.mxu0
        %v3285 = vadd.f32 0.0, %v3284
        %v3286 = vpop.f32.mrf.mxu0
        %v3287 = vadd.f32 0.0, %v3286
        %3288 = vmatprep.mubr.f32.mxu0 %v2939
        %3289 = vmatmul.mubr.f32.gmra.mxu0 %v2937
        %v3290 = vpop.f32.mrf.mxu0
        %v3291 = vadd.f32 0.0, %v3290
        %v3292 = vpop.f32.mrf.mxu0
        %v3293 = vadd.f32 0.0, %v3292
        %3294 = vmatprep.mubr.f32.mxu0 %v2945
        %3295 = vmatmul.mubr.f32.gmra.mxu0 %v2943
        %v3296 = vpop.f32.mrf.mxu0
        %v3297 = vadd.f32 0.0, %v3296
        %v3298 = vpop.f32.mrf.mxu0
        %v3299 = vadd.f32 0.0, %v3298
        %3300 = vmatprep.mubr.f32.mxu0 %v2951
        %3301 = vmatmul.mubr.f32.gmra.mxu0 %v2949
        %v3302 = vpop.f32.mrf.mxu0
        %v3303 = vadd.f32 0.0, %v3302
        %v3304 = vpop.f32.mrf.mxu0
        %v3305 = vadd.f32 0.0, %v3304
        %3306 = vmatprep.mubr.f32.mxu0 %v2957
        %3307 = vmatmul.mubr.f32.gmra.mxu0 %v2955
        %v3308 = vpop.f32.mrf.mxu0
        %v3309 = vadd.f32 0.0, %v3308
        %v3310 = vpop.f32.mrf.mxu0
        %v3311 = vadd.f32 0.0, %v3310
        %3312 = vmatprep.mubr.f32.mxu0 %v2963
        %3313 = vmatmul.mubr.f32.gmra.mxu0 %v2961
        %v3314 = vpop.f32.mrf.mxu0
        %v3315 = vadd.f32 0.0, %v3314
        %v3316 = vpop.f32.mrf.mxu0
        %v3317 = vadd.f32 0.0, %v3316
        %3318 = vdwg.mxu0
        %v3319 = vld [vmem:[%s21] sm:$0x1]
        %v3320 = vld [vmem:[%s17] sm:$0xff]
        %v3321 = vld [vmem:[%s17 + $0x8] sm:$0xff]
        %v3322 = vld [vmem:[%s17 + $0x10] sm:$0xff]
        %v3323 = vld [vmem:[%s17 + $0x18] sm:$0xff]
        %v3324 = vld [vmem:[%s17 + $0x20] sm:$0xff]
        %v3325 = vld [vmem:[%s17 + $0x28] sm:$0xff]
        %v3326 = vld [vmem:[%s17 + $0x30] sm:$0xff]
        %v3327 = vld [vmem:[%s17 + $0x38] sm:$0xff]
        %v3328 = vld [vmem:[%s17 + $0x40] sm:$0xff]
        %v3329 = vld [vmem:[%s17 + $0x48] sm:$0xff]
        %v3330 = vld [vmem:[%s17 + $0x50] sm:$0xff]
        %v3331 = vld [vmem:[%s17 + $0x58] sm:$0xff]
        %v3332 = vld [vmem:[%s17 + $0x60] sm:$0xff]
        %v3333 = vld [vmem:[%s17 + $0x68] sm:$0xff]
        %v3334 = vld [vmem:[%s17 + $0x70] sm:$0xff]
        %v3335 = vld [vmem:[%s17 + $0x78] sm:$0xff]
        %v3336 = vld [vmem:[%s17 + $0x80] sm:$0xff]
        %v3337 = vld [vmem:[%s17 + $0x88] sm:$0xff]
        %v3338 = vld [vmem:[%s17 + $0x90] sm:$0xff]
        %v3339 = vld [vmem:[%s17 + $0x98] sm:$0xff]
        %v3340 = vld [vmem:[%s17 + $0xa0] sm:$0xff]
        %v3341 = vld [vmem:[%s17 + $0xa8] sm:$0xff]
        %v3342 = vld [vmem:[%s17 + $0xb0] sm:$0xff]
        %v3343 = vld [vmem:[%s17 + $0xb8] sm:$0xff]
        %v3344 = vld [vmem:[%s17 + $0xc0] sm:$0xff]
        %v3345 = vld [vmem:[%s17 + $0xc8] sm:$0xff]
        %v3346 = vld [vmem:[%s17 + $0xd0] sm:$0xff]
        %v3347 = vld [vmem:[%s17 + $0xd8] sm:$0xff]
        %v3348 = vld [vmem:[%s17 + $0xe0] sm:$0xff]
        %v3349 = vld [vmem:[%s17 + $0xe8] sm:$0xff]
        %v3350 = vld [vmem:[%s17 + $0xf0] sm:$0xff]
        %v3351 = vld [vmem:[%s17 + $0xf8] sm:$0xff]
        %v3352 = vld [vmem:[%s17 + $0x100] sm:$0xff]
        %v3353 = vld [vmem:[%s17 + $0x108] sm:$0xff]
        %v3354 = vld [vmem:[%s17 + $0x110] sm:$0xff]
        %v3355 = vld [vmem:[%s17 + $0x118] sm:$0xff]
        %v3356 = vld [vmem:[%s17 + $0x120] sm:$0xff]
        %v3357 = vld [vmem:[%s17 + $0x128] sm:$0xff]
        %v3358 = vld [vmem:[%s17 + $0x130] sm:$0xff]
        %v3359 = vld [vmem:[%s17 + $0x138] sm:$0xff]
        %v3360 = vld [vmem:[%s17 + $0x140] sm:$0xff]
        %v3361 = vld [vmem:[%s17 + $0x148] sm:$0xff]
        %v3362 = vld [vmem:[%s17 + $0x150] sm:$0xff]
        %v3363 = vld [vmem:[%s17 + $0x158] sm:$0xff]
        %v3364 = vld [vmem:[%s17 + $0x160] sm:$0xff]
        %v3365 = vld [vmem:[%s17 + $0x168] sm:$0xff]
        %v3366 = vld [vmem:[%s17 + $0x170] sm:$0xff]
        %v3367 = vld [vmem:[%s17 + $0x178] sm:$0xff]
        %v3368 = vld [vmem:[%s17 + $0x180] sm:$0xff]
        %v3369 = vld [vmem:[%s17 + $0x188] sm:$0xff]
        %v3370 = vld [vmem:[%s17 + $0x190] sm:$0xff]
        %v3371 = vld [vmem:[%s17 + $0x198] sm:$0xff]
        %v3372 = vld [vmem:[%s17 + $0x1a0] sm:$0xff]
        %v3373 = vld [vmem:[%s17 + $0x1a8] sm:$0xff]
        %v3374 = vld [vmem:[%s17 + $0x1b0] sm:$0xff]
        %v3375 = vld [vmem:[%s17 + $0x1b8] sm:$0xff]
        %v3376 = vld [vmem:[%s17 + $0x1c0] sm:$0xff]
        %v3377 = vld [vmem:[%s17 + $0x1c8] sm:$0xff]
        %v3378 = vld [vmem:[%s17 + $0x1d0] sm:$0xff]
        %v3379 = vld [vmem:[%s17 + $0x1d8] sm:$0xff]
        %v3380 = vld [vmem:[%s17 + $0x1e0] sm:$0xff]
        %v3381 = vld [vmem:[%s17 + $0x1e8] sm:$0xff]
        %v3382 = vld [vmem:[%s17 + $0x1f0] sm:$0xff]
        %v3383 = vld [vmem:[%s17 + $0x1f8] sm:$0xff]
        %s3384 = vtos %v3319
        %v3385 = vstv %s3384
        %3386 = vmatprep.subr.mxu0 0.0
        %3387 = vmatpush1.msra.mxu0 %v3335
        %3388 = vmatprep.subr.mxu0 0.0
        %3389 = vmatpush1.msra.mxu0 %v3334
        %3390 = vmatprep.subr.mxu0 0.0
        %3391 = vmatpush1.msra.mxu0 %v3333
        %3392 = vmatprep.subr.mxu0 0.0
        %3393 = vmatpush1.msra.mxu0 %v3332
        %3394 = vmatprep.subr.mxu0 0.0
        %3395 = vmatpush1.msra.mxu0 %v3331
        %3396 = vmatprep.subr.mxu0 0.0
        %3397 = vmatpush1.msra.mxu0 %v3330
        %3398 = vmatprep.subr.mxu0 0.0
        %3399 = vmatpush1.msra.mxu0 %v3329
        %3400 = vmatprep.subr.mxu0 0.0
        %3401 = vmatpush1.msra.mxu0 %v3328
        %3402 = vmatprep.subr.mxu0 0.0
        %3403 = vmatpush1.msra.mxu0 %v3327
        %3404 = vmatprep.subr.mxu0 0.0
        %3405 = vmatpush1.msra.mxu0 %v3326
        %3406 = vmatprep.subr.mxu0 0.0
        %3407 = vmatpush1.msra.mxu0 %v3325
        %3408 = vmatprep.subr.mxu0 0.0
        %3409 = vmatpush1.msra.mxu0 %v3324
        %3410 = vmatprep.subr.mxu0 0.0
        %3411 = vmatpush1.msra.mxu0 %v3323
        %3412 = vmatprep.subr.mxu0 0.0
        %3413 = vmatpush1.msra.mxu0 %v3322
        %3414 = vmatprep.subr.mxu0 0.0
        %3415 = vmatpush1.msra.mxu0 %v3321
        %3416 = vmatprep.subr.mxu0 0.0
        %3417 = vmatpush1.msra.mxu0 %v3320
        %3418 = vmatprep.subr.mxu0 0.0
        %3419 = vmatpush2.msra.mxu0 %v3351
        %3420 = vmatprep.subr.mxu0 0.0
        %3421 = vmatpush2.msra.mxu0 %v3350
        %3422 = vmatprep.subr.mxu0 0.0
        %3423 = vmatpush2.msra.mxu0 %v3349
        %3424 = vmatprep.subr.mxu0 0.0
        %3425 = vmatpush2.msra.mxu0 %v3348
        %3426 = vmatprep.subr.mxu0 0.0
        %3427 = vmatpush2.msra.mxu0 %v3347
        %3428 = vmatprep.subr.mxu0 0.0
        %3429 = vmatpush2.msra.mxu0 %v3346
        %3430 = vmatprep.subr.mxu0 0.0
        %3431 = vmatpush2.msra.mxu0 %v3345
        %3432 = vmatprep.subr.mxu0 0.0
        %3433 = vmatpush2.msra.mxu0 %v3344
        %3434 = vmatprep.subr.mxu0 0.0
        %3435 = vmatpush2.msra.mxu0 %v3343
        %3436 = vmatprep.subr.mxu0 0.0
        %3437 = vmatpush2.msra.mxu0 %v3342
        %3438 = vmatprep.subr.mxu0 0.0
        %3439 = vmatpush2.msra.mxu0 %v3341
        %3440 = vmatprep.subr.mxu0 0.0
        %3441 = vmatpush2.msra.mxu0 %v3340
        %3442 = vmatprep.subr.mxu0 0.0
        %3443 = vmatpush2.msra.mxu0 %v3339
        %3444 = vmatprep.subr.mxu0 0.0
        %3445 = vmatpush2.msra.mxu0 %v3338
        %3446 = vmatprep.subr.mxu0 0.0
        %3447 = vmatpush2.msra.mxu0 %v3337
        %3448 = vmatprep.subr.mxu0 0.0
        %3449 = vmatpush2.msra.mxu0 %v3336
        %3450 = vmatprep.mubr.f32.mxu0 %v3162
        %3451 = vmatmul.mubr.f32.gmra.mxu0 %v3160
        %v3452 = vpop.f32.mrf.mxu0
        %v3453 = vadd.f32 %v3385, %v3452
        %v3454 = vpop.f32.mrf.mxu0
        %3455 = vmatprep.mubr.f32.mxu0 %v3168
        %3456 = vmatmul.mubr.f32.gmra.mxu0 %v3166
        %v3457 = vpop.f32.mrf.mxu0
        %v3458 = vadd.f32 %v3385, %v3457
        %v3459 = vpop.f32.mrf.mxu0
        %3460 = vmatprep.mubr.f32.mxu0 %v3174
        %3461 = vmatmul.mubr.f32.gmra.mxu0 %v3172
        %v3462 = vpop.f32.mrf.mxu0
        %v3463 = vadd.f32 %v3385, %v3462
        %v3464 = vpop.f32.mrf.mxu0
        %3465 = vmatprep.mubr.f32.mxu0 %v3180
        %3466 = vmatmul.mubr.f32.gmra.mxu0 %v3178
        %v3467 = vpop.f32.mrf.mxu0
        %v3468 = vadd.f32 %v3385, %v3467
        %v3469 = vpop.f32.mrf.mxu0
        %3470 = vmatprep.mubr.f32.mxu0 %v3186
        %3471 = vmatmul.mubr.f32.gmra.mxu0 %v3184
        %v3472 = vpop.f32.mrf.mxu0
        %v3473 = vadd.f32 %v3385, %v3472
        %v3474 = vpop.f32.mrf.mxu0
        %3475 = vmatprep.mubr.f32.mxu0 %v3192
        %3476 = vmatmul.mubr.f32.gmra.mxu0 %v3190
        %v3477 = vpop.f32.mrf.mxu0
        %v3478 = vadd.f32 %v3385, %v3477
        %v3479 = vpop.f32.mrf.mxu0
        %3480 = vmatprep.mubr.f32.mxu0 %v3198
        %3481 = vmatmul.mubr.f32.gmra.mxu0 %v3196
        %v3482 = vpop.f32.mrf.mxu0
        %v3483 = vadd.f32 %v3385, %v3482
        %v3484 = vpop.f32.mrf.mxu0
        %3485 = vmatprep.mubr.f32.mxu0 %v3204
        %3486 = vmatmul.mubr.f32.gmra.mxu0 %v3202
        %v3487 = vpop.f32.mrf.mxu0
        %v3488 = vadd.f32 %v3385, %v3487
        %v3489 = vpop.f32.mrf.mxu0
        %3490 = vdwg.mxu0
        %3491 = vmatprep.subr.mxu0 0.0
        %3492 = vmatpush1.msra.mxu0 %v3367
        %3493 = vmatprep.subr.mxu0 0.0
        %3494 = vmatpush1.msra.mxu0 %v3366
        %3495 = vmatprep.subr.mxu0 0.0
        %3496 = vmatpush1.msra.mxu0 %v3365
        %3497 = vmatprep.subr.mxu0 0.0
        %3498 = vmatpush1.msra.mxu0 %v3364
        %3499 = vmatprep.subr.mxu0 0.0
        %3500 = vmatpush1.msra.mxu0 %v3363
        %3501 = vmatprep.subr.mxu0 0.0
        %3502 = vmatpush1.msra.mxu0 %v3362
        %3503 = vmatprep.subr.mxu0 0.0
        %3504 = vmatpush1.msra.mxu0 %v3361
        %3505 = vmatprep.subr.mxu0 0.0
        %3506 = vmatpush1.msra.mxu0 %v3360
        %3507 = vmatprep.subr.mxu0 0.0
        %3508 = vmatpush1.msra.mxu0 %v3359
        %3509 = vmatprep.subr.mxu0 0.0
        %3510 = vmatpush1.msra.mxu0 %v3358
        %3511 = vmatprep.subr.mxu0 0.0
        %3512 = vmatpush1.msra.mxu0 %v3357
        %3513 = vmatprep.subr.mxu0 0.0
        %3514 = vmatpush1.msra.mxu0 %v3356
        %3515 = vmatprep.subr.mxu0 0.0
        %3516 = vmatpush1.msra.mxu0 %v3355
        %3517 = vmatprep.subr.mxu0 0.0
        %3518 = vmatpush1.msra.mxu0 %v3354
        %3519 = vmatprep.subr.mxu0 0.0
        %3520 = vmatpush1.msra.mxu0 %v3353
        %3521 = vmatprep.subr.mxu0 0.0
        %3522 = vmatpush1.msra.mxu0 %v3352
        %3523 = vmatprep.subr.mxu0 0.0
        %3524 = vmatpush2.msra.mxu0 %v3383
        %3525 = vmatprep.subr.mxu0 0.0
        %3526 = vmatpush2.msra.mxu0 %v3382
        %3527 = vmatprep.subr.mxu0 0.0
        %3528 = vmatpush2.msra.mxu0 %v3381
        %3529 = vmatprep.subr.mxu0 0.0
        %3530 = vmatpush2.msra.mxu0 %v3380
        %3531 = vmatprep.subr.mxu0 0.0
        %3532 = vmatpush2.msra.mxu0 %v3379
        %3533 = vmatprep.subr.mxu0 0.0
        %3534 = vmatpush2.msra.mxu0 %v3378
        %3535 = vmatprep.subr.mxu0 0.0
        %3536 = vmatpush2.msra.mxu0 %v3377
        %3537 = vmatprep.subr.mxu0 0.0
        %3538 = vmatpush2.msra.mxu0 %v3376
        %3539 = vmatprep.subr.mxu0 0.0
        %3540 = vmatpush2.msra.mxu0 %v3375
        %3541 = vmatprep.subr.mxu0 0.0
        %3542 = vmatpush2.msra.mxu0 %v3374
        %3543 = vmatprep.subr.mxu0 0.0
        %3544 = vmatpush2.msra.mxu0 %v3373
        %3545 = vmatprep.subr.mxu0 0.0
        %3546 = vmatpush2.msra.mxu0 %v3372
        %3547 = vmatprep.subr.mxu0 0.0
        %3548 = vmatpush2.msra.mxu0 %v3371
        %3549 = vmatprep.subr.mxu0 0.0
        %3550 = vmatpush2.msra.mxu0 %v3370
        %3551 = vmatprep.subr.mxu0 0.0
        %3552 = vmatpush2.msra.mxu0 %v3369
        %3553 = vmatprep.subr.mxu0 0.0
        %3554 = vmatpush2.msra.mxu0 %v3368
        %3555 = vmatprep.mubr.f32.mxu0 %v3275
        %3556 = vmatmul.mubr.f32.gmra.mxu0 %v3273
        %v3557 = vpop.f32.mrf.mxu0
        %v3558 = vadd.f32 %v3453, %v3557
        %v3559 = vpop.f32.mrf.mxu0
        %3560 = vmatprep.mubr.f32.mxu0 %v3281
        %3561 = vmatmul.mubr.f32.gmra.mxu0 %v3279
        %v3562 = vpop.f32.mrf.mxu0
        %v3563 = vadd.f32 %v3458, %v3562
        %v3564 = vpop.f32.mrf.mxu0
        %3565 = vmatprep.mubr.f32.mxu0 %v3287
        %3566 = vmatmul.mubr.f32.gmra.mxu0 %v3285
        %v3567 = vpop.f32.mrf.mxu0
        %v3568 = vadd.f32 %v3463, %v3567
        %v3569 = vpop.f32.mrf.mxu0
        %3570 = vmatprep.mubr.f32.mxu0 %v3293
        %3571 = vmatmul.mubr.f32.gmra.mxu0 %v3291
        %v3572 = vpop.f32.mrf.mxu0
        %v3573 = vadd.f32 %v3468, %v3572
        %v3574 = vpop.f32.mrf.mxu0
        %3575 = vmatprep.mubr.f32.mxu0 %v3299
        %3576 = vmatmul.mubr.f32.gmra.mxu0 %v3297
        %v3577 = vpop.f32.mrf.mxu0
        %v3578 = vadd.f32 %v3473, %v3577
        %v3579 = vpop.f32.mrf.mxu0
        %3580 = vmatprep.mubr.f32.mxu0 %v3305
        %3581 = vmatmul.mubr.f32.gmra.mxu0 %v3303
        %v3582 = vpop.f32.mrf.mxu0
        %v3583 = vadd.f32 %v3478, %v3582
        %v3584 = vpop.f32.mrf.mxu0
        %3585 = vmatprep.mubr.f32.mxu0 %v3311
        %3586 = vmatmul.mubr.f32.gmra.mxu0 %v3309
        %v3587 = vpop.f32.mrf.mxu0
        %v3588 = vadd.f32 %v3483, %v3587
        %v3589 = vpop.f32.mrf.mxu0
        %3590 = vmatprep.mubr.f32.mxu0 %v3317
        %3591 = vmatmul.mubr.f32.gmra.mxu0 %v3315
        %v3592 = vpop.f32.mrf.mxu0
        %v3593 = vadd.f32 %v3488, %v3592
        %v3594 = vpop.f32.mrf.mxu0
        %3595 = vdwg.mxu0
        %3596 = vst.msk [vmem:[%s720] sm:$0xff] %vm1032, %v3558
        %3597 = vst.msk [vmem:[%s720 + $0x8] sm:$0xff] %vm1032, %v3563
        %3598 = vst.msk [vmem:[%s720 + $0x10] sm:$0xff] %vm1032, %v3568
        %3599 = vst.msk [vmem:[%s720 + $0x18] sm:$0xff] %vm1032, %v3573
        %3600 = vst.msk [vmem:[%s720 + $0x20] sm:$0xff] %vm1032, %v3578
        %3601 = vst.msk [vmem:[%s720 + $0x28] sm:$0xff] %vm1032, %v3583
        %3602 = vst.msk [vmem:[%s720 + $0x30] sm:$0xff] %vm1032, %v3588
        %3603 = vst.msk [vmem:[%s720 + $0x38] sm:$0xff] %vm1032, %v3593
        %v3604 = vld [vmem:[%s18] sm:$0xff]
        %v3605 = vld [vmem:[%s18 + $0x8] sm:$0xff]
        %v3606 = vld [vmem:[%s18 + $0x10] sm:$0xff]
        %v3607 = vld [vmem:[%s18 + $0x18] sm:$0xff]
        %v3608 = vld [vmem:[%s18 + $0x20] sm:$0xff]
        %v3609 = vld [vmem:[%s18 + $0x28] sm:$0xff]
        %v3610 = vld [vmem:[%s18 + $0x30] sm:$0xff]
        %v3611 = vld [vmem:[%s18 + $0x38] sm:$0xff]
        %v3612 = vld [vmem:[%s18 + $0x40] sm:$0xff]
        %v3613 = vld [vmem:[%s18 + $0x48] sm:$0xff]
        %v3614 = vld [vmem:[%s18 + $0x50] sm:$0xff]
        %v3615 = vld [vmem:[%s18 + $0x58] sm:$0xff]
        %v3616 = vld [vmem:[%s18 + $0x60] sm:$0xff]
        %v3617 = vld [vmem:[%s18 + $0x68] sm:$0xff]
        %v3618 = vld [vmem:[%s18 + $0x70] sm:$0xff]
        %v3619 = vld [vmem:[%s18 + $0x78] sm:$0xff]
        %v3620 = vld [vmem:[%s18 + $0x80] sm:$0xff]
        %v3621 = vld [vmem:[%s18 + $0x88] sm:$0xff]
        %v3622 = vld [vmem:[%s18 + $0x90] sm:$0xff]
        %v3623 = vld [vmem:[%s18 + $0x98] sm:$0xff]
        %v3624 = vld [vmem:[%s18 + $0xa0] sm:$0xff]
        %v3625 = vld [vmem:[%s18 + $0xa8] sm:$0xff]
        %v3626 = vld [vmem:[%s18 + $0xb0] sm:$0xff]
        %v3627 = vld [vmem:[%s18 + $0xb8] sm:$0xff]
        %v3628 = vld [vmem:[%s18 + $0xc0] sm:$0xff]
        %v3629 = vld [vmem:[%s18 + $0xc8] sm:$0xff]
        %v3630 = vld [vmem:[%s18 + $0xd0] sm:$0xff]
        %v3631 = vld [vmem:[%s18 + $0xd8] sm:$0xff]
        %v3632 = vld [vmem:[%s18 + $0xe0] sm:$0xff]
        %v3633 = vld [vmem:[%s18 + $0xe8] sm:$0xff]
        %v3634 = vld [vmem:[%s18 + $0xf0] sm:$0xff]
        %v3635 = vld [vmem:[%s18 + $0xf8] sm:$0xff]
        %v3636 = vld [vmem:[%s18 + $0x100] sm:$0xff]
        %v3637 = vld [vmem:[%s18 + $0x108] sm:$0xff]
        %v3638 = vld [vmem:[%s18 + $0x110] sm:$0xff]
        %v3639 = vld [vmem:[%s18 + $0x118] sm:$0xff]
        %v3640 = vld [vmem:[%s18 + $0x120] sm:$0xff]
        %v3641 = vld [vmem:[%s18 + $0x128] sm:$0xff]
        %v3642 = vld [vmem:[%s18 + $0x130] sm:$0xff]
        %v3643 = vld [vmem:[%s18 + $0x138] sm:$0xff]
        %v3644 = vld [vmem:[%s18 + $0x140] sm:$0xff]
        %v3645 = vld [vmem:[%s18 + $0x148] sm:$0xff]
        %v3646 = vld [vmem:[%s18 + $0x150] sm:$0xff]
        %v3647 = vld [vmem:[%s18 + $0x158] sm:$0xff]
        %v3648 = vld [vmem:[%s18 + $0x160] sm:$0xff]
        %v3649 = vld [vmem:[%s18 + $0x168] sm:$0xff]
        %v3650 = vld [vmem:[%s18 + $0x170] sm:$0xff]
        %v3651 = vld [vmem:[%s18 + $0x178] sm:$0xff]
        %v3652 = vld [vmem:[%s18 + $0x180] sm:$0xff]
        %v3653 = vld [vmem:[%s18 + $0x188] sm:$0xff]
        %v3654 = vld [vmem:[%s18 + $0x190] sm:$0xff]
        %v3655 = vld [vmem:[%s18 + $0x198] sm:$0xff]
        %v3656 = vld [vmem:[%s18 + $0x1a0] sm:$0xff]
        %v3657 = vld [vmem:[%s18 + $0x1a8] sm:$0xff]
        %v3658 = vld [vmem:[%s18 + $0x1b0] sm:$0xff]
        %v3659 = vld [vmem:[%s18 + $0x1b8] sm:$0xff]
        %v3660 = vld [vmem:[%s18 + $0x1c0] sm:$0xff]
        %v3661 = vld [vmem:[%s18 + $0x1c8] sm:$0xff]
        %v3662 = vld [vmem:[%s18 + $0x1d0] sm:$0xff]
        %v3663 = vld [vmem:[%s18 + $0x1d8] sm:$0xff]
        %v3664 = vld [vmem:[%s18 + $0x1e0] sm:$0xff]
        %v3665 = vld [vmem:[%s18 + $0x1e8] sm:$0xff]
        %v3666 = vld [vmem:[%s18 + $0x1f0] sm:$0xff]
        %v3667 = vld [vmem:[%s18 + $0x1f8] sm:$0xff]
        %3668 = vrot.lane.b32.xlu0 %v3319, 127
        %v3669 = vpop.permute.xlu0 %3668
        %s3670 = vtos %v3669
        %v3671 = vstv %s3670
        %3672 = vmatprep.subr.mxu0 0.0
        %3673 = vmatpush1.msra.mxu0 %v3619
        %3674 = vmatprep.subr.mxu0 0.0
        %3675 = vmatpush1.msra.mxu0 %v3618
        %3676 = vmatprep.subr.mxu0 0.0
        %3677 = vmatpush1.msra.mxu0 %v3617
        %3678 = vmatprep.subr.mxu0 0.0
        %3679 = vmatpush1.msra.mxu0 %v3616
        %3680 = vmatprep.subr.mxu0 0.0
        %3681 = vmatpush1.msra.mxu0 %v3615
        %3682 = vmatprep.subr.mxu0 0.0
        %3683 = vmatpush1.msra.mxu0 %v3614
        %3684 = vmatprep.subr.mxu0 0.0
        %3685 = vmatpush1.msra.mxu0 %v3613
        %3686 = vmatprep.subr.mxu0 0.0
        %3687 = vmatpush1.msra.mxu0 %v3612
        %3688 = vmatprep.subr.mxu0 0.0
        %3689 = vmatpush1.msra.mxu0 %v3611
        %3690 = vmatprep.subr.mxu0 0.0
        %3691 = vmatpush1.msra.mxu0 %v3610
        %3692 = vmatprep.subr.mxu0 0.0
        %3693 = vmatpush1.msra.mxu0 %v3609
        %3694 = vmatprep.subr.mxu0 0.0
        %3695 = vmatpush1.msra.mxu0 %v3608
        %3696 = vmatprep.subr.mxu0 0.0
        %3697 = vmatpush1.msra.mxu0 %v3607
        %3698 = vmatprep.subr.mxu0 0.0
        %3699 = vmatpush1.msra.mxu0 %v3606
        %3700 = vmatprep.subr.mxu0 0.0
        %3701 = vmatpush1.msra.mxu0 %v3605
        %3702 = vmatprep.subr.mxu0 0.0
        %3703 = vmatpush1.msra.mxu0 %v3604
        %3704 = vmatprep.subr.mxu0 0.0
        %3705 = vmatpush2.msra.mxu0 %v3635
        %3706 = vmatprep.subr.mxu0 0.0
        %3707 = vmatpush2.msra.mxu0 %v3634
        %3708 = vmatprep.subr.mxu0 0.0
        %3709 = vmatpush2.msra.mxu0 %v3633
        %3710 = vmatprep.subr.mxu0 0.0
        %3711 = vmatpush2.msra.mxu0 %v3632
        %3712 = vmatprep.subr.mxu0 0.0
        %3713 = vmatpush2.msra.mxu0 %v3631
        %3714 = vmatprep.subr.mxu0 0.0
        %3715 = vmatpush2.msra.mxu0 %v3630
        %3716 = vmatprep.subr.mxu0 0.0
        %3717 = vmatpush2.msra.mxu0 %v3629
        %3718 = vmatprep.subr.mxu0 0.0
        %3719 = vmatpush2.msra.mxu0 %v3628
        %3720 = vmatprep.subr.mxu0 0.0
        %3721 = vmatpush2.msra.mxu0 %v3627
        %3722 = vmatprep.subr.mxu0 0.0
        %3723 = vmatpush2.msra.mxu0 %v3626
        %3724 = vmatprep.subr.mxu0 0.0
        %3725 = vmatpush2.msra.mxu0 %v3625
        %3726 = vmatprep.subr.mxu0 0.0
        %3727 = vmatpush2.msra.mxu0 %v3624
        %3728 = vmatprep.subr.mxu0 0.0
        %3729 = vmatpush2.msra.mxu0 %v3623
        %3730 = vmatprep.subr.mxu0 0.0
        %3731 = vmatpush2.msra.mxu0 %v3622
        %3732 = vmatprep.subr.mxu0 0.0
        %3733 = vmatpush2.msra.mxu0 %v3621
        %3734 = vmatprep.subr.mxu0 0.0
        %3735 = vmatpush2.msra.mxu0 %v3620
        %3736 = vmatprep.mubr.f32.mxu0 %v3162
        %3737 = vmatmul.mubr.f32.gmra.mxu0 %v3160
        %v3738 = vpop.f32.mrf.mxu0
        %v3739 = vadd.f32 %v3671, %v3738
        %v3740 = vpop.f32.mrf.mxu0
        %3741 = vmatprep.mubr.f32.mxu0 %v3168
        %3742 = vmatmul.mubr.f32.gmra.mxu0 %v3166
        %v3743 = vpop.f32.mrf.mxu0
        %v3744 = vadd.f32 %v3671, %v3743
        %v3745 = vpop.f32.mrf.mxu0
        %3746 = vmatprep.mubr.f32.mxu0 %v3174
        %3747 = vmatmul.mubr.f32.gmra.mxu0 %v3172
        %v3748 = vpop.f32.mrf.mxu0
        %v3749 = vadd.f32 %v3671, %v3748
        %v3750 = vpop.f32.mrf.mxu0
        %3751 = vmatprep.mubr.f32.mxu0 %v3180
        %3752 = vmatmul.mubr.f32.gmra.mxu0 %v3178
        %v3753 = vpop.f32.mrf.mxu0
        %v3754 = vadd.f32 %v3671, %v3753
        %v3755 = vpop.f32.mrf.mxu0
        %3756 = vmatprep.mubr.f32.mxu0 %v3186
        %3757 = vmatmul.mubr.f32.gmra.mxu0 %v3184
        %v3758 = vpop.f32.mrf.mxu0
        %v3759 = vadd.f32 %v3671, %v3758
        %v3760 = vpop.f32.mrf.mxu0
        %3761 = vmatprep.mubr.f32.mxu0 %v3192
        %3762 = vmatmul.mubr.f32.gmra.mxu0 %v3190
        %v3763 = vpop.f32.mrf.mxu0
        %v3764 = vadd.f32 %v3671, %v3763
        %v3765 = vpop.f32.mrf.mxu0
        %3766 = vmatprep.mubr.f32.mxu0 %v3198
        %3767 = vmatmul.mubr.f32.gmra.mxu0 %v3196
        %v3768 = vpop.f32.mrf.mxu0
        %v3769 = vadd.f32 %v3671, %v3768
        %v3770 = vpop.f32.mrf.mxu0
        %3771 = vmatprep.mubr.f32.mxu0 %v3204
        %3772 = vmatmul.mubr.f32.gmra.mxu0 %v3202
        %v3773 = vpop.f32.mrf.mxu0
        %v3774 = vadd.f32 %v3671, %v3773
        %v3775 = vpop.f32.mrf.mxu0
        %3776 = vdwg.mxu0
        %3777 = vmatprep.subr.mxu0 0.0
        %3778 = vmatpush1.msra.mxu0 %v3651
        %3779 = vmatprep.subr.mxu0 0.0
        %3780 = vmatpush1.msra.mxu0 %v3650
        %3781 = vmatprep.subr.mxu0 0.0
        %3782 = vmatpush1.msra.mxu0 %v3649
        %3783 = vmatprep.subr.mxu0 0.0
        %3784 = vmatpush1.msra.mxu0 %v3648
        %3785 = vmatprep.subr.mxu0 0.0
        %3786 = vmatpush1.msra.mxu0 %v3647
        %3787 = vmatprep.subr.mxu0 0.0
        %3788 = vmatpush1.msra.mxu0 %v3646
        %3789 = vmatprep.subr.mxu0 0.0
        %3790 = vmatpush1.msra.mxu0 %v3645
        %3791 = vmatprep.subr.mxu0 0.0
        %3792 = vmatpush1.msra.mxu0 %v3644
        %3793 = vmatprep.subr.mxu0 0.0
        %3794 = vmatpush1.msra.mxu0 %v3643
        %3795 = vmatprep.subr.mxu0 0.0
        %3796 = vmatpush1.msra.mxu0 %v3642
        %3797 = vmatprep.subr.mxu0 0.0
        %3798 = vmatpush1.msra.mxu0 %v3641
        %3799 = vmatprep.subr.mxu0 0.0
        %3800 = vmatpush1.msra.mxu0 %v3640
        %3801 = vmatprep.subr.mxu0 0.0
        %3802 = vmatpush1.msra.mxu0 %v3639
        %3803 = vmatprep.subr.mxu0 0.0
        %3804 = vmatpush1.msra.mxu0 %v3638
        %3805 = vmatprep.subr.mxu0 0.0
        %3806 = vmatpush1.msra.mxu0 %v3637
        %3807 = vmatprep.subr.mxu0 0.0
        %3808 = vmatpush1.msra.mxu0 %v3636
        %3809 = vmatprep.subr.mxu0 0.0
        %3810 = vmatpush2.msra.mxu0 %v3667
        %3811 = vmatprep.subr.mxu0 0.0
        %3812 = vmatpush2.msra.mxu0 %v3666
        %3813 = vmatprep.subr.mxu0 0.0
        %3814 = vmatpush2.msra.mxu0 %v3665
        %3815 = vmatprep.subr.mxu0 0.0
        %3816 = vmatpush2.msra.mxu0 %v3664
        %3817 = vmatprep.subr.mxu0 0.0
        %3818 = vmatpush2.msra.mxu0 %v3663
        %3819 = vmatprep.subr.mxu0 0.0
        %3820 = vmatpush2.msra.mxu0 %v3662
        %3821 = vmatprep.subr.mxu0 0.0
        %3822 = vmatpush2.msra.mxu0 %v3661
        %3823 = vmatprep.subr.mxu0 0.0
        %3824 = vmatpush2.msra.mxu0 %v3660
        %3825 = vmatprep.subr.mxu0 0.0
        %3826 = vmatpush2.msra.mxu0 %v3659
        %3827 = vmatprep.subr.mxu0 0.0
        %3828 = vmatpush2.msra.mxu0 %v3658
        %3829 = vmatprep.subr.mxu0 0.0
        %3830 = vmatpush2.msra.mxu0 %v3657
        %3831 = vmatprep.subr.mxu0 0.0
        %3832 = vmatpush2.msra.mxu0 %v3656
        %3833 = vmatprep.subr.mxu0 0.0
        %3834 = vmatpush2.msra.mxu0 %v3655
        %3835 = vmatprep.subr.mxu0 0.0
        %3836 = vmatpush2.msra.mxu0 %v3654
        %3837 = vmatprep.subr.mxu0 0.0
        %3838 = vmatpush2.msra.mxu0 %v3653
        %3839 = vmatprep.subr.mxu0 0.0
        %3840 = vmatpush2.msra.mxu0 %v3652
        %3841 = vmatprep.mubr.f32.mxu0 %v3275
        %3842 = vmatmul.mubr.f32.gmra.mxu0 %v3273
        %v3843 = vpop.f32.mrf.mxu0
        %v3844 = vadd.f32 %v3739, %v3843
        %v3845 = vpop.f32.mrf.mxu0
        %3846 = vmatprep.mubr.f32.mxu0 %v3281
        %3847 = vmatmul.mubr.f32.gmra.mxu0 %v3279
        %v3848 = vpop.f32.mrf.mxu0
        %v3849 = vadd.f32 %v3744, %v3848
        %v3850 = vpop.f32.mrf.mxu0
        %3851 = vmatprep.mubr.f32.mxu0 %v3287
        %3852 = vmatmul.mubr.f32.gmra.mxu0 %v3285
        %v3853 = vpop.f32.mrf.mxu0
        %v3854 = vadd.f32 %v3749, %v3853
        %v3855 = vpop.f32.mrf.mxu0
        %3856 = vmatprep.mubr.f32.mxu0 %v3293
        %3857 = vmatmul.mubr.f32.gmra.mxu0 %v3291
        %v3858 = vpop.f32.mrf.mxu0
        %v3859 = vadd.f32 %v3754, %v3858
        %v3860 = vpop.f32.mrf.mxu0
        %3861 = vmatprep.mubr.f32.mxu0 %v3299
        %3862 = vmatmul.mubr.f32.gmra.mxu0 %v3297
        %v3863 = vpop.f32.mrf.mxu0
        %v3864 = vadd.f32 %v3759, %v3863
        %v3865 = vpop.f32.mrf.mxu0
        %3866 = vmatprep.mubr.f32.mxu0 %v3305
        %3867 = vmatmul.mubr.f32.gmra.mxu0 %v3303
        %v3868 = vpop.f32.mrf.mxu0
        %v3869 = vadd.f32 %v3764, %v3868
        %v3870 = vpop.f32.mrf.mxu0
        %3871 = vmatprep.mubr.f32.mxu0 %v3311
        %3872 = vmatmul.mubr.f32.gmra.mxu0 %v3309
        %v3873 = vpop.f32.mrf.mxu0
        %v3874 = vadd.f32 %v3769, %v3873
        %v3875 = vpop.f32.mrf.mxu0
        %3876 = vmatprep.mubr.f32.mxu0 %v3317
        %3877 = vmatmul.mubr.f32.gmra.mxu0 %v3315
        %v3878 = vpop.f32.mrf.mxu0
        %v3879 = vadd.f32 %v3774, %v3878
        %v3880 = vpop.f32.mrf.mxu0
        %3881 = vdwg.mxu0
        %s3882 = scalar_lea.vmem %s720, 64 [#allocation8]
        %3883 = vst.msk [vmem:[%s3882] sm:$0xff] %vm1032, %v3844
        %3884 = vst.msk [vmem:[%s3882 + $0x8] sm:$0xff] %vm1032, %v3849
        %3885 = vst.msk [vmem:[%s3882 + $0x10] sm:$0xff] %vm1032, %v3854
        %3886 = vst.msk [vmem:[%s3882 + $0x18] sm:$0xff] %vm1032, %v3859
        %3887 = vst.msk [vmem:[%s3882 + $0x20] sm:$0xff] %vm1032, %v3864
        %3888 = vst.msk [vmem:[%s3882 + $0x28] sm:$0xff] %vm1032, %v3869
        %3889 = vst.msk [vmem:[%s3882 + $0x30] sm:$0xff] %vm1032, %v3874
        %3890 = vst.msk [vmem:[%s3882 + $0x38] sm:$0xff] %vm1032, %v3879
        %v3891 = vld [vmem:[%s19] sm:$0xff]
        %v3892 = vld [vmem:[%s19 + $0x8] sm:$0xff]
        %v3893 = vld [vmem:[%s19 + $0x10] sm:$0xff]
        %v3894 = vld [vmem:[%s19 + $0x18] sm:$0xff]
        %v3895 = vld [vmem:[%s19 + $0x20] sm:$0xff]
        %v3896 = vld [vmem:[%s19 + $0x28] sm:$0xff]
        %v3897 = vld [vmem:[%s19 + $0x30] sm:$0xff]
        %v3898 = vld [vmem:[%s19 + $0x38] sm:$0xff]
        %v3899 = vld [vmem:[%s19 + $0x40] sm:$0xff]
        %v3900 = vld [vmem:[%s19 + $0x48] sm:$0xff]
        %v3901 = vld [vmem:[%s19 + $0x50] sm:$0xff]
        %v3902 = vld [vmem:[%s19 + $0x58] sm:$0xff]
        %v3903 = vld [vmem:[%s19 + $0x60] sm:$0xff]
        %v3904 = vld [vmem:[%s19 + $0x68] sm:$0xff]
        %v3905 = vld [vmem:[%s19 + $0x70] sm:$0xff]
        %v3906 = vld [vmem:[%s19 + $0x78] sm:$0xff]
        %v3907 = vld [vmem:[%s19 + $0x80] sm:$0xff]
        %v3908 = vld [vmem:[%s19 + $0x88] sm:$0xff]
        %v3909 = vld [vmem:[%s19 + $0x90] sm:$0xff]
        %v3910 = vld [vmem:[%s19 + $0x98] sm:$0xff]
        %v3911 = vld [vmem:[%s19 + $0xa0] sm:$0xff]
        %v3912 = vld [vmem:[%s19 + $0xa8] sm:$0xff]
        %v3913 = vld [vmem:[%s19 + $0xb0] sm:$0xff]
        %v3914 = vld [vmem:[%s19 + $0xb8] sm:$0xff]
        %v3915 = vld [vmem:[%s19 + $0xc0] sm:$0xff]
        %v3916 = vld [vmem:[%s19 + $0xc8] sm:$0xff]
        %v3917 = vld [vmem:[%s19 + $0xd0] sm:$0xff]
        %v3918 = vld [vmem:[%s19 + $0xd8] sm:$0xff]
        %v3919 = vld [vmem:[%s19 + $0xe0] sm:$0xff]
        %v3920 = vld [vmem:[%s19 + $0xe8] sm:$0xff]
        %v3921 = vld [vmem:[%s19 + $0xf0] sm:$0xff]
        %v3922 = vld [vmem:[%s19 + $0xf8] sm:$0xff]
        %v3923 = vld [vmem:[%s19 + $0x100] sm:$0xff]
        %v3924 = vld [vmem:[%s19 + $0x108] sm:$0xff]
        %v3925 = vld [vmem:[%s19 + $0x110] sm:$0xff]
        %v3926 = vld [vmem:[%s19 + $0x118] sm:$0xff]
        %v3927 = vld [vmem:[%s19 + $0x120] sm:$0xff]
        %v3928 = vld [vmem:[%s19 + $0x128] sm:$0xff]
        %v3929 = vld [vmem:[%s19 + $0x130] sm:$0xff]
        %v3930 = vld [vmem:[%s19 + $0x138] sm:$0xff]
        %v3931 = vld [vmem:[%s19 + $0x140] sm:$0xff]
        %v3932 = vld [vmem:[%s19 + $0x148] sm:$0xff]
        %v3933 = vld [vmem:[%s19 + $0x150] sm:$0xff]
        %v3934 = vld [vmem:[%s19 + $0x158] sm:$0xff]
        %v3935 = vld [vmem:[%s19 + $0x160] sm:$0xff]
        %v3936 = vld [vmem:[%s19 + $0x168] sm:$0xff]
        %v3937 = vld [vmem:[%s19 + $0x170] sm:$0xff]
        %v3938 = vld [vmem:[%s19 + $0x178] sm:$0xff]
        %v3939 = vld [vmem:[%s19 + $0x180] sm:$0xff]
        %v3940 = vld [vmem:[%s19 + $0x188] sm:$0xff]
        %v3941 = vld [vmem:[%s19 + $0x190] sm:$0xff]
        %v3942 = vld [vmem:[%s19 + $0x198] sm:$0xff]
        %v3943 = vld [vmem:[%s19 + $0x1a0] sm:$0xff]
        %v3944 = vld [vmem:[%s19 + $0x1a8] sm:$0xff]
        %v3945 = vld [vmem:[%s19 + $0x1b0] sm:$0xff]
        %v3946 = vld [vmem:[%s19 + $0x1b8] sm:$0xff]
        %v3947 = vld [vmem:[%s19 + $0x1c0] sm:$0xff]
        %v3948 = vld [vmem:[%s19 + $0x1c8] sm:$0xff]
        %v3949 = vld [vmem:[%s19 + $0x1d0] sm:$0xff]
        %v3950 = vld [vmem:[%s19 + $0x1d8] sm:$0xff]
        %v3951 = vld [vmem:[%s19 + $0x1e0] sm:$0xff]
        %v3952 = vld [vmem:[%s19 + $0x1e8] sm:$0xff]
        %v3953 = vld [vmem:[%s19 + $0x1f0] sm:$0xff]
        %v3954 = vld [vmem:[%s19 + $0x1f8] sm:$0xff]
        %3955 = vrot.lane.b32.xlu0 %v3319, 126
        %v3956 = vpop.permute.xlu0 %3955
        %s3957 = vtos %v3956
        %v3958 = vstv %s3957
        %3959 = vmatprep.subr.mxu0 0.0
        %3960 = vmatpush1.msra.mxu0 %v3906
        %3961 = vmatprep.subr.mxu0 0.0
        %3962 = vmatpush1.msra.mxu0 %v3905
        %3963 = vmatprep.subr.mxu0 0.0
        %3964 = vmatpush1.msra.mxu0 %v3904
        %3965 = vmatprep.subr.mxu0 0.0
        %3966 = vmatpush1.msra.mxu0 %v3903
        %3967 = vmatprep.subr.mxu0 0.0
        %3968 = vmatpush1.msra.mxu0 %v3902
        %3969 = vmatprep.subr.mxu0 0.0
        %3970 = vmatpush1.msra.mxu0 %v3901
        %3971 = vmatprep.subr.mxu0 0.0
        %3972 = vmatpush1.msra.mxu0 %v3900
        %3973 = vmatprep.subr.mxu0 0.0
        %3974 = vmatpush1.msra.mxu0 %v3899
        %3975 = vmatprep.subr.mxu0 0.0
        %3976 = vmatpush1.msra.mxu0 %v3898
        %3977 = vmatprep.subr.mxu0 0.0
        %3978 = vmatpush1.msra.mxu0 %v3897
        %3979 = vmatprep.subr.mxu0 0.0
        %3980 = vmatpush1.msra.mxu0 %v3896
        %3981 = vmatprep.subr.mxu0 0.0
        %3982 = vmatpush1.msra.mxu0 %v3895
        %3983 = vmatprep.subr.mxu0 0.0
        %3984 = vmatpush1.msra.mxu0 %v3894
        %3985 = vmatprep.subr.mxu0 0.0
        %3986 = vmatpush1.msra.mxu0 %v3893
        %3987 = vmatprep.subr.mxu0 0.0
        %3988 = vmatpush1.msra.mxu0 %v3892
        %3989 = vmatprep.subr.mxu0 0.0
        %3990 = vmatpush1.msra.mxu0 %v3891
        %3991 = vmatprep.subr.mxu0 0.0
        %3992 = vmatpush2.msra.mxu0 %v3922
        %3993 = vmatprep.subr.mxu0 0.0
        %3994 = vmatpush2.msra.mxu0 %v3921
        %3995 = vmatprep.subr.mxu0 0.0
        %3996 = vmatpush2.msra.mxu0 %v3920
        %3997 = vmatprep.subr.mxu0 0.0
        %3998 = vmatpush2.msra.mxu0 %v3919
        %3999 = vmatprep.subr.mxu0 0.0
        %4000 = vmatpush2.msra.mxu0 %v3918
        %4001 = vmatprep.subr.mxu0 0.0
        %4002 = vmatpush2.msra.mxu0 %v3917
        %4003 = vmatprep.subr.mxu0 0.0
        %4004 = vmatpush2.msra.mxu0 %v3916
        %4005 = vmatprep.subr.mxu0 0.0
        %4006 = vmatpush2.msra.mxu0 %v3915
        %4007 = vmatprep.subr.mxu0 0.0
        %4008 = vmatpush2.msra.mxu0 %v3914
        %4009 = vmatprep.subr.mxu0 0.0
        %4010 = vmatpush2.msra.mxu0 %v3913
        %4011 = vmatprep.subr.mxu0 0.0
        %4012 = vmatpush2.msra.mxu0 %v3912
        %4013 = vmatprep.subr.mxu0 0.0
        %4014 = vmatpush2.msra.mxu0 %v3911
        %4015 = vmatprep.subr.mxu0 0.0
        %4016 = vmatpush2.msra.mxu0 %v3910
        %4017 = vmatprep.subr.mxu0 0.0
        %4018 = vmatpush2.msra.mxu0 %v3909
        %4019 = vmatprep.subr.mxu0 0.0
        %4020 = vmatpush2.msra.mxu0 %v3908
        %4021 = vmatprep.subr.mxu0 0.0
        %4022 = vmatpush2.msra.mxu0 %v3907
        %4023 = vmatprep.mubr.f32.mxu0 %v3162
        %4024 = vmatmul.mubr.f32.gmra.mxu0 %v3160
        %v4025 = vpop.f32.mrf.mxu0
        %v4026 = vadd.f32 %v3958, %v4025
        %v4027 = vpop.f32.mrf.mxu0
        %4028 = vmatprep.mubr.f32.mxu0 %v3168
        %4029 = vmatmul.mubr.f32.gmra.mxu0 %v3166
        %v4030 = vpop.f32.mrf.mxu0
        %v4031 = vadd.f32 %v3958, %v4030
        %v4032 = vpop.f32.mrf.mxu0
        %4033 = vmatprep.mubr.f32.mxu0 %v3174
        %4034 = vmatmul.mubr.f32.gmra.mxu0 %v3172
        %v4035 = vpop.f32.mrf.mxu0
        %v4036 = vadd.f32 %v3958, %v4035
        %v4037 = vpop.f32.mrf.mxu0
        %4038 = vmatprep.mubr.f32.mxu0 %v3180
        %4039 = vmatmul.mubr.f32.gmra.mxu0 %v3178
        %v4040 = vpop.f32.mrf.mxu0
        %v4041 = vadd.f32 %v3958, %v4040
        %v4042 = vpop.f32.mrf.mxu0
        %4043 = vmatprep.mubr.f32.mxu0 %v3186
        %4044 = vmatmul.mubr.f32.gmra.mxu0 %v3184
        %v4045 = vpop.f32.mrf.mxu0
        %v4046 = vadd.f32 %v3958, %v4045
        %v4047 = vpop.f32.mrf.mxu0
        %4048 = vmatprep.mubr.f32.mxu0 %v3192
        %4049 = vmatmul.mubr.f32.gmra.mxu0 %v3190
        %v4050 = vpop.f32.mrf.mxu0
        %v4051 = vadd.f32 %v3958, %v4050
        %v4052 = vpop.f32.mrf.mxu0
        %4053 = vmatprep.mubr.f32.mxu0 %v3198
        %4054 = vmatmul.mubr.f32.gmra.mxu0 %v3196
        %v4055 = vpop.f32.mrf.mxu0
        %v4056 = vadd.f32 %v3958, %v4055
        %v4057 = vpop.f32.mrf.mxu0
        %4058 = vmatprep.mubr.f32.mxu0 %v3204
        %4059 = vmatmul.mubr.f32.gmra.mxu0 %v3202
        %v4060 = vpop.f32.mrf.mxu0
        %v4061 = vadd.f32 %v3958, %v4060
        %v4062 = vpop.f32.mrf.mxu0
        %4063 = vdwg.mxu0
        %4064 = vmatprep.subr.mxu0 0.0
        %4065 = vmatpush1.msra.mxu0 %v3938
        %4066 = vmatprep.subr.mxu0 0.0
        %4067 = vmatpush1.msra.mxu0 %v3937
        %4068 = vmatprep.subr.mxu0 0.0
        %4069 = vmatpush1.msra.mxu0 %v3936
        %4070 = vmatprep.subr.mxu0 0.0
        %4071 = vmatpush1.msra.mxu0 %v3935
        %4072 = vmatprep.subr.mxu0 0.0
        %4073 = vmatpush1.msra.mxu0 %v3934
        %4074 = vmatprep.subr.mxu0 0.0
        %4075 = vmatpush1.msra.mxu0 %v3933
        %4076 = vmatprep.subr.mxu0 0.0
        %4077 = vmatpush1.msra.mxu0 %v3932
        %4078 = vmatprep.subr.mxu0 0.0
        %4079 = vmatpush1.msra.mxu0 %v3931
        %4080 = vmatprep.subr.mxu0 0.0
        %4081 = vmatpush1.msra.mxu0 %v3930
        %4082 = vmatprep.subr.mxu0 0.0
        %4083 = vmatpush1.msra.mxu0 %v3929
        %4084 = vmatprep.subr.mxu0 0.0
        %4085 = vmatpush1.msra.mxu0 %v3928
        %4086 = vmatprep.subr.mxu0 0.0
        %4087 = vmatpush1.msra.mxu0 %v3927
        %4088 = vmatprep.subr.mxu0 0.0
        %4089 = vmatpush1.msra.mxu0 %v3926
        %4090 = vmatprep.subr.mxu0 0.0
        %4091 = vmatpush1.msra.mxu0 %v3925
        %4092 = vmatprep.subr.mxu0 0.0
        %4093 = vmatpush1.msra.mxu0 %v3924
        %4094 = vmatprep.subr.mxu0 0.0
        %4095 = vmatpush1.msra.mxu0 %v3923
        %4096 = vmatprep.subr.mxu0 0.0
        %4097 = vmatpush2.msra.mxu0 %v3954
        %4098 = vmatprep.subr.mxu0 0.0
        %4099 = vmatpush2.msra.mxu0 %v3953
        %4100 = vmatprep.subr.mxu0 0.0
        %4101 = vmatpush2.msra.mxu0 %v3952
        %4102 = vmatprep.subr.mxu0 0.0
        %4103 = vmatpush2.msra.mxu0 %v3951
        %4104 = vmatprep.subr.mxu0 0.0
        %4105 = vmatpush2.msra.mxu0 %v3950
        %4106 = vmatprep.subr.mxu0 0.0
        %4107 = vmatpush2.msra.mxu0 %v3949
        %4108 = vmatprep.subr.mxu0 0.0
        %4109 = vmatpush2.msra.mxu0 %v3948
        %4110 = vmatprep.subr.mxu0 0.0
        %4111 = vmatpush2.msra.mxu0 %v3947
        %4112 = vmatprep.subr.mxu0 0.0
        %4113 = vmatpush2.msra.mxu0 %v3946
        %4114 = vmatprep.subr.mxu0 0.0
        %4115 = vmatpush2.msra.mxu0 %v3945
        %4116 = vmatprep.subr.mxu0 0.0
        %4117 = vmatpush2.msra.mxu0 %v3944
        %4118 = vmatprep.subr.mxu0 0.0
        %4119 = vmatpush2.msra.mxu0 %v3943
        %4120 = vmatprep.subr.mxu0 0.0
        %4121 = vmatpush2.msra.mxu0 %v3942
        %4122 = vmatprep.subr.mxu0 0.0
        %4123 = vmatpush2.msra.mxu0 %v3941
        %4124 = vmatprep.subr.mxu0 0.0
        %4125 = vmatpush2.msra.mxu0 %v3940
        %4126 = vmatprep.subr.mxu0 0.0
        %4127 = vmatpush2.msra.mxu0 %v3939
        %4128 = vmatprep.mubr.f32.mxu0 %v3275
        %4129 = vmatmul.mubr.f32.gmra.mxu0 %v3273
        %v4130 = vpop.f32.mrf.mxu0
        %v4131 = vadd.f32 %v4026, %v4130
        %v4132 = vpop.f32.mrf.mxu0
        %4133 = vmatprep.mubr.f32.mxu0 %v3281
        %4134 = vmatmul.mubr.f32.gmra.mxu0 %v3279
        %v4135 = vpop.f32.mrf.mxu0
        %v4136 = vadd.f32 %v4031, %v4135
        %v4137 = vpop.f32.mrf.mxu0
        %4138 = vmatprep.mubr.f32.mxu0 %v3287
        %4139 = vmatmul.mubr.f32.gmra.mxu0 %v3285
        %v4140 = vpop.f32.mrf.mxu0
        %v4141 = vadd.f32 %v4036, %v4140
        %v4142 = vpop.f32.mrf.mxu0
        %4143 = vmatprep.mubr.f32.mxu0 %v3293
        %4144 = vmatmul.mubr.f32.gmra.mxu0 %v3291
        %v4145 = vpop.f32.mrf.mxu0
        %v4146 = vadd.f32 %v4041, %v4145
        %v4147 = vpop.f32.mrf.mxu0
        %4148 = vmatprep.mubr.f32.mxu0 %v3299
        %4149 = vmatmul.mubr.f32.gmra.mxu0 %v3297
        %v4150 = vpop.f32.mrf.mxu0
        %v4151 = vadd.f32 %v4046, %v4150
        %v4152 = vpop.f32.mrf.mxu0
        %4153 = vmatprep.mubr.f32.mxu0 %v3305
        %4154 = vmatmul.mubr.f32.gmra.mxu0 %v3303
        %v4155 = vpop.f32.mrf.mxu0
        %v4156 = vadd.f32 %v4051, %v4155
        %v4157 = vpop.f32.mrf.mxu0
        %4158 = vmatprep.mubr.f32.mxu0 %v3311
        %4159 = vmatmul.mubr.f32.gmra.mxu0 %v3309
        %v4160 = vpop.f32.mrf.mxu0
        %v4161 = vadd.f32 %v4056, %v4160
        %v4162 = vpop.f32.mrf.mxu0
        %4163 = vmatprep.mubr.f32.mxu0 %v3317
        %4164 = vmatmul.mubr.f32.gmra.mxu0 %v3315
        %v4165 = vpop.f32.mrf.mxu0
        %v4166 = vadd.f32 %v4061, %v4165
        %v4167 = vpop.f32.mrf.mxu0
        %4168 = vdwg.mxu0
        %s4169 = scalar_lea.vmem %s720, 128 [#allocation8]
        %4170 = vst.msk [vmem:[%s4169] sm:$0xff] %vm1032, %v4131
        %4171 = vst.msk [vmem:[%s4169 + $0x8] sm:$0xff] %vm1032, %v4136
        %4172 = vst.msk [vmem:[%s4169 + $0x10] sm:$0xff] %vm1032, %v4141
        %4173 = vst.msk [vmem:[%s4169 + $0x18] sm:$0xff] %vm1032, %v4146
        %4174 = vst.msk [vmem:[%s4169 + $0x20] sm:$0xff] %vm1032, %v4151
        %4175 = vst.msk [vmem:[%s4169 + $0x28] sm:$0xff] %vm1032, %v4156
        %4176 = vst.msk [vmem:[%s4169 + $0x30] sm:$0xff] %vm1032, %v4161
        %4177 = vst.msk [vmem:[%s4169 + $0x38] sm:$0xff] %vm1032, %v4166
        %v4178 = vld [vmem:[%s20] sm:$0xff]
        %v4179 = vld [vmem:[%s20 + $0x8] sm:$0xff]
        %v4180 = vld [vmem:[%s20 + $0x10] sm:$0xff]
        %v4181 = vld [vmem:[%s20 + $0x18] sm:$0xff]
        %v4182 = vld [vmem:[%s20 + $0x20] sm:$0xff]
        %v4183 = vld [vmem:[%s20 + $0x28] sm:$0xff]
        %v4184 = vld [vmem:[%s20 + $0x30] sm:$0xff]
        %v4185 = vld [vmem:[%s20 + $0x38] sm:$0xff]
        %v4186 = vld [vmem:[%s20 + $0x40] sm:$0xff]
        %v4187 = vld [vmem:[%s20 + $0x48] sm:$0xff]
        %v4188 = vld [vmem:[%s20 + $0x50] sm:$0xff]
        %v4189 = vld [vmem:[%s20 + $0x58] sm:$0xff]
        %v4190 = vld [vmem:[%s20 + $0x60] sm:$0xff]
        %v4191 = vld [vmem:[%s20 + $0x68] sm:$0xff]
        %v4192 = vld [vmem:[%s20 + $0x70] sm:$0xff]
        %v4193 = vld [vmem:[%s20 + $0x78] sm:$0xff]
        %v4194 = vld [vmem:[%s20 + $0x80] sm:$0xff]
        %v4195 = vld [vmem:[%s20 + $0x88] sm:$0xff]
        %v4196 = vld [vmem:[%s20 + $0x90] sm:$0xff]
        %v4197 = vld [vmem:[%s20 + $0x98] sm:$0xff]
        %v4198 = vld [vmem:[%s20 + $0xa0] sm:$0xff]
        %v4199 = vld [vmem:[%s20 + $0xa8] sm:$0xff]
        %v4200 = vld [vmem:[%s20 + $0xb0] sm:$0xff]
        %v4201 = vld [vmem:[%s20 + $0xb8] sm:$0xff]
        %v4202 = vld [vmem:[%s20 + $0xc0] sm:$0xff]
        %v4203 = vld [vmem:[%s20 + $0xc8] sm:$0xff]
        %v4204 = vld [vmem:[%s20 + $0xd0] sm:$0xff]
        %v4205 = vld [vmem:[%s20 + $0xd8] sm:$0xff]
        %v4206 = vld [vmem:[%s20 + $0xe0] sm:$0xff]
        %v4207 = vld [vmem:[%s20 + $0xe8] sm:$0xff]
        %v4208 = vld [vmem:[%s20 + $0xf0] sm:$0xff]
        %v4209 = vld [vmem:[%s20 + $0xf8] sm:$0xff]
        %v4210 = vld [vmem:[%s20 + $0x100] sm:$0xff]
        %v4211 = vld [vmem:[%s20 + $0x108] sm:$0xff]
        %v4212 = vld [vmem:[%s20 + $0x110] sm:$0xff]
        %v4213 = vld [vmem:[%s20 + $0x118] sm:$0xff]
        %v4214 = vld [vmem:[%s20 + $0x120] sm:$0xff]
        %v4215 = vld [vmem:[%s20 + $0x128] sm:$0xff]
        %v4216 = vld [vmem:[%s20 + $0x130] sm:$0xff]
        %v4217 = vld [vmem:[%s20 + $0x138] sm:$0xff]
        %v4218 = vld [vmem:[%s20 + $0x140] sm:$0xff]
        %v4219 = vld [vmem:[%s20 + $0x148] sm:$0xff]
        %v4220 = vld [vmem:[%s20 + $0x150] sm:$0xff]
        %v4221 = vld [vmem:[%s20 + $0x158] sm:$0xff]
        %v4222 = vld [vmem:[%s20 + $0x160] sm:$0xff]
        %v4223 = vld [vmem:[%s20 + $0x168] sm:$0xff]
        %v4224 = vld [vmem:[%s20 + $0x170] sm:$0xff]
        %v4225 = vld [vmem:[%s20 + $0x178] sm:$0xff]
        %v4226 = vld [vmem:[%s20 + $0x180] sm:$0xff]
        %v4227 = vld [vmem:[%s20 + $0x188] sm:$0xff]
        %v4228 = vld [vmem:[%s20 + $0x190] sm:$0xff]
        %v4229 = vld [vmem:[%s20 + $0x198] sm:$0xff]
        %v4230 = vld [vmem:[%s20 + $0x1a0] sm:$0xff]
        %v4231 = vld [vmem:[%s20 + $0x1a8] sm:$0xff]
        %v4232 = vld [vmem:[%s20 + $0x1b0] sm:$0xff]
        %v4233 = vld [vmem:[%s20 + $0x1b8] sm:$0xff]
        %v4234 = vld [vmem:[%s20 + $0x1c0] sm:$0xff]
        %v4235 = vld [vmem:[%s20 + $0x1c8] sm:$0xff]
        %v4236 = vld [vmem:[%s20 + $0x1d0] sm:$0xff]
        %v4237 = vld [vmem:[%s20 + $0x1d8] sm:$0xff]
        %v4238 = vld [vmem:[%s20 + $0x1e0] sm:$0xff]
        %v4239 = vld [vmem:[%s20 + $0x1e8] sm:$0xff]
        %v4240 = vld [vmem:[%s20 + $0x1f0] sm:$0xff]
        %v4241 = vld [vmem:[%s20 + $0x1f8] sm:$0xff]
        %4242 = vrot.lane.b32.xlu0 %v3319, 125
        %v4243 = vpop.permute.xlu0 %4242
        %s4244 = vtos %v4243
        %v4245 = vstv %s4244
        %4246 = vmatprep.subr.mxu0 0.0
        %4247 = vmatpush1.msra.mxu0 %v4193
        %4248 = vmatprep.subr.mxu0 0.0
        %4249 = vmatpush1.msra.mxu0 %v4192
        %4250 = vmatprep.subr.mxu0 0.0
        %4251 = vmatpush1.msra.mxu0 %v4191
        %4252 = vmatprep.subr.mxu0 0.0
        %4253 = vmatpush1.msra.mxu0 %v4190
        %4254 = vmatprep.subr.mxu0 0.0
        %4255 = vmatpush1.msra.mxu0 %v4189
        %4256 = vmatprep.subr.mxu0 0.0
        %4257 = vmatpush1.msra.mxu0 %v4188
        %4258 = vmatprep.subr.mxu0 0.0
        %4259 = vmatpush1.msra.mxu0 %v4187
        %4260 = vmatprep.subr.mxu0 0.0
        %4261 = vmatpush1.msra.mxu0 %v4186
        %4262 = vmatprep.subr.mxu0 0.0
        %4263 = vmatpush1.msra.mxu0 %v4185
        %4264 = vmatprep.subr.mxu0 0.0
        %4265 = vmatpush1.msra.mxu0 %v4184
        %4266 = vmatprep.subr.mxu0 0.0
        %4267 = vmatpush1.msra.mxu0 %v4183
        %4268 = vmatprep.subr.mxu0 0.0
        %4269 = vmatpush1.msra.mxu0 %v4182
        %4270 = vmatprep.subr.mxu0 0.0
        %4271 = vmatpush1.msra.mxu0 %v4181
        %4272 = vmatprep.subr.mxu0 0.0
        %4273 = vmatpush1.msra.mxu0 %v4180
        %4274 = vmatprep.subr.mxu0 0.0
        %4275 = vmatpush1.msra.mxu0 %v4179
        %4276 = vmatprep.subr.mxu0 0.0
        %4277 = vmatpush1.msra.mxu0 %v4178
        %4278 = vmatprep.subr.mxu0 0.0
        %4279 = vmatpush2.msra.mxu0 %v4209
        %4280 = vmatprep.subr.mxu0 0.0
        %4281 = vmatpush2.msra.mxu0 %v4208
        %4282 = vmatprep.subr.mxu0 0.0
        %4283 = vmatpush2.msra.mxu0 %v4207
        %4284 = vmatprep.subr.mxu0 0.0
        %4285 = vmatpush2.msra.mxu0 %v4206
        %4286 = vmatprep.subr.mxu0 0.0
        %4287 = vmatpush2.msra.mxu0 %v4205
        %4288 = vmatprep.subr.mxu0 0.0
        %4289 = vmatpush2.msra.mxu0 %v4204
        %4290 = vmatprep.subr.mxu0 0.0
        %4291 = vmatpush2.msra.mxu0 %v4203
        %4292 = vmatprep.subr.mxu0 0.0
        %4293 = vmatpush2.msra.mxu0 %v4202
        %4294 = vmatprep.subr.mxu0 0.0
        %4295 = vmatpush2.msra.mxu0 %v4201
        %4296 = vmatprep.subr.mxu0 0.0
        %4297 = vmatpush2.msra.mxu0 %v4200
        %4298 = vmatprep.subr.mxu0 0.0
        %4299 = vmatpush2.msra.mxu0 %v4199
        %4300 = vmatprep.subr.mxu0 0.0
        %4301 = vmatpush2.msra.mxu0 %v4198
        %4302 = vmatprep.subr.mxu0 0.0
        %4303 = vmatpush2.msra.mxu0 %v4197
        %4304 = vmatprep.subr.mxu0 0.0
        %4305 = vmatpush2.msra.mxu0 %v4196
        %4306 = vmatprep.subr.mxu0 0.0
        %4307 = vmatpush2.msra.mxu0 %v4195
        %4308 = vmatprep.subr.mxu0 0.0
        %4309 = vmatpush2.msra.mxu0 %v4194
        %4310 = vmatprep.mubr.f32.mxu0 %v3162
        %4311 = vmatmul.mubr.f32.gmra.mxu0 %v3160
        %v4312 = vpop.f32.mrf.mxu0
        %v4313 = vadd.f32 %v4245, %v4312
        %v4314 = vpop.f32.mrf.mxu0
        %4315 = vmatprep.mubr.f32.mxu0 %v3168
        %4316 = vmatmul.mubr.f32.gmra.mxu0 %v3166
        %v4317 = vpop.f32.mrf.mxu0
        %v4318 = vadd.f32 %v4245, %v4317
        %v4319 = vpop.f32.mrf.mxu0
        %4320 = vmatprep.mubr.f32.mxu0 %v3174
        %4321 = vmatmul.mubr.f32.gmra.mxu0 %v3172
        %v4322 = vpop.f32.mrf.mxu0
        %v4323 = vadd.f32 %v4245, %v4322
        %v4324 = vpop.f32.mrf.mxu0
        %4325 = vmatprep.mubr.f32.mxu0 %v3180
        %4326 = vmatmul.mubr.f32.gmra.mxu0 %v3178
        %v4327 = vpop.f32.mrf.mxu0
        %v4328 = vadd.f32 %v4245, %v4327
        %v4329 = vpop.f32.mrf.mxu0
        %4330 = vmatprep.mubr.f32.mxu0 %v3186
        %4331 = vmatmul.mubr.f32.gmra.mxu0 %v3184
        %v4332 = vpop.f32.mrf.mxu0
        %v4333 = vadd.f32 %v4245, %v4332
        %v4334 = vpop.f32.mrf.mxu0
        %4335 = vmatprep.mubr.f32.mxu0 %v3192
        %4336 = vmatmul.mubr.f32.gmra.mxu0 %v3190
        %v4337 = vpop.f32.mrf.mxu0
        %v4338 = vadd.f32 %v4245, %v4337
        %v4339 = vpop.f32.mrf.mxu0
        %4340 = vmatprep.mubr.f32.mxu0 %v3198
        %4341 = vmatmul.mubr.f32.gmra.mxu0 %v3196
        %v4342 = vpop.f32.mrf.mxu0
        %v4343 = vadd.f32 %v4245, %v4342
        %v4344 = vpop.f32.mrf.mxu0
        %4345 = vmatprep.mubr.f32.mxu0 %v3204
        %4346 = vmatmul.mubr.f32.gmra.mxu0 %v3202
        %v4347 = vpop.f32.mrf.mxu0
        %v4348 = vadd.f32 %v4245, %v4347
        %v4349 = vpop.f32.mrf.mxu0
        %4350 = vdwg.mxu0
        %4351 = vmatprep.subr.mxu0 0.0
        %4352 = vmatpush1.msra.mxu0 %v4225
        %4353 = vmatprep.subr.mxu0 0.0
        %4354 = vmatpush1.msra.mxu0 %v4224
        %4355 = vmatprep.subr.mxu0 0.0
        %4356 = vmatpush1.msra.mxu0 %v4223
        %4357 = vmatprep.subr.mxu0 0.0
        %4358 = vmatpush1.msra.mxu0 %v4222
        %4359 = vmatprep.subr.mxu0 0.0
        %4360 = vmatpush1.msra.mxu0 %v4221
        %4361 = vmatprep.subr.mxu0 0.0
        %4362 = vmatpush1.msra.mxu0 %v4220
        %4363 = vmatprep.subr.mxu0 0.0
        %4364 = vmatpush1.msra.mxu0 %v4219
        %4365 = vmatprep.subr.mxu0 0.0
        %4366 = vmatpush1.msra.mxu0 %v4218
        %4367 = vmatprep.subr.mxu0 0.0
        %4368 = vmatpush1.msra.mxu0 %v4217
        %4369 = vmatprep.subr.mxu0 0.0
        %4370 = vmatpush1.msra.mxu0 %v4216
        %4371 = vmatprep.subr.mxu0 0.0
        %4372 = vmatpush1.msra.mxu0 %v4215
        %4373 = vmatprep.subr.mxu0 0.0
        %4374 = vmatpush1.msra.mxu0 %v4214
        %4375 = vmatprep.subr.mxu0 0.0
        %4376 = vmatpush1.msra.mxu0 %v4213
        %4377 = vmatprep.subr.mxu0 0.0
        %4378 = vmatpush1.msra.mxu0 %v4212
        %4379 = vmatprep.subr.mxu0 0.0
        %4380 = vmatpush1.msra.mxu0 %v4211
        %4381 = vmatprep.subr.mxu0 0.0
        %4382 = vmatpush1.msra.mxu0 %v4210
        %4383 = vmatprep.subr.mxu0 0.0
        %4384 = vmatpush2.msra.mxu0 %v4241
        %4385 = vmatprep.subr.mxu0 0.0
        %4386 = vmatpush2.msra.mxu0 %v4240
        %4387 = vmatprep.subr.mxu0 0.0
        %4388 = vmatpush2.msra.mxu0 %v4239
        %4389 = vmatprep.subr.mxu0 0.0
        %4390 = vmatpush2.msra.mxu0 %v4238
        %4391 = vmatprep.subr.mxu0 0.0
        %4392 = vmatpush2.msra.mxu0 %v4237
        %4393 = vmatprep.subr.mxu0 0.0
        %4394 = vmatpush2.msra.mxu0 %v4236
        %4395 = vmatprep.subr.mxu0 0.0
        %4396 = vmatpush2.msra.mxu0 %v4235
        %4397 = vmatprep.subr.mxu0 0.0
        %4398 = vmatpush2.msra.mxu0 %v4234
        %4399 = vmatprep.subr.mxu0 0.0
        %4400 = vmatpush2.msra.mxu0 %v4233
        %4401 = vmatprep.subr.mxu0 0.0
        %4402 = vmatpush2.msra.mxu0 %v4232
        %4403 = vmatprep.subr.mxu0 0.0
        %4404 = vmatpush2.msra.mxu0 %v4231
        %4405 = vmatprep.subr.mxu0 0.0
        %4406 = vmatpush2.msra.mxu0 %v4230
        %4407 = vmatprep.subr.mxu0 0.0
        %4408 = vmatpush2.msra.mxu0 %v4229
        %4409 = vmatprep.subr.mxu0 0.0
        %4410 = vmatpush2.msra.mxu0 %v4228
        %4411 = vmatprep.subr.mxu0 0.0
        %4412 = vmatpush2.msra.mxu0 %v4227
        %4413 = vmatprep.subr.mxu0 0.0
        %4414 = vmatpush2.msra.mxu0 %v4226
        %4415 = vmatprep.mubr.f32.mxu0 %v3275
        %4416 = vmatmul.mubr.f32.gmra.mxu0 %v3273
        %v4417 = vpop.f32.mrf.mxu0
        %v4418 = vadd.f32 %v4313, %v4417
        %v4419 = vpop.f32.mrf.mxu0
        %4420 = vmatprep.mubr.f32.mxu0 %v3281
        %4421 = vmatmul.mubr.f32.gmra.mxu0 %v3279
        %v4422 = vpop.f32.mrf.mxu0
        %v4423 = vadd.f32 %v4318, %v4422
        %v4424 = vpop.f32.mrf.mxu0
        %4425 = vmatprep.mubr.f32.mxu0 %v3287
        %4426 = vmatmul.mubr.f32.gmra.mxu0 %v3285
        %v4427 = vpop.f32.mrf.mxu0
        %v4428 = vadd.f32 %v4323, %v4427
        %v4429 = vpop.f32.mrf.mxu0
        %4430 = vmatprep.mubr.f32.mxu0 %v3293
        %4431 = vmatmul.mubr.f32.gmra.mxu0 %v3291
        %v4432 = vpop.f32.mrf.mxu0
        %v4433 = vadd.f32 %v4328, %v4432
        %v4434 = vpop.f32.mrf.mxu0
        %4435 = vmatprep.mubr.f32.mxu0 %v3299
        %4436 = vmatmul.mubr.f32.gmra.mxu0 %v3297
        %v4437 = vpop.f32.mrf.mxu0
        %v4438 = vadd.f32 %v4333, %v4437
        %v4439 = vpop.f32.mrf.mxu0
        %4440 = vmatprep.mubr.f32.mxu0 %v3305
        %4441 = vmatmul.mubr.f32.gmra.mxu0 %v3303
        %v4442 = vpop.f32.mrf.mxu0
        %v4443 = vadd.f32 %v4338, %v4442
        %v4444 = vpop.f32.mrf.mxu0
        %4445 = vmatprep.mubr.f32.mxu0 %v3311
        %4446 = vmatmul.mubr.f32.gmra.mxu0 %v3309
        %v4447 = vpop.f32.mrf.mxu0
        %v4448 = vadd.f32 %v4343, %v4447
        %v4449 = vpop.f32.mrf.mxu0
        %4450 = vmatprep.mubr.f32.mxu0 %v3317
        %4451 = vmatmul.mubr.f32.gmra.mxu0 %v3315
        %v4452 = vpop.f32.mrf.mxu0
        %v4453 = vadd.f32 %v4348, %v4452
        %v4454 = vpop.f32.mrf.mxu0
        %4455 = vdwg.mxu0
        %s4456 = scalar_lea.vmem %s720, 192 [#allocation8]
        %4457 = vst.msk [vmem:[%s4456] sm:$0xff] %vm1032, %v4418
        %4458 = vst.msk [vmem:[%s4456 + $0x8] sm:$0xff] %vm1032, %v4423
        %4459 = vst.msk [vmem:[%s4456 + $0x10] sm:$0xff] %vm1032, %v4428
        %4460 = vst.msk [vmem:[%s4456 + $0x18] sm:$0xff] %vm1032, %v4433
        %4461 = vst.msk [vmem:[%s4456 + $0x20] sm:$0xff] %vm1032, %v4438
        %4462 = vst.msk [vmem:[%s4456 + $0x28] sm:$0xff] %vm1032, %v4443
        %4463 = vst.msk [vmem:[%s4456 + $0x30] sm:$0xff] %vm1032, %v4448
        %4464 = vst.msk [vmem:[%s4456 + $0x38] sm:$0xff] %vm1032, %v4453
        %s4465 = sand.u32 %s513, 1
        %s4466 = scalar_lea.sflag [#allocation4], %s4465
        %s4467 = sand.u32 %s513, 1
        %s4468 = smul.addr %s4467, 256
        %s4469 = scalar_lea.vmem [#allocation8], %s4468
        // Predicated region
        $region121: #{decoder_trans_forward.1} parent=107 // pred_check
          %p4470 = pneg %p523
        $region122: #{decoder_trans_forward.1} parent=107 // pred_check_branch
          %4472 = sbr.rel (%p4470) target = $region124
        $region123: #{decoder_trans_forward.1} parent=107 // pred_region
          %s4474 = ssub.s32 4096, 4096
          %4475 = vsyncadd %s4466, %s4474
          %s4476 = smul.addr %s38, 32
          %s4477 = smul.addr %s4476, 128
          %s4478 = scalar_lea.hbm %s22, %s4477
          %s4479 = sshll.u32 %s4469, 4
          %s4480 = int_to_ptr.vmem [resolvable:$true] %s4479
          %4485 = dma.vmem_to_hbm [thread:$0]  %s4480, 4096, %s4478, %s4466, 128, 128, 8
        $region124: #{decoder_trans_forward.1} parent=107 // pred_fallthru
          _
      $region108: #{decoder_trans_forward.1} parent=5 // pred_fallthru
        _
      %p4486 = scmp.le.s32.totalorder 2, %s33
      // Predicated region
      $region125: #{decoder_trans_forward.1} parent=5 // pred_check
        %p4487 = pneg %p4486
      $region126: #{decoder_trans_forward.1} parent=5 // pred_check_branch
        %4489 = sbr.rel (%p4487) target = $region128
      $region127: #{decoder_trans_forward.1} parent=5 // pred_region
        %s4490 = ssub.s32 %s33, 2
        // Predicated region
        $region129: #{decoder_trans_forward.1} parent=127 // pred_check
          %p4491 = pneg %p529
        $region130: #{decoder_trans_forward.1} parent=127 // pred_check_branch
          %4493 = sbr.rel (%p4491) target = $region132
        $region131: #{decoder_trans_forward.1} parent=127 // pred_region
          %s4494 = sand.u32 %s514, 1
          %s4495 = scalar_lea.sflag [#allocation4], %s4494
          %s4496 = sand.u32 %s514, 1
          %s4497 = smul.addr %s4496, 256
          %s4498 = scalar_lea.vmem [#allocation8], %s4497
          %4499 = dma.done %s4495, 4096
        $region132: #{decoder_trans_forward.1} parent=127 // pred_fallthru
          _
      $region128: #{decoder_trans_forward.1} parent=5 // pred_fallthru
        _
    $region6: #{decoder_trans_forward.1} parent=1 // loop_footer
      %s37 = sadd.s32 1, %s33
    $region7: #{decoder_trans_forward.1} parent=1 // loop_footer_branch
      %32 = sbr.rel target = $region3
    $region8: #{decoder_trans_forward.1} parent=1 // loop_exit
      _
    %4500 = vsyncpa [#allocation3], 1
    %s4501 = scalar_lea.sflag [#allocation3], 1
    %4502 = vsyncpa %s4501, 1
    %4503 = vsyncpa [#allocation6], 1
    %4504 = vsyncpa [#allocation4], 1
    %s4505 = scalar_lea.sflag [#allocation4], 1
    %4506 = vsyncpa %s4505, 1

</llo_original>
